<compile_context>
chip_gen: v6e
topology: v6e:2x2x1
jax: 0.10.0
libtpu: 0.0.40
codegen_flags: <defaults>
</compile_context>

<pallas_src>
import jax
import jax.numpy as jnp
from jax.experimental import pallas as pl
from jax.experimental.pallas import tpu as pltpu


def _basic_block_kernel(xp_ref, w1_ref, s1_ref, b1_ref,
                        w2_ref, s2_ref, b2_ref,
                        out_ref, hpad_ref):
    """One grid step = B images.

    xp_ref : (B, H+2, W+2, Cp)  bf16 zero-padded NHWC input (channels padded)
    w1_ref : (9*Cp, Cp)         bf16 conv1 weights, im2col layout
    s1_ref : (1, Cp)            f32  folded BN1 scale  = gamma / sqrt(var+eps)
    b1_ref : (1, Cp)            f32  folded BN1 bias   = beta + (cb1-mean)*scale
    w2_ref : (9*Cp, Cp)         bf16 conv2 weights, im2col layout
    s2_ref : (1, Cp)            f32  folded BN2 scale
    b2_ref : (1, Cp)            f32  folded BN2 bias
    out_ref: (B, H, W, Cp)      f32  NHWC output (channels padded)
    hpad_ref: VMEM (B, H+2, W+2, Cp) bf16 — padded staging buffer for conv2
    """
    B, H, W, C = out_ref.shape
    M = B * H * W

    # ---- conv1: im2col -> single MXU matmul (bf16 operands, f32 accumulate) ----
    xp = xp_ref[...]                                          # (B, H+2, W+2, C)
    x_taps = [xp[:, kh:kh + H, kw:kw + W, :]
              for kh in range(3) for kw in range(3)]          # 9 x (B, H, W, C)
    patches1 = jnp.concatenate(x_taps, axis=-1).reshape(M, 9 * C)
    acc1 = jnp.dot(patches1, w1_ref[...],
                   preferred_element_type=jnp.float32)        # (M, C) f32

    # ---- bn1 (+ folded conv1 bias) + relu ----
    h = jnp.maximum(acc1 * s1_ref[...] + b1_ref[...], 0.0)    # (M, C) f32

    # ---- stage h into the padded scratch for conv2 ----
    # Zero only the 1-pixel border; the interior is fully overwritten every
    # step.  Done unconditionally (not program_id==0 gated) so it stays
    # correct when the parallel grid axis is split across TensorCores.
    zrow = jnp.zeros((B, 1, W + 2, C), hpad_ref.dtype)
    zcol = jnp.zeros((B, H, 1, C), hpad_ref.dtype)
    hpad_ref[:, 0:1, :, :] = zrow
    hpad_ref[:, H + 1:H + 2, :, :] = zrow
    hpad_ref[:, 1:H + 1, 0:1, :] = zcol
    hpad_ref[:, 1:H + 1, W + 1:W + 2, :] = zcol
    hpad_ref[:, 1:H + 1, 1:W + 1, :] = (
        h.reshape(B, H, W, C).astype(hpad_ref.dtype))

    # ---- conv2: im2col -> single MXU matmul ----
    hp = hpad_ref[...]
    h_taps = [hp[:, kh:kh + H, kw:kw + W, :]
              for kh in range(3) for kw in range(3)]
    patches2 = jnp.concatenate(h_taps, axis=-1).reshape(M, 9 * C)
    acc2 = jnp.dot(patches2, w2_ref[...],
                   preferred_element_type=jnp.float32)        # (M, C) f32

    # ---- bn2 (+ folded conv2 bias) + residual add + relu ----
    identity = x_taps[4].reshape(M, C).astype(jnp.float32)    # centre tap == x
    y = jnp.maximum(acc2 * s2_ref[...] + b2_ref[...] + identity, 0.0)
    out_ref[...] = y.reshape(B, H, W, C).astype(out_ref.dtype)


def basic_block_forward(x_nchw, w1, cb1, g1, be1, m1, v1,
                        w2, cb2, g2, be2, m2, v2, eps=1e-5):
    """BasicBlock forward (stride=1, identity_downsample=None).

    x_nchw: (N, C, H, W) f32.  w1/w2: HWIO (3,3,Cin,Cout).  cb*: conv biases.
    g/be/m/v: BN gamma/beta/running_mean/running_var (eval mode).
    """
    x = jnp.transpose(x_nchw, (0, 2, 3, 1)).astype(jnp.float32)   # NCHW -> NHWC
    N, H, W, Cin = x.shape
    Cout = w1.shape[-1]
    assert Cin == Cout, "identity path requires in_channels == out_channels"

    LANE = 128
    Cp = ((Cout + LANE - 1) // LANE) * LANE                       # lane-dense C

    # Fold eval-mode BN (and the conv bias) into per-channel scale/bias.
    inv1 = g1 * jax.lax.rsqrt(v1 + eps)
    inv2 = g2 * jax.lax.rsqrt(v2 + eps)
    s1 = jnp.pad(inv1, (0, Cp - Cout)).reshape(1, Cp).astype(jnp.float32)
    b1 = jnp.pad(be1 + (cb1 - m1) * inv1,
                 (0, Cp - Cout)).reshape(1, Cp).astype(jnp.float32)
    s2 = jnp.pad(inv2, (0, Cp - Cout)).reshape(1, Cp).astype(jnp.float32)
    b2 = jnp.pad(be2 + (cb2 - m2) * inv2,
                 (0, Cp - Cout)).reshape(1, Cp).astype(jnp.float32)

    # Channel-pad to Cp, cast MXU operands to bf16, and pre-reshape weights to
    # the im2col layout (9*Cp, Cp) once on the host side.
    w1p = jnp.pad(w1, ((0, 0), (0, 0), (0, Cp - Cin), (0, Cp - Cout)))
    w2p = jnp.pad(w2, ((0, 0), (0, 0), (0, Cp - Cout), (0, Cp - Cout)))
    w1r = w1p.reshape(9 * Cp, Cp).astype(jnp.bfloat16)
    w2r = w2p.reshape(9 * Cp, Cp).astype(jnp.bfloat16)

    # Spatial zero pad (padding=1) + channel pad; bf16 for HBM/VMEM traffic.
    xp = jnp.pad(x, ((0, 0), (1, 1), (1, 1), (0, Cp - Cin))).astype(jnp.bfloat16)

    # Images per grid step: amortize the ~0.35us/step pipeline overhead while
    # keeping the per-step working set small and >= 2 grid steps when possible
    # so both v7x TensorCores get work on the parallel batch axis.
    per_img = ((H + 2) * (W + 2) * Cp * 2 * 3        # xp (x2 buffers) + scratch
               + H * W * Cp * 4 * 2                  # f32 output (x2 buffers)
               + 2 * H * W * 9 * Cp * 2              # im2col patch temporaries
               + H * W * Cp * 4)                     # f32 accumulator
    budget = 8 * 1024 * 1024
    B = 1
    for cand in range(1, N + 1):
        if N % cand or cand * per_img > budget:
            continue
        if N >= 2 and N // cand < 2:
            continue
        B = cand
    grid = (N // B,)

    full = lambda shape: pl.BlockSpec(shape, lambda n: (0,) * len(shape))

    flops = 2 * (2 * N * H * W * 9 * Cp * Cp)                     # two im2col matmuls
    bytes_accessed = (N * (H + 2) * (W + 2) * Cp * 2              # bf16 input
                      + 2 * 9 * Cp * Cp * 2                       # bf16 weights
                      + N * H * W * Cp * 4)                       # f32 output

    y_nhwc = pl.pallas_call(
        _basic_block_kernel,
        out_shape=jax.ShapeDtypeStruct((N, H, W, Cp), jnp.float32),
        grid_spec=pltpu.PrefetchScalarGridSpec(
            num_scalar_prefetch=0,
            grid=grid,
            in_specs=[
                pl.BlockSpec((B, H + 2, W + 2, Cp), lambda n: (n, 0, 0, 0)),
                full((9 * Cp, Cp)),    # w1 (im2col layout, bf16)
                full((1, Cp)),         # s1
                full((1, Cp)),         # b1
                full((9 * Cp, Cp)),    # w2
                full((1, Cp)),         # s2
                full((1, Cp)),         # b2
            ],
            out_specs=pl.BlockSpec((B, H, W, Cp), lambda n: (n, 0, 0, 0)),
            scratch_shapes=[pltpu.VMEM((B, H + 2, W + 2, Cp), jnp.bfloat16)],
        ),
        compiler_params=pltpu.CompilerParams(
            dimension_semantics=("parallel",),
            vmem_limit_bytes=32 * 1024 * 1024,
        ),
        cost_estimate=pl.CostEstimate(flops=flops, transcendentals=0,
                                      bytes_accessed=bytes_accessed),
    )(xp, w1r, s1, b1, w2r, s2, b2)

    # Drop channel padding, back to NCHW.
    return jnp.transpose(y_nhwc[..., :Cout], (0, 3, 1, 2))


def _reference(x_nchw, w1, cb1, g1, be1, m1, v1, w2, cb2, g2, be2, m2, v2,
               eps=1e-5):
    """Pure-JAX reference mirroring the kernel's bf16 operand rounding
    (operands rounded to bf16, accumulation in f32) for a tight comparison."""
    q = lambda a: a.astype(jnp.bfloat16).astype(jnp.float32)
    x = jnp.transpose(x_nchw, (0, 2, 3, 1)).astype(jnp.float32)
    dn = ('NHWC', 'HWIO', 'NHWC')
    conv = lambda a, w: jax.lax.conv_general_dilated(
        a, w, (1, 1), 'SAME', dimension_numbers=dn,
        precision=jax.lax.Precision.HIGHEST)
    bn = lambda a, g, b, m, v: (a - m) / jnp.sqrt(v + eps) * g + b
    xq = q(x)
    h = jax.nn.relu(bn(conv(xq, q(w1)) + cb1, g1, be1, m1, v1))
    y = bn(conv(q(h), q(w2)) + cb2, g2, be2, m2, v2) + xq
    return jnp.transpose(jax.nn.relu(y), (0, 3, 1, 2))


if __name__ == "__main__":
    key = jax.random.PRNGKey(0)
    N, C, H, W = 2, 4, 16, 16          # in_channels == out_channels == 4

    ks = jax.random.split(key, 16)
    x = jax.random.normal(ks[0], (N, C, H, W), jnp.float32)

    # conv weights (HWIO) + biases (nn.Conv2d default bias=True in the spec).
    w1 = jax.random.normal(ks[1], (3, 3, C, C), jnp.float32) * 0.1
    w2 = jax.random.normal(ks[2], (3, 3, C, C), jnp.float32) * 0.1
    cb1 = 0.1 * jax.random.normal(ks[11], (C,), jnp.float32)
    cb2 = 0.1 * jax.random.normal(ks[12], (C,), jnp.float32)

    # batchnorm params (eval-mode running stats).
    g1 = 1.0 + 0.1 * jax.random.normal(ks[3], (C,), jnp.float32)
    be1 = 0.1 * jax.random.normal(ks[4], (C,), jnp.float32)
    m1 = 0.1 * jax.random.normal(ks[5], (C,), jnp.float32)
    v1 = 0.5 + jnp.abs(jax.random.normal(ks[6], (C,), jnp.float32))
    g2 = 1.0 + 0.1 * jax.random.normal(ks[7], (C,), jnp.float32)
    be2 = 0.1 * jax.random.normal(ks[8], (C,), jnp.float32)
    m2 = 0.1 * jax.random.normal(ks[9], (C,), jnp.float32)
    v2 = 0.5 + jnp.abs(jax.random.normal(ks[10], (C,), jnp.float32))

    y = basic_block_forward(x, w1, cb1, g1, be1, m1, v1,
                            w2, cb2, g2, be2, m2, v2)
    y = jax.block_until_ready(y)

    y_ref = _reference(x, w1, cb1, g1, be1, m1, v1, w2, cb2, g2, be2, m2, v2)
    assert y.shape == (N, C, H, W)
    err = jnp.max(jnp.abs(y - y_ref))
    assert jnp.allclose(y, y_ref, atol=2e-3, rtol=2e-3), f"max abs err {err}"

    print("KERNEL_OK")
</pallas_src>

<mosaic_0001>
module attributes {stable_mosaic.version = 11 : i64} {
  func.func @_basic_block_kernel(%arg0: i32, %arg1: memref<1x18x18x128xbf16, #tpu.memory_space<vmem>>, %arg2: memref<1152x128xbf16, #tpu.memory_space<vmem>>, %arg3: memref<1x128xf32, #tpu.memory_space<vmem>>, %arg4: memref<1x128xf32, #tpu.memory_space<vmem>>, %arg5: memref<1152x128xbf16, #tpu.memory_space<vmem>>, %arg6: memref<1x128xf32, #tpu.memory_space<vmem>>, %arg7: memref<1x128xf32, #tpu.memory_space<vmem>>, %arg8: memref<1x16x16x128xf32, #tpu.memory_space<vmem>>, %arg9: memref<1x18x18x128xbf16, #tpu.memory_space<vmem>>) attributes {dimension_semantics = [#tpu.dimension_semantics<parallel>], iteration_bounds = array<i64: 2>, scalar_prefetch = 0 : i64, scratch_operands = 1 : i64, tpu.core_type = #tpu.core_type<tc>, window_params = [{transform_indices = @transform_0, window_bounds = array<i64: 1, 18, 18, 128>}, {pipeline_mode = #tpu.pipeline_mode<synchronous>, transform_indices = @transform_1, window_bounds = array<i64: 1152, 128>}, {pipeline_mode = #tpu.pipeline_mode<synchronous>, transform_indices = @transform_2, window_bounds = array<i64: 1, 128>}, {pipeline_mode = #tpu.pipeline_mode<synchronous>, transform_indices = @transform_3, window_bounds = array<i64: 1, 128>}, {pipeline_mode = #tpu.pipeline_mode<synchronous>, transform_indices = @transform_4, window_bounds = array<i64: 1152, 128>}, {pipeline_mode = #tpu.pipeline_mode<synchronous>, transform_indices = @transform_5, window_bounds = array<i64: 1, 128>}, {pipeline_mode = #tpu.pipeline_mode<synchronous>, transform_indices = @transform_6, window_bounds = array<i64: 1, 128>}, {transform_indices = @transform_7, window_bounds = array<i64: 1, 16, 16, 128>}]} {
    %c0 = arith.constant 0 : index
    %c0_0 = arith.constant 0 : index
    %c0_1 = arith.constant 0 : index
    %c0_2 = arith.constant 0 : index
    %0 = vector.load %arg1[%c0, %c0_0, %c0_1, %c0_2] : memref<1x18x18x128xbf16, #tpu.memory_space<vmem>>, vector<1x18x18x128xbf16>
    %1 = vector.extract_strided_slice %0 {offsets = [0, 0, 0, 0], sizes = [1, 16, 16, 128], strides = [1, 1, 1, 1]} : vector<1x18x18x128xbf16> to vector<1x16x16x128xbf16>
    %2 = vector.extract_strided_slice %0 {offsets = [0, 0, 1, 0], sizes = [1, 16, 16, 128], strides = [1, 1, 1, 1]} : vector<1x18x18x128xbf16> to vector<1x16x16x128xbf16>
    %3 = vector.extract_strided_slice %0 {offsets = [0, 0, 2, 0], sizes = [1, 16, 16, 128], strides = [1, 1, 1, 1]} : vector<1x18x18x128xbf16> to vector<1x16x16x128xbf16>
    %4 = vector.extract_strided_slice %0 {offsets = [0, 1, 0, 0], sizes = [1, 16, 16, 128], strides = [1, 1, 1, 1]} : vector<1x18x18x128xbf16> to vector<1x16x16x128xbf16>
    %5 = vector.extract_strided_slice %0 {offsets = [0, 1, 1, 0], sizes = [1, 16, 16, 128], strides = [1, 1, 1, 1]} : vector<1x18x18x128xbf16> to vector<1x16x16x128xbf16>
    %6 = vector.extract_strided_slice %0 {offsets = [0, 1, 2, 0], sizes = [1, 16, 16, 128], strides = [1, 1, 1, 1]} : vector<1x18x18x128xbf16> to vector<1x16x16x128xbf16>
    %7 = vector.extract_strided_slice %0 {offsets = [0, 2, 0, 0], sizes = [1, 16, 16, 128], strides = [1, 1, 1, 1]} : vector<1x18x18x128xbf16> to vector<1x16x16x128xbf16>
    %8 = vector.extract_strided_slice %0 {offsets = [0, 2, 1, 0], sizes = [1, 16, 16, 128], strides = [1, 1, 1, 1]} : vector<1x18x18x128xbf16> to vector<1x16x16x128xbf16>
    %9 = vector.extract_strided_slice %0 {offsets = [0, 2, 2, 0], sizes = [1, 16, 16, 128], strides = [1, 1, 1, 1]} : vector<1x18x18x128xbf16> to vector<1x16x16x128xbf16>
    %10 = tpu.concatenate %1, %2, %3, %4, %5, %6, %7, %8, %9 in 3 : vector<1x16x16x128xbf16>, vector<1x16x16x128xbf16>, vector<1x16x16x128xbf16>, vector<1x16x16x128xbf16>, vector<1x16x16x128xbf16>, vector<1x16x16x128xbf16>, vector<1x16x16x128xbf16>, vector<1x16x16x128xbf16>, vector<1x16x16x128xbf16> -> vector<1x16x16x1152xbf16>
    %11 = vector.shape_cast %10 : vector<1x16x16x1152xbf16> to vector<256x1152xbf16>
    %c0_3 = arith.constant 0 : index
    %c0_4 = arith.constant 0 : index
    %12 = vector.load %arg2[%c0_3, %c0_4] : memref<1152x128xbf16, #tpu.memory_space<vmem>>, vector<1152x128xbf16>
    %cst = arith.constant dense<0.000000e+00> : vector<256x128xf32>
    %13 = tpu.matmul %11, %12, %cst {dimension_numbers = #tpu.dot_dimension_numbers<[1], [0], [0], [1], [0, 0, 1, 1], [], []>} : vector<256x1152xbf16>, vector<1152x128xbf16>, vector<256x128xf32> -> vector<256x128xf32>
    %c0_5 = arith.constant 0 : index
    %c0_6 = arith.constant 0 : index
    %14 = vector.load %arg3[%c0_5, %c0_6] : memref<1x128xf32, #tpu.memory_space<vmem>>, vector<1x128xf32>
    %15 = vector.broadcast %14 : vector<1x128xf32> to vector<256x128xf32>
    %16 = arith.mulf %13, %15 : vector<256x128xf32>
    %c0_7 = arith.constant 0 : index
    %c0_8 = arith.constant 0 : index
    %17 = vector.load %arg4[%c0_7, %c0_8] : memref<1x128xf32, #tpu.memory_space<vmem>>, vector<1x128xf32>
    %18 = vector.broadcast %17 : vector<1x128xf32> to vector<256x128xf32>
    %19 = arith.addf %16, %18 : vector<256x128xf32>
    %cst_9 = arith.constant 0.000000e+00 : f32
    %20 = vector.broadcast %cst_9 : f32 to vector<256x128xf32>
    %21 = arith.maximumf %19, %20 : vector<256x128xf32>
    %cst_10 = arith.constant 0.000000e+00 : bf16
    %22 = vector.broadcast %cst_10 : bf16 to vector<1x1x18x128xbf16>
    %cst_11 = arith.constant 0.000000e+00 : bf16
    %23 = vector.broadcast %cst_11 : bf16 to vector<1x16x1x128xbf16>
    %c0_12 = arith.constant 0 : index
    %c0_13 = arith.constant 0 : index
    %c0_14 = arith.constant 0 : index
    %c0_15 = arith.constant 0 : index
    %24 = vector.load %arg9[%c0_12, %c0_13, %c0_14, %c0_15] : memref<1x18x18x128xbf16, #tpu.memory_space<vmem>>, vector<1x1x18x128xbf16>
    tpu.vector_store %arg9[%c0_12, %c0_13, %c0_14, %c0_15], %22 {strides = array<i32>} : memref<1x18x18x128xbf16, #tpu.memory_space<vmem>>, vector<1x1x18x128xbf16>,
    %c0_16 = arith.constant 0 : index
    %c17 = arith.constant 17 : index
    %c0_17 = arith.constant 0 : index
    %c0_18 = arith.constant 0 : index
    %25 = vector.load %arg9[%c0_16, %c17, %c0_17, %c0_18] : memref<1x18x18x128xbf16, #tpu.memory_space<vmem>>, vector<1x1x18x128xbf16>
    tpu.vector_store %arg9[%c0_16, %c17, %c0_17, %c0_18], %22 {strides = array<i32>} : memref<1x18x18x128xbf16, #tpu.memory_space<vmem>>, vector<1x1x18x128xbf16>,
    %c0_19 = arith.constant 0 : index
    %c1 = arith.constant 1 : index
    %c0_20 = arith.constant 0 : index
    %c0_21 = arith.constant 0 : index
    %26 = vector.load %arg9[%c0_19, %c1, %c0_20, %c0_21] : memref<1x18x18x128xbf16, #tpu.memory_space<vmem>>, vector<1x16x1x128xbf16>
    tpu.vector_store %arg9[%c0_19, %c1, %c0_20, %c0_21], %23 {strides = array<i32>} : memref<1x18x18x128xbf16, #tpu.memory_space<vmem>>, vector<1x16x1x128xbf16>,
    %c0_22 = arith.constant 0 : index
    %c1_23 = arith.constant 1 : index
    %c17_24 = arith.constant 17 : index
    %c0_25 = arith.constant 0 : index
    %27 = vector.load %arg9[%c0_22, %c1_23, %c17_24, %c0_25] : memref<1x18x18x128xbf16, #tpu.memory_space<vmem>>, vector<1x16x1x128xbf16>
    tpu.vector_store %arg9[%c0_22, %c1_23, %c17_24, %c0_25], %23 {strides = array<i32>} : memref<1x18x18x128xbf16, #tpu.memory_space<vmem>>, vector<1x16x1x128xbf16>,
    %28 = vector.shape_cast %21 : vector<256x128xf32> to vector<1x16x16x128xf32>
    %29 = arith.truncf %28 : vector<1x16x16x128xf32> to vector<1x16x16x128xbf16>
    %c0_26 = arith.constant 0 : index
    %c1_27 = arith.constant 1 : index
    %c1_28 = arith.constant 1 : index
    %c0_29 = arith.constant 0 : index
    %30 = vector.load %arg9[%c0_26, %c1_27, %c1_28, %c0_29] : memref<1x18x18x128xbf16, #tpu.memory_space<vmem>>, vector<1x16x16x128xbf16>
    tpu.vector_store %arg9[%c0_26, %c1_27, %c1_28, %c0_29], %29 {strides = array<i32>} : memref<1x18x18x128xbf16, #tpu.memory_space<vmem>>, vector<1x16x16x128xbf16>,
    %c0_30 = arith.constant 0 : index
    %c0_31 = arith.constant 0 : index
    %c0_32 = arith.constant 0 : index
    %c0_33 = arith.constant 0 : index
    %31 = vector.load %arg9[%c0_30, %c0_31, %c0_32, %c0_33] : memref<1x18x18x128xbf16, #tpu.memory_space<vmem>>, vector<1x18x18x128xbf16>
    %32 = vector.extract_strided_slice %31 {offsets = [0, 0, 0, 0], sizes = [1, 16, 16, 128], strides = [1, 1, 1, 1]} : vector<1x18x18x128xbf16> to vector<1x16x16x128xbf16>
    %33 = vector.extract_strided_slice %31 {offsets = [0, 0, 1, 0], sizes = [1, 16, 16, 128], strides = [1, 1, 1, 1]} : vector<1x18x18x128xbf16> to vector<1x16x16x128xbf16>
    %34 = vector.extract_strided_slice %31 {offsets = [0, 0, 2, 0], sizes = [1, 16, 16, 128], strides = [1, 1, 1, 1]} : vector<1x18x18x128xbf16> to vector<1x16x16x128xbf16>
    %35 = vector.extract_strided_slice %31 {offsets = [0, 1, 0, 0], sizes = [1, 16, 16, 128], strides = [1, 1, 1, 1]} : vector<1x18x18x128xbf16> to vector<1x16x16x128xbf16>
    %36 = vector.extract_strided_slice %31 {offsets = [0, 1, 1, 0], sizes = [1, 16, 16, 128], strides = [1, 1, 1, 1]} : vector<1x18x18x128xbf16> to vector<1x16x16x128xbf16>
    %37 = vector.extract_strided_slice %31 {offsets = [0, 1, 2, 0], sizes = [1, 16, 16, 128], strides = [1, 1, 1, 1]} : vector<1x18x18x128xbf16> to vector<1x16x16x128xbf16>
    %38 = vector.extract_strided_slice %31 {offsets = [0, 2, 0, 0], sizes = [1, 16, 16, 128], strides = [1, 1, 1, 1]} : vector<1x18x18x128xbf16> to vector<1x16x16x128xbf16>
    %39 = vector.extract_strided_slice %31 {offsets = [0, 2, 1, 0], sizes = [1, 16, 16, 128], strides = [1, 1, 1, 1]} : vector<1x18x18x128xbf16> to vector<1x16x16x128xbf16>
    %40 = vector.extract_strided_slice %31 {offsets = [0, 2, 2, 0], sizes = [1, 16, 16, 128], strides = [1, 1, 1, 1]} : vector<1x18x18x128xbf16> to vector<1x16x16x128xbf16>
    %41 = tpu.concatenate %32, %33, %34, %35, %36, %37, %38, %39, %40 in 3 : vector<1x16x16x128xbf16>, vector<1x16x16x128xbf16>, vector<1x16x16x128xbf16>, vector<1x16x16x128xbf16>, vector<1x16x16x128xbf16>, vector<1x16x16x128xbf16>, vector<1x16x16x128xbf16>, vector<1x16x16x128xbf16>, vector<1x16x16x128xbf16> -> vector<1x16x16x1152xbf16>
    %42 = vector.shape_cast %41 : vector<1x16x16x1152xbf16> to vector<256x1152xbf16>
    %c0_34 = arith.constant 0 : index
    %c0_35 = arith.constant 0 : index
    %43 = vector.load %arg5[%c0_34, %c0_35] : memref<1152x128xbf16, #tpu.memory_space<vmem>>, vector<1152x128xbf16>
    %cst_36 = arith.constant dense<0.000000e+00> : vector<256x128xf32>
    %44 = tpu.matmul %42, %43, %cst_36 {dimension_numbers = #tpu.dot_dimension_numbers<[1], [0], [0], [1], [0, 0, 1, 1], [], []>} : vector<256x1152xbf16>, vector<1152x128xbf16>, vector<256x128xf32> -> vector<256x128xf32>
    %45 = vector.shape_cast %5 : vector<1x16x16x128xbf16> to vector<256x128xbf16>
    %46 = arith.extf %45 : vector<256x128xbf16> to vector<256x128xf32>
    %c0_37 = arith.constant 0 : index
    %c0_38 = arith.constant 0 : index
    %47 = vector.load %arg6[%c0_37, %c0_38] : memref<1x128xf32, #tpu.memory_space<vmem>>, vector<1x128xf32>
    %48 = vector.broadcast %47 : vector<1x128xf32> to vector<256x128xf32>
    %49 = arith.mulf %44, %48 : vector<256x128xf32>
    %c0_39 = arith.constant 0 : index
    %c0_40 = arith.constant 0 : index
    %50 = vector.load %arg7[%c0_39, %c0_40] : memref<1x128xf32, #tpu.memory_space<vmem>>, vector<1x128xf32>
    %51 = vector.broadcast %50 : vector<1x128xf32> to vector<256x128xf32>
    %52 = arith.addf %49, %51 : vector<256x128xf32>
    %53 = arith.addf %52, %46 : vector<256x128xf32>
    %cst_41 = arith.constant 0.000000e+00 : f32
    %54 = vector.broadcast %cst_41 : f32 to vector<256x128xf32>
    %55 = arith.maximumf %53, %54 : vector<256x128xf32>
    %56 = vector.shape_cast %55 : vector<256x128xf32> to vector<1x16x16x128xf32>
    %c0_42 = arith.constant 0 : index
    %c0_43 = arith.constant 0 : index
    %c0_44 = arith.constant 0 : index
    %c0_45 = arith.constant 0 : index
    %57 = vector.load %arg8[%c0_42, %c0_43, %c0_44, %c0_45] : memref<1x16x16x128xf32, #tpu.memory_space<vmem>>, vector<1x16x16x128xf32>
    tpu.vector_store %arg8[%c0_42, %c0_43, %c0_44, %c0_45], %56 {strides = array<i32>} : memref<1x16x16x128xf32, #tpu.memory_space<vmem>>, vector<1x16x16x128xf32>,
    return
  }
  func.func @transform_0(%arg0: i32) -> (i32, i32, i32, i32) {
    %c0_i32 = arith.constant 0 : i32
    %c0_i32_0 = arith.constant 0 : i32
    %c0_i32_1 = arith.constant 0 : i32
    %c0_i32_2 = arith.constant 0 : i32
    return %arg0, %c0_i32, %c0_i32_0, %c0_i32_1 : i32, i32, i32, i32
  }
  func.func @transform_1(%arg0: i32) -> (i32, i32) {
    %c0_i32 = arith.constant 0 : i32
    %c0_i32_0 = arith.constant 0 : i32
    %c0_i32_1 = arith.constant 0 : i32
    return %c0_i32, %c0_i32_0 : i32, i32
  }
  func.func @transform_2(%arg0: i32) -> (i32, i32) {
    %c0_i32 = arith.constant 0 : i32
    %c0_i32_0 = arith.constant 0 : i32
    %c0_i32_1 = arith.constant 0 : i32
    return %c0_i32, %c0_i32_0 : i32, i32
  }
  func.func @transform_3(%arg0: i32) -> (i32, i32) {
    %c0_i32 = arith.constant 0 : i32
    %c0_i32_0 = arith.constant 0 : i32
    %c0_i32_1 = arith.constant 0 : i32
    return %c0_i32, %c0_i32_0 : i32, i32
  }
  func.func @transform_4(%arg0: i32) -> (i32, i32) {
    %c0_i32 = arith.constant 0 : i32
    %c0_i32_0 = arith.constant 0 : i32
    %c0_i32_1 = arith.constant 0 : i32
    return %c0_i32, %c0_i32_0 : i32, i32
  }
  func.func @transform_5(%arg0: i32) -> (i32, i32) {
    %c0_i32 = arith.constant 0 : i32
    %c0_i32_0 = arith.constant 0 : i32
    %c0_i32_1 = arith.constant 0 : i32
    return %c0_i32, %c0_i32_0 : i32, i32
  }
  func.func @transform_6(%arg0: i32) -> (i32, i32) {
    %c0_i32 = arith.constant 0 : i32
    %c0_i32_0 = arith.constant 0 : i32
    %c0_i32_1 = arith.constant 0 : i32
    return %c0_i32, %c0_i32_0 : i32, i32
  }
  func.func @transform_7(%arg0: i32) -> (i32, i32, i32, i32) {
    %c0_i32 = arith.constant 0 : i32
    %c0_i32_0 = arith.constant 0 : i32
    %c0_i32_1 = arith.constant 0 : i32
    %c0_i32_2 = arith.constant 0 : i32
    return %arg0, %c0_i32, %c0_i32_0, %c0_i32_1 : i32, i32, i32, i32
  }
}

</mosaic_0001>

<llo_original>
// kernel: tpu_custom_call.1
$region0: #{tpu_custom_call.1}
  #allocation0 [shape = 'u32[]', space=smem, size = 0x4, offset = 0x4, fixed_abs, tag = 'smem constant byte address 0x4 - core index']
  #allocation1 [shape = 'u32[144,128]{1,0:T(1,128)}', space=vmem, size = 0x12000, scoped, tag = 'internal scratch']
  #allocation2 [shape = 'bf16[1,18,18,128]{3,2,1,0:T(8,128)(2,1)}', space=vmem, size = 0x1b000, scoped, tag = 'scratch operand']
  %s0 = inlined_call_operand.vmem [shape: bf16[2,18,18,128], index: 0, kind: input, shape index: {}]
  %s1 = inlined_call_operand.vmem [shape: bf16[1152,128], index: 1, kind: input, shape index: {}]
  %s2 = inlined_call_operand.vmem [shape: f32[1,128], index: 2, kind: input, shape index: {}]
  %s3 = inlined_call_operand.vmem [shape: f32[1,128], index: 3, kind: input, shape index: {}]
  %s4 = inlined_call_operand.hbm [shape: bf16[1152,128], index: 4, kind: input, shape index: {}]
  %s5 = inlined_call_operand.vmem [shape: f32[1,128], index: 5, kind: input, shape index: {}]
  %s6 = inlined_call_operand.vmem [shape: f32[1,128], index: 6, kind: input, shape index: {}]
  %s7 = inlined_call_operand.hbm [shape: f32[2,16,16,128], index: 7, kind: output, shape index: {}]
  %s8 = sld [smem:[#allocation0]]
  $region65: #{tpu_custom_call.1} parent=0
    _
  %s10 = ssub.s32 1, %s8
  %s11 = scalar_select 0, %s10, %s8
  $region1: #{tpu_custom_call.1} parent=0
    #allocation3 [shape = 'u8[294912]{0}', space=vmem, size = 0x48000, scoped, tag = 'input window, operand 4, single buffered']
    #allocation4 [shape = 's32[2]{0}', space=sflag, size = 0x8, scoped, tag = 'scoped memory for tpu_custom_call.1']
    #allocation5 [shape = 's32[2]{0}', space=sflag, size = 0x8, scoped, tag = 'scoped memory for tpu_custom_call.1']
    #allocation6 [shape = 'u8[262144]{0}', space=vmem, size = 0x40000, scoped, tag = 'output window, operand 0']
    %12 = vsyncpa [#allocation4], 0
    %13 = vsyncpa [#allocation5], 0
    %s14 = scalar_lea.sflag [#allocation5], 1
    %15 = vsyncpa %s14, 0
    loop: start=0, step=1, limit=4
    $region2: #{tpu_custom_call.1} parent=1 // loop_pre_header
      _
    $region3: #{tpu_custom_call.1} parent=1 // loop_header
      %s17 = sphi 0, %s21
      %p18 = scmp.ge.s32.totalorder %s17, 4
      %s27 = sphi 0, %s29
      %s30 = sphi 0, %s27
      %s31 = sphi 0, %s30
      %s47 = sphi 0, %s31
      %s51 = sphi 0, %s51
      %s53 = sphi 0, %s51
      %s54 = sphi 0, %s53
      %s68 = sphi 0, %s54
      %s72 = sphi 0, %s72
      %s74 = sphi 0, %s72
      %s75 = sphi 0, %s74
      %s89 = sphi 0, %s75
      %s93 = sphi 0, %s93
      %s95 = sphi 0, %s93
      %s96 = sphi 0, %s95
      %s110 = sphi 0, %s96
      %s114 = sphi 0, %s114
      %s116 = sphi 0, %s114
      %s117 = sphi 0, %s116
      %s131 = sphi 0, %s117
      %s135 = sphi 0, %s135
      %s137 = sphi 0, %s135
      %s138 = sphi 0, %s137
      %s152 = sphi 0, %s138
      %s156 = sphi 0, %s156
      %s158 = sphi 0, %s156
      %s159 = sphi 0, %s158
      %s173 = sphi 0, %s159
      %s179 = sphi 0, %s181
      %s182 = sphi 0, %s179
      %s183 = sphi 0, %s182
      %s199 = sphi 0, %s183
    $region4: #{tpu_custom_call.1} parent=1 // loop_header_branch
      %20 = sbr.rel (%p18) target = $region8
    $region5: #{tpu_custom_call.1} parent=1 // loop_body
      %s22 = ssub.s32 %s17, 1
      %s23 = ssub.s32 %s17, 2
      %s24 = sadd.s32 %s17, 1
      %s25 = ssub.s32 %s17, %s24
      %p26 = scmp.eq.s32.totalorder %s25, 0
      %s28 = sadd.s32 %s27, 1
      %s29 = scalar_select %p26, %s27, %s28
      %p32 = pneg %p26
      %p33 = scmp.eq.s32.totalorder %s17, 1
      %p34 = por %p32, %p33
      %p35 = scmp.ne.s32.totalorder %s27, %s30
      %p36 = scmp.eq.s32.totalorder %s17, 0
      %p37 = por %p35, %p36
      %p38 = scmp.ne.s32.totalorder %s27, %s30
      %p39 = scmp.eq.s32.totalorder %s22, 1
      %p40 = por %p38, %p39
      %p41 = scmp.ne.s32.totalorder %s30, %s31
      %p42 = scmp.eq.s32.totalorder %s22, 0
      %p43 = por %p41, %p42
      %p44 = scmp.ne.s32.totalorder %s30, %s31
      %p45 = scmp.eq.s32.totalorder %s23, 1
      %p46 = por %p44, %p45
      %p48 = scmp.ne.s32.totalorder %s31, %s47
      %p49 = scmp.eq.s32.totalorder %s23, 0
      %p50 = por %p48, %p49
      %s52 = sadd.s32 %s51, 1
      %p55 = scmp.eq.s32.totalorder %s17, 1
      %p56 = scmp.ne.s32.totalorder %s51, %s53
      %p57 = scmp.eq.s32.totalorder %s17, 0
      %p58 = por %p56, %p57
      %p59 = scmp.ne.s32.totalorder %s51, %s53
      %p60 = scmp.eq.s32.totalorder %s22, 1
      %p61 = por %p59, %p60
      %p62 = scmp.ne.s32.totalorder %s53, %s54
      %p63 = scmp.eq.s32.totalorder %s22, 0
      %p64 = por %p62, %p63
      %p65 = scmp.ne.s32.totalorder %s53, %s54
      %p66 = scmp.eq.s32.totalorder %s23, 1
      %p67 = por %p65, %p66
      %p69 = scmp.ne.s32.totalorder %s54, %s68
      %p70 = scmp.eq.s32.totalorder %s23, 0
      %p71 = por %p69, %p70
      %s73 = sadd.s32 %s72, 1
      %p76 = scmp.eq.s32.totalorder %s17, 1
      %p77 = scmp.ne.s32.totalorder %s72, %s74
      %p78 = scmp.eq.s32.totalorder %s17, 0
      %p79 = por %p77, %p78
      %p80 = scmp.ne.s32.totalorder %s72, %s74
      %p81 = scmp.eq.s32.totalorder %s22, 1
      %p82 = por %p80, %p81
      %p83 = scmp.ne.s32.totalorder %s74, %s75
      %p84 = scmp.eq.s32.totalorder %s22, 0
      %p85 = por %p83, %p84
      %p86 = scmp.ne.s32.totalorder %s74, %s75
      %p87 = scmp.eq.s32.totalorder %s23, 1
      %p88 = por %p86, %p87
      %p90 = scmp.ne.s32.totalorder %s75, %s89
      %p91 = scmp.eq.s32.totalorder %s23, 0
      %p92 = por %p90, %p91
      %s94 = sadd.s32 %s93, 1
      %p97 = scmp.eq.s32.totalorder %s17, 1
      %p98 = scmp.ne.s32.totalorder %s93, %s95
      %p99 = scmp.eq.s32.totalorder %s17, 0
      %p100 = por %p98, %p99
      %p101 = scmp.ne.s32.totalorder %s93, %s95
      %p102 = scmp.eq.s32.totalorder %s22, 1
      %p103 = por %p101, %p102
      %p104 = scmp.ne.s32.totalorder %s95, %s96
      %p105 = scmp.eq.s32.totalorder %s22, 0
      %p106 = por %p104, %p105
      %p107 = scmp.ne.s32.totalorder %s95, %s96
      %p108 = scmp.eq.s32.totalorder %s23, 1
      %p109 = por %p107, %p108
      %p111 = scmp.ne.s32.totalorder %s96, %s110
      %p112 = scmp.eq.s32.totalorder %s23, 0
      %p113 = por %p111, %p112
      %s115 = sadd.s32 %s114, 1
      %p118 = scmp.eq.s32.totalorder %s17, 1
      %p119 = scmp.ne.s32.totalorder %s114, %s116
      %p120 = scmp.eq.s32.totalorder %s17, 0
      %p121 = por %p119, %p120
      %p122 = scmp.ne.s32.totalorder %s114, %s116
      %p123 = scmp.eq.s32.totalorder %s22, 1
      %p124 = por %p122, %p123
      %p125 = scmp.ne.s32.totalorder %s116, %s117
      %p126 = scmp.eq.s32.totalorder %s22, 0
      %p127 = por %p125, %p126
      %p128 = scmp.ne.s32.totalorder %s116, %s117
      %p129 = scmp.eq.s32.totalorder %s23, 1
      %p130 = por %p128, %p129
      %p132 = scmp.ne.s32.totalorder %s117, %s131
      %p133 = scmp.eq.s32.totalorder %s23, 0
      %p134 = por %p132, %p133
      %s136 = sadd.s32 %s135, 1
      %p139 = scmp.eq.s32.totalorder %s17, 1
      %p140 = scmp.ne.s32.totalorder %s135, %s137
      %p141 = scmp.eq.s32.totalorder %s17, 0
      %p142 = por %p140, %p141
      %p143 = scmp.ne.s32.totalorder %s135, %s137
      %p144 = scmp.eq.s32.totalorder %s22, 1
      %p145 = por %p143, %p144
      %p146 = scmp.ne.s32.totalorder %s137, %s138
      %p147 = scmp.eq.s32.totalorder %s22, 0
      %p148 = por %p146, %p147
      %p149 = scmp.ne.s32.totalorder %s137, %s138
      %p150 = scmp.eq.s32.totalorder %s23, 1
      %p151 = por %p149, %p150
      %p153 = scmp.ne.s32.totalorder %s138, %s152
      %p154 = scmp.eq.s32.totalorder %s23, 0
      %p155 = por %p153, %p154
      %s157 = sadd.s32 %s156, 1
      %p160 = scmp.eq.s32.totalorder %s17, 1
      %p161 = scmp.ne.s32.totalorder %s156, %s158
      %p162 = scmp.eq.s32.totalorder %s17, 0
      %p163 = por %p161, %p162
      %p164 = scmp.ne.s32.totalorder %s156, %s158
      %p165 = scmp.eq.s32.totalorder %s22, 1
      %p166 = por %p164, %p165
      %p167 = scmp.ne.s32.totalorder %s158, %s159
      %p168 = scmp.eq.s32.totalorder %s22, 0
      %p169 = por %p167, %p168
      %p170 = scmp.ne.s32.totalorder %s158, %s159
      %p171 = scmp.eq.s32.totalorder %s23, 1
      %p172 = por %p170, %p171
      %p174 = scmp.ne.s32.totalorder %s159, %s173
      %p175 = scmp.eq.s32.totalorder %s23, 0
      %p176 = por %p174, %p175
      %s177 = ssub.s32 %s17, %s24
      %p178 = scmp.eq.s32.totalorder %s177, 0
      %s180 = sadd.s32 %s179, 1
      %s181 = scalar_select %p178, %s179, %s180
      %p184 = pneg %p178
      %p185 = scmp.eq.s32.totalorder %s17, 1
      %p186 = por %p184, %p185
      %p187 = scmp.ne.s32.totalorder %s179, %s182
      %p188 = scmp.eq.s32.totalorder %s17, 0
      %p189 = por %p187, %p188
      %p190 = scmp.ne.s32.totalorder %s179, %s182
      %p191 = scmp.eq.s32.totalorder %s22, 1
      %p192 = por %p190, %p191
      %p193 = scmp.ne.s32.totalorder %s182, %s183
      %p194 = scmp.eq.s32.totalorder %s22, 0
      %p195 = por %p193, %p194
      %p196 = scmp.ne.s32.totalorder %s182, %s183
      %p197 = scmp.eq.s32.totalorder %s23, 1
      %p198 = por %p196, %p197
      %p200 = scmp.ne.s32.totalorder %s183, %s199
      %p201 = scmp.eq.s32.totalorder %s23, 0
      %p202 = por %p200, %p201
      %p203 = scmp.le.s32.totalorder 1, %s17
      %p204 = scmp.lt.s32.totalorder %s17, 3
      %p205 = pnand %p203, %p204
      %p206 = pneg %p205
      // Predicated region
      $region9: #{tpu_custom_call.1} parent=5 // pred_check
        _
      $region10: #{tpu_custom_call.1} parent=5 // pred_check_branch
        %208 = sbr.rel (%p205) target = $region12
      $region11: #{tpu_custom_call.1} parent=5 // pred_region
        %s209 = ssub.s32 %s17, 1
        // Predicated region
        $region13: #{tpu_custom_call.1} parent=11 // pred_check
          %p210 = pneg %p64
        $region14: #{tpu_custom_call.1} parent=11 // pred_check_branch
          %212 = sbr.rel (%p210) target = $region16
        $region15: #{tpu_custom_call.1} parent=11 // pred_region
          _
        $region16: #{tpu_custom_call.1} parent=11 // pred_fallthru
          _
        // Predicated region
        $region17: #{tpu_custom_call.1} parent=11 // pred_check
          %p213 = pneg %p85
        $region18: #{tpu_custom_call.1} parent=11 // pred_check_branch
          %215 = sbr.rel (%p213) target = $region20
        $region19: #{tpu_custom_call.1} parent=11 // pred_region
          _
        $region20: #{tpu_custom_call.1} parent=11 // pred_fallthru
          _
        // Predicated region
        $region21: #{tpu_custom_call.1} parent=11 // pred_check
          %p216 = pneg %p106
        $region22: #{tpu_custom_call.1} parent=11 // pred_check_branch
          %218 = sbr.rel (%p216) target = $region24
        $region23: #{tpu_custom_call.1} parent=11 // pred_region
          _
        $region24: #{tpu_custom_call.1} parent=11 // pred_fallthru
          _
        // Predicated region
        $region25: #{tpu_custom_call.1} parent=11 // pred_check
          %p219 = pneg %p127
        $region26: #{tpu_custom_call.1} parent=11 // pred_check_branch
          %221 = sbr.rel (%p219) target = $region28
        $region27: #{tpu_custom_call.1} parent=11 // pred_region
          %s223 = ssub.s32 9216, 9216
          %224 = vsyncadd [#allocation4], %s223
          %s225 = sshll.u32 [#allocation3], 4
          %s226 = int_to_ptr.vmem [resolvable:$true] %s225
          %231 = dma.hbm_to_vmem [thread:$0]  %s4, 9216, %s226, [#allocation4], 64, 64, 4
        $region28: #{tpu_custom_call.1} parent=11 // pred_fallthru
          _
        // Predicated region
        $region29: #{tpu_custom_call.1} parent=11 // pred_check
          %p232 = pneg %p148
        $region30: #{tpu_custom_call.1} parent=11 // pred_check_branch
          %234 = sbr.rel (%p232) target = $region32
        $region31: #{tpu_custom_call.1} parent=11 // pred_region
          _
        $region32: #{tpu_custom_call.1} parent=11 // pred_fallthru
          _
        // Predicated region
        $region33: #{tpu_custom_call.1} parent=11 // pred_check
          %p235 = pneg %p169
        $region34: #{tpu_custom_call.1} parent=11 // pred_check_branch
          %237 = sbr.rel (%p235) target = $region36
        $region35: #{tpu_custom_call.1} parent=11 // pred_region
          _
        $region36: #{tpu_custom_call.1} parent=11 // pred_fallthru
          _
      $region12: #{tpu_custom_call.1} parent=5 // pred_fallthru
        _
      %p238 = scmp.lt.s32.totalorder %s17, 2
      // Predicated region
      $region37: #{tpu_custom_call.1} parent=5 // pred_check
        %p239 = pneg %p238
      $region38: #{tpu_custom_call.1} parent=5 // pred_check_branch
        %241 = sbr.rel (%p239) target = $region40
      $region39: #{tpu_custom_call.1} parent=5 // pred_region
        // Predicated region
        $region41: #{tpu_custom_call.1} parent=39 // pred_check
          %p242 = pneg %p37
        $region42: #{tpu_custom_call.1} parent=39 // pred_check_branch
          %244 = sbr.rel (%p242) target = $region44
        $region43: #{tpu_custom_call.1} parent=39 // pred_region
          %p245 = scmp.lt.s32.totalorder %s17, 1
          %s246 = scalar_select %p245, %s17, 1
          %s247 = smul.addr %s246, 54
          %s248 = smul.addr %s247, 4
          %s249 = scalar_lea.vmem %s0, %s248
        $region44: #{tpu_custom_call.1} parent=39 // pred_fallthru
          _
      $region40: #{tpu_custom_call.1} parent=5 // pred_fallthru
        _
      %p250 = scmp.le.s32.totalorder 1, %s17
      %p251 = scmp.lt.s32.totalorder %s17, 3
      %p252 = pnand %p250, %p251
      %p253 = pneg %p252
      // Predicated region
      $region45: #{tpu_custom_call.1} parent=5 // pred_check
        _
      $region46: #{tpu_custom_call.1} parent=5 // pred_check_branch
        %255 = sbr.rel (%p252) target = $region48
      $region47: #{tpu_custom_call.1} parent=5 // pred_region
        %s256 = ssub.s32 %s17, 1
        // Predicated region
        $region49: #{tpu_custom_call.1} parent=47 // pred_check
          %p257 = pneg %p127
        $region50: #{tpu_custom_call.1} parent=47 // pred_check_branch
          %259 = sbr.rel (%p257) target = $region52
        $region51: #{tpu_custom_call.1} parent=47 // pred_region
          %260 = dma.done [#allocation4], 9216
        $region52: #{tpu_custom_call.1} parent=47 // pred_fallthru
          _
        %p261 = scmp.lt.s32.totalorder %s22, 1
        %s262 = scalar_select %p261, %s22, 1
        %s263 = smul.addr %s262, 54
        %s264 = smul.addr %s263, 4
        %s265 = scalar_lea.vmem %s0, %s264
        %p266 = pneg %p43
        %p267 = pneg %p40
        %p268 = pneg %p64
        %p269 = pneg %p61
        %p270 = pneg %p85
        %p271 = pneg %p82
        %p272 = pneg %p106
        %p273 = pneg %p103
        %p274 = pneg %p127
        %p275 = pneg %p124
        %p276 = pneg %p148
        %p277 = pneg %p145
        %p278 = pneg %p169
        %p279 = pneg %p166
        %p280 = pneg %p195
        %p281 = pneg %p192
        %s282 = sand.u32 %s182, 1
        %s283 = scalar_lea.sflag [#allocation5], %s282
        %s284 = sand.u32 %s182, 1
        %s285 = smul.addr %s284, 256
        %s286 = scalar_lea.vmem [#allocation6], %s285
        %p287 = scmp.lt.s32.totalorder %s22, 1
        %s288 = scalar_select %p287, %s22, 1
        %s289 = smul.addr %s288, 54
        %s290 = smul.addr %s289, 4
        %s291 = scalar_lea.vmem %s0, %s290
        %v293 = vld [vmem:[%s291] sm:$0xf]
        %v294 = vld [vmem:[%s291 + $0x4] sm:$0xf]
        %v295 = vld [vmem:[%s291 + $0x8] sm:$0x1]
        %v296 = vld [vmem:[%s291 + $0xc] sm:$0xf]
        %v297 = vld [vmem:[%s291 + $0x10] sm:$0xf]
        %v298 = vld [vmem:[%s291 + $0x14] sm:$0x1]
        %v299 = vld [vmem:[%s291 + $0x18] sm:$0xf]
        %v300 = vld [vmem:[%s291 + $0x1c] sm:$0xf]
        %v301 = vld [vmem:[%s291 + $0x20] sm:$0x1]
        %v302 = vld [vmem:[%s291 + $0x24] sm:$0xf]
        %v303 = vld [vmem:[%s291 + $0x28] sm:$0xf]
        %v304 = vld [vmem:[%s291 + $0x2c] sm:$0x1]
        %v305 = vld [vmem:[%s291 + $0x30] sm:$0xf]
        %v306 = vld [vmem:[%s291 + $0x34] sm:$0xf]
        %v307 = vld [vmem:[%s291 + $0x38] sm:$0x1]
        %v308 = vld [vmem:[%s291 + $0x3c] sm:$0xf]
        %v309 = vld [vmem:[%s291 + $0x40] sm:$0xf]
        %v310 = vld [vmem:[%s291 + $0x44] sm:$0x1]
        %v311 = vld [vmem:[%s291 + $0x48] sm:$0xf]
        %v312 = vld [vmem:[%s291 + $0x4c] sm:$0xf]
        %v313 = vld [vmem:[%s291 + $0x50] sm:$0x1]
        %v314 = vld [vmem:[%s291 + $0x54] sm:$0xf]
        %v315 = vld [vmem:[%s291 + $0x58] sm:$0xf]
        %v316 = vld [vmem:[%s291 + $0x5c] sm:$0x1]
        %v317 = vld [vmem:[%s291 + $0x60] sm:$0xf]
        %v318 = vld [vmem:[%s291 + $0x64] sm:$0xf]
        %v319 = vld [vmem:[%s291 + $0x68] sm:$0x1]
        %v320 = vld [vmem:[%s291 + $0x6c] sm:$0xf]
        %v321 = vld [vmem:[%s291 + $0x70] sm:$0xf]
        %v322 = vld [vmem:[%s291 + $0x74] sm:$0x1]
        %v323 = vld [vmem:[%s291 + $0x78] sm:$0xf]
        %v324 = vld [vmem:[%s291 + $0x7c] sm:$0xf]
        %v325 = vld [vmem:[%s291 + $0x80] sm:$0x1]
        %v326 = vld [vmem:[%s291 + $0x84] sm:$0xf]
        %v327 = vld [vmem:[%s291 + $0x88] sm:$0xf]
        %v328 = vld [vmem:[%s291 + $0x8c] sm:$0x1]
        %v329 = vld [vmem:[%s291 + $0x90] sm:$0xf]
        %v330 = vld [vmem:[%s291 + $0x94] sm:$0xf]
        %v331 = vld [vmem:[%s291 + $0x98] sm:$0x1]
        %v332 = vld [vmem:[%s291 + $0x9c] sm:$0xf]
        %v333 = vld [vmem:[%s291 + $0xa0] sm:$0xf]
        %v334 = vld [vmem:[%s291 + $0xa4] sm:$0x1]
        %v335 = vld [vmem:[%s291 + $0xa8] sm:$0xf]
        %v336 = vld [vmem:[%s291 + $0xac] sm:$0xf]
        %v337 = vld [vmem:[%s291 + $0xb0] sm:$0x1]
        %v338 = vld [vmem:[%s291 + $0xb4] sm:$0xf]
        %v339 = vld [vmem:[%s291 + $0xb8] sm:$0xf]
        %v340 = vld [vmem:[%s291 + $0xbc] sm:$0x1]
        %v341 = vld [vmem:[%s291 + $0xc0] sm:$0xf]
        %v342 = vld [vmem:[%s291 + $0xc4] sm:$0xf]
        %v343 = vld [vmem:[%s291 + $0xc8] sm:$0x1]
        %v344 = vld [vmem:[%s291 + $0xcc] sm:$0xf]
        %v345 = vld [vmem:[%s291 + $0xd0] sm:$0xf]
        %v346 = vld [vmem:[%s291 + $0xd4] sm:$0x1]
        %v379 = vunpack.c.l.b16 %v293
        %v380 = vunpack.c.l.b16 %v294
        %v381 = vunpack.c.l.b16 %v296
        %v382 = vunpack.c.l.b16 %v297
        %v383 = vunpack.c.l.b16 %v299
        %v384 = vunpack.c.l.b16 %v300
        %v385 = vunpack.c.l.b16 %v302
        %v386 = vunpack.c.l.b16 %v303
        %v387 = vunpack.c.l.b16 %v305
        %v388 = vunpack.c.l.b16 %v306
        %v389 = vunpack.c.l.b16 %v308
        %v390 = vunpack.c.l.b16 %v309
        %v391 = vunpack.c.l.b16 %v311
        %v392 = vunpack.c.l.b16 %v312
        %v393 = vunpack.c.l.b16 %v314
        %v394 = vunpack.c.l.b16 %v315
        %v395 = vunpack.c.l.b16 %v317
        %v396 = vunpack.c.l.b16 %v318
        %v397 = vunpack.c.l.b16 %v320
        %v398 = vunpack.c.l.b16 %v321
        %v399 = vunpack.c.l.b16 %v323
        %v400 = vunpack.c.l.b16 %v324
        %v401 = vunpack.c.l.b16 %v326
        %v402 = vunpack.c.l.b16 %v327
        %v403 = vunpack.c.l.b16 %v329
        %v404 = vunpack.c.l.b16 %v330
        %v405 = vunpack.c.l.b16 %v332
        %v406 = vunpack.c.l.b16 %v333
        %v407 = vunpack.c.l.b16 %v335
        %v408 = vunpack.c.l.b16 %v336
        %v409 = vunpack.c.l.b16 %v338
        %v410 = vunpack.c.l.b16 %v339
        %v411 = vpack.c.b16 %v380, %v379
        %v412 = vpack.c.b16 %v382, %v381
        %v413 = vpack.c.b16 %v384, %v383
        %v414 = vpack.c.b16 %v386, %v385
        %v415 = vpack.c.b16 %v388, %v387
        %v416 = vpack.c.b16 %v390, %v389
        %v417 = vpack.c.b16 %v392, %v391
        %v418 = vpack.c.b16 %v394, %v393
        %v419 = vpack.c.b16 %v396, %v395
        %v420 = vpack.c.b16 %v398, %v397
        %v421 = vpack.c.b16 %v400, %v399
        %v422 = vpack.c.b16 %v402, %v401
        %v423 = vpack.c.b16 %v404, %v403
        %v424 = vpack.c.b16 %v406, %v405
        %v425 = vpack.c.b16 %v408, %v407
        %v426 = vpack.c.b16 %v410, %v409
        %v459 = vunpack.c.l.b16 %v295
        %v460 = vunpack.c.l.b16 %v298
        %v461 = vunpack.c.l.b16 %v301
        %v462 = vunpack.c.l.b16 %v304
        %v463 = vunpack.c.l.b16 %v307
        %v464 = vunpack.c.l.b16 %v310
        %v465 = vunpack.c.l.b16 %v313
        %v466 = vunpack.c.l.b16 %v316
        %v467 = vunpack.c.l.b16 %v319
        %v468 = vunpack.c.l.b16 %v322
        %v469 = vunpack.c.l.b16 %v325
        %v470 = vunpack.c.l.b16 %v328
        %v471 = vunpack.c.l.b16 %v331
        %v472 = vunpack.c.l.b16 %v334
        %v473 = vunpack.c.l.b16 %v337
        %v474 = vunpack.c.l.b16 %v340
        %v475 = vpack.c.b16 %v459, %v459
        %v476 = vpack.c.b16 %v460, %v460
        %v477 = vpack.c.b16 %v461, %v461
        %v478 = vpack.c.b16 %v462, %v462
        %v479 = vpack.c.b16 %v463, %v463
        %v480 = vpack.c.b16 %v464, %v464
        %v481 = vpack.c.b16 %v465, %v465
        %v482 = vpack.c.b16 %v466, %v466
        %v483 = vpack.c.b16 %v467, %v467
        %v484 = vpack.c.b16 %v468, %v468
        %v485 = vpack.c.b16 %v469, %v469
        %v486 = vpack.c.b16 %v470, %v470
        %v487 = vpack.c.b16 %v471, %v471
        %v488 = vpack.c.b16 %v472, %v472
        %v489 = vpack.c.b16 %v473, %v473
        %v490 = vpack.c.b16 %v474, %v474
        %vm491 = vsmask.f32 7424
        %v493 = vshrl.u32 %v411, 16
        %v495 = vshll.u32 %v411, 16
        %v497 = vrot.slane %v495, 1
        %v498 = vor.u32 %v493, %v497
        %v500 = vshll.u32 %v475, 16
        %v502 = vrot.slane %v500, 1
        %v503 = vsel %vm491, %v498, %v502
        %v505 = vshrl.u32 %v412, 16
        %v507 = vshll.u32 %v412, 16
        %v509 = vrot.slane %v507, 1
        %v510 = vor.u32 %v505, %v509
        %v512 = vshll.u32 %v476, 16
        %v514 = vrot.slane %v512, 1
        %v515 = vsel %vm491, %v510, %v514
        %v517 = vshrl.u32 %v413, 16
        %v519 = vshll.u32 %v413, 16
        %v521 = vrot.slane %v519, 1
        %v522 = vor.u32 %v517, %v521
        %v524 = vshll.u32 %v477, 16
        %v526 = vrot.slane %v524, 1
        %v527 = vsel %vm491, %v522, %v526
        %v529 = vshrl.u32 %v414, 16
        %v531 = vshll.u32 %v414, 16
        %v533 = vrot.slane %v531, 1
        %v534 = vor.u32 %v529, %v533
        %v536 = vshll.u32 %v478, 16
        %v538 = vrot.slane %v536, 1
        %v539 = vsel %vm491, %v534, %v538
        %v541 = vshrl.u32 %v415, 16
        %v543 = vshll.u32 %v415, 16
        %v545 = vrot.slane %v543, 1
        %v546 = vor.u32 %v541, %v545
        %v548 = vshll.u32 %v479, 16
        %v550 = vrot.slane %v548, 1
        %v551 = vsel %vm491, %v546, %v550
        %v553 = vshrl.u32 %v416, 16
        %v555 = vshll.u32 %v416, 16
        %v557 = vrot.slane %v555, 1
        %v558 = vor.u32 %v553, %v557
        %v560 = vshll.u32 %v480, 16
        %v562 = vrot.slane %v560, 1
        %v563 = vsel %vm491, %v558, %v562
        %v565 = vshrl.u32 %v417, 16
        %v567 = vshll.u32 %v417, 16
        %v569 = vrot.slane %v567, 1
        %v570 = vor.u32 %v565, %v569
        %v572 = vshll.u32 %v481, 16
        %v574 = vrot.slane %v572, 1
        %v575 = vsel %vm491, %v570, %v574
        %v577 = vshrl.u32 %v418, 16
        %v579 = vshll.u32 %v418, 16
        %v581 = vrot.slane %v579, 1
        %v582 = vor.u32 %v577, %v581
        %v584 = vshll.u32 %v482, 16
        %v586 = vrot.slane %v584, 1
        %v587 = vsel %vm491, %v582, %v586
        %v589 = vshrl.u32 %v419, 16
        %v591 = vshll.u32 %v419, 16
        %v593 = vrot.slane %v591, 1
        %v594 = vor.u32 %v589, %v593
        %v596 = vshll.u32 %v483, 16
        %v598 = vrot.slane %v596, 1
        %v599 = vsel %vm491, %v594, %v598
        %v601 = vshrl.u32 %v420, 16
        %v603 = vshll.u32 %v420, 16
        %v605 = vrot.slane %v603, 1
        %v606 = vor.u32 %v601, %v605
        %v608 = vshll.u32 %v484, 16
        %v610 = vrot.slane %v608, 1
        %v611 = vsel %vm491, %v606, %v610
        %v613 = vshrl.u32 %v421, 16
        %v615 = vshll.u32 %v421, 16
        %v617 = vrot.slane %v615, 1
        %v618 = vor.u32 %v613, %v617
        %v620 = vshll.u32 %v485, 16
        %v622 = vrot.slane %v620, 1
        %v623 = vsel %vm491, %v618, %v622
        %v625 = vshrl.u32 %v422, 16
        %v627 = vshll.u32 %v422, 16
        %v629 = vrot.slane %v627, 1
        %v630 = vor.u32 %v625, %v629
        %v632 = vshll.u32 %v486, 16
        %v634 = vrot.slane %v632, 1
        %v635 = vsel %vm491, %v630, %v634
        %v637 = vshrl.u32 %v423, 16
        %v639 = vshll.u32 %v423, 16
        %v641 = vrot.slane %v639, 1
        %v642 = vor.u32 %v637, %v641
        %v644 = vshll.u32 %v487, 16
        %v646 = vrot.slane %v644, 1
        %v647 = vsel %vm491, %v642, %v646
        %v649 = vshrl.u32 %v424, 16
        %v651 = vshll.u32 %v424, 16
        %v653 = vrot.slane %v651, 1
        %v654 = vor.u32 %v649, %v653
        %v656 = vshll.u32 %v488, 16
        %v658 = vrot.slane %v656, 1
        %v659 = vsel %vm491, %v654, %v658
        %v661 = vshrl.u32 %v425, 16
        %v663 = vshll.u32 %v425, 16
        %v665 = vrot.slane %v663, 1
        %v666 = vor.u32 %v661, %v665
        %v668 = vshll.u32 %v489, 16
        %v670 = vrot.slane %v668, 1
        %v671 = vsel %vm491, %v666, %v670
        %v673 = vshrl.u32 %v426, 16
        %v675 = vshll.u32 %v426, 16
        %v677 = vrot.slane %v675, 1
        %v678 = vor.u32 %v673, %v677
        %v680 = vshll.u32 %v490, 16
        %v682 = vrot.slane %v680, 1
        %v683 = vsel %vm491, %v678, %v682
        %vm700 = vcmask 1046528
        %v701 = vrot.slane %v411, 1
        %v702 = vrot.slane %v475, 1
        %v703 = vsel %vm700, %v701, %v702
        %v704 = vrot.slane %v412, 1
        %v705 = vrot.slane %v476, 1
        %v706 = vsel %vm700, %v704, %v705
        %v707 = vrot.slane %v413, 1
        %v708 = vrot.slane %v477, 1
        %v709 = vsel %vm700, %v707, %v708
        %v710 = vrot.slane %v414, 1
        %v711 = vrot.slane %v478, 1
        %v712 = vsel %vm700, %v710, %v711
        %v713 = vrot.slane %v415, 1
        %v714 = vrot.slane %v479, 1
        %v715 = vsel %vm700, %v713, %v714
        %v716 = vrot.slane %v416, 1
        %v717 = vrot.slane %v480, 1
        %v718 = vsel %vm700, %v716, %v717
        %v719 = vrot.slane %v417, 1
        %v720 = vrot.slane %v481, 1
        %v721 = vsel %vm700, %v719, %v720
        %v722 = vrot.slane %v418, 1
        %v723 = vrot.slane %v482, 1
        %v724 = vsel %vm700, %v722, %v723
        %v725 = vrot.slane %v419, 1
        %v726 = vrot.slane %v483, 1
        %v727 = vsel %vm700, %v725, %v726
        %v728 = vrot.slane %v420, 1
        %v729 = vrot.slane %v484, 1
        %v730 = vsel %vm700, %v728, %v729
        %v731 = vrot.slane %v421, 1
        %v732 = vrot.slane %v485, 1
        %v733 = vsel %vm700, %v731, %v732
        %v734 = vrot.slane %v422, 1
        %v735 = vrot.slane %v486, 1
        %v736 = vsel %vm700, %v734, %v735
        %v737 = vrot.slane %v423, 1
        %v738 = vrot.slane %v487, 1
        %v739 = vsel %vm700, %v737, %v738
        %v740 = vrot.slane %v424, 1
        %v741 = vrot.slane %v488, 1
        %v742 = vsel %vm700, %v740, %v741
        %v743 = vrot.slane %v425, 1
        %v744 = vrot.slane %v489, 1
        %v745 = vsel %vm700, %v743, %v744
        %v746 = vrot.slane %v426, 1
        %v747 = vrot.slane %v490, 1
        %v748 = vsel %vm700, %v746, %v747
        %v767 = vunpack.c.l.b16 %v341
        %v768 = vunpack.c.l.b16 %v342
        %v769 = vpack.c.b16 %v768, %v767
        %v772 = vunpack.c.l.b16 %v343
        %v773 = vpack.c.b16 %v772, %v772
        %v775 = vshrl.u32 %v769, 16
        %v777 = vshll.u32 %v769, 16
        %v779 = vrot.slane %v777, 1
        %v780 = vor.u32 %v775, %v779
        %v782 = vshll.u32 %v773, 16
        %v784 = vrot.slane %v782, 1
        %v785 = vsel %vm491, %v780, %v784
        %v787 = vrot.slane %v769, 1
        %v788 = vrot.slane %v773, 1
        %v789 = vsel %vm700, %v787, %v788
        %v793 = vunpack.c.l.b16 %v344
        %v794 = vunpack.c.l.b16 %v345
        %v795 = vpack.c.b16 %v794, %v793
        %v798 = vunpack.c.l.b16 %v346
        %v799 = vpack.c.b16 %v798, %v798
        %v801 = vshrl.u32 %v795, 16
        %v803 = vshll.u32 %v795, 16
        %v805 = vrot.slane %v803, 1
        %v806 = vor.u32 %v801, %v805
        %v808 = vshll.u32 %v799, 16
        %v810 = vrot.slane %v808, 1
        %v811 = vsel %vm491, %v806, %v810
        %v813 = vrot.slane %v795, 1
        %v814 = vrot.slane %v799, 1
        %v815 = vsel %vm700, %v813, %v814
        %v817 = vld [vmem:[%s1] sm:$0xf]
        %v818 = vld [vmem:[%s1 + $0x4] sm:$0xf]
        %v819 = vld [vmem:[%s1 + $0x8] sm:$0xf]
        %v820 = vld [vmem:[%s1 + $0xc] sm:$0xf]
        %v821 = vld [vmem:[%s1 + $0x10] sm:$0xf]
        %v822 = vld [vmem:[%s1 + $0x14] sm:$0xf]
        %v823 = vld [vmem:[%s1 + $0x18] sm:$0xf]
        %v824 = vld [vmem:[%s1 + $0x1c] sm:$0xf]
        %v825 = vld [vmem:[%s1 + $0x20] sm:$0xf]
        %v826 = vld [vmem:[%s1 + $0x24] sm:$0xf]
        %v827 = vld [vmem:[%s1 + $0x28] sm:$0xf]
        %v828 = vld [vmem:[%s1 + $0x2c] sm:$0xf]
        %v829 = vld [vmem:[%s1 + $0x30] sm:$0xf]
        %v830 = vld [vmem:[%s1 + $0x34] sm:$0xf]
        %v831 = vld [vmem:[%s1 + $0x38] sm:$0xf]
        %v832 = vld [vmem:[%s1 + $0x3c] sm:$0xf]
        %v833 = vld [vmem:[%s1 + $0x40] sm:$0xf]
        %v834 = vld [vmem:[%s1 + $0x44] sm:$0xf]
        %v835 = vld [vmem:[%s1 + $0x48] sm:$0xf]
        %v836 = vld [vmem:[%s1 + $0x4c] sm:$0xf]
        %v837 = vld [vmem:[%s1 + $0x50] sm:$0xf]
        %v838 = vld [vmem:[%s1 + $0x54] sm:$0xf]
        %v839 = vld [vmem:[%s1 + $0x58] sm:$0xf]
        %v840 = vld [vmem:[%s1 + $0x5c] sm:$0xf]
        %v841 = vld [vmem:[%s1 + $0x60] sm:$0xf]
        %v842 = vld [vmem:[%s1 + $0x64] sm:$0xf]
        %v843 = vld [vmem:[%s1 + $0x68] sm:$0xf]
        %v844 = vld [vmem:[%s1 + $0x6c] sm:$0xf]
        %v845 = vld [vmem:[%s1 + $0x70] sm:$0xf]
        %v846 = vld [vmem:[%s1 + $0x74] sm:$0xf]
        %v847 = vld [vmem:[%s1 + $0x78] sm:$0xf]
        %v848 = vld [vmem:[%s1 + $0x7c] sm:$0xf]
        %v849 = vld [vmem:[%s1 + $0x80] sm:$0xf]
        %v850 = vld [vmem:[%s1 + $0x84] sm:$0xf]
        %v851 = vld [vmem:[%s1 + $0x88] sm:$0xf]
        %v852 = vld [vmem:[%s1 + $0x8c] sm:$0xf]
        %v853 = vld [vmem:[%s1 + $0x90] sm:$0xf]
        %v854 = vld [vmem:[%s1 + $0x94] sm:$0xf]
        %v855 = vld [vmem:[%s1 + $0x98] sm:$0xf]
        %v856 = vld [vmem:[%s1 + $0x9c] sm:$0xf]
        %v857 = vld [vmem:[%s1 + $0xa0] sm:$0xf]
        %v858 = vld [vmem:[%s1 + $0xa4] sm:$0xf]
        %v859 = vld [vmem:[%s1 + $0xa8] sm:$0xf]
        %v860 = vld [vmem:[%s1 + $0xac] sm:$0xf]
        %v861 = vld [vmem:[%s1 + $0xb0] sm:$0xf]
        %v862 = vld [vmem:[%s1 + $0xb4] sm:$0xf]
        %v863 = vld [vmem:[%s1 + $0xb8] sm:$0xf]
        %v864 = vld [vmem:[%s1 + $0xbc] sm:$0xf]
        %v865 = vld [vmem:[%s1 + $0xc0] sm:$0xf]
        %v866 = vld [vmem:[%s1 + $0xc4] sm:$0xf]
        %v867 = vld [vmem:[%s1 + $0xc8] sm:$0xf]
        %v868 = vld [vmem:[%s1 + $0xcc] sm:$0xf]
        %v869 = vld [vmem:[%s1 + $0xd0] sm:$0xf]
        %v870 = vld [vmem:[%s1 + $0xd4] sm:$0xf]
        %v871 = vld [vmem:[%s1 + $0xd8] sm:$0xf]
        %v872 = vld [vmem:[%s1 + $0xdc] sm:$0xf]
        %v873 = vld [vmem:[%s1 + $0xe0] sm:$0xf]
        %v874 = vld [vmem:[%s1 + $0xe4] sm:$0xf]
        %v875 = vld [vmem:[%s1 + $0xe8] sm:$0xf]
        %v876 = vld [vmem:[%s1 + $0xec] sm:$0xf]
        %v877 = vld [vmem:[%s1 + $0xf0] sm:$0xf]
        %v878 = vld [vmem:[%s1 + $0xf4] sm:$0xf]
        %v879 = vld [vmem:[%s1 + $0xf8] sm:$0xf]
        %v880 = vld [vmem:[%s1 + $0xfc] sm:$0xf]
        %v881 = vld [vmem:[%s1 + $0x100] sm:$0xf]
        %v882 = vld [vmem:[%s1 + $0x104] sm:$0xf]
        %v883 = vld [vmem:[%s1 + $0x108] sm:$0xf]
        %v884 = vld [vmem:[%s1 + $0x10c] sm:$0xf]
        %v885 = vld [vmem:[%s1 + $0x110] sm:$0xf]
        %v886 = vld [vmem:[%s1 + $0x114] sm:$0xf]
        %v887 = vld [vmem:[%s1 + $0x118] sm:$0xf]
        %v888 = vld [vmem:[%s1 + $0x11c] sm:$0xf]
        %v889 = vld [vmem:[%s1 + $0x120] sm:$0xf]
        %v890 = vld [vmem:[%s1 + $0x124] sm:$0xf]
        %v891 = vld [vmem:[%s1 + $0x128] sm:$0xf]
        %v892 = vld [vmem:[%s1 + $0x12c] sm:$0xf]
        %v893 = vld [vmem:[%s1 + $0x130] sm:$0xf]
        %v894 = vld [vmem:[%s1 + $0x134] sm:$0xf]
        %v895 = vld [vmem:[%s1 + $0x138] sm:$0xf]
        %v896 = vld [vmem:[%s1 + $0x13c] sm:$0xf]
        %v897 = vld [vmem:[%s1 + $0x140] sm:$0xf]
        %v898 = vld [vmem:[%s1 + $0x144] sm:$0xf]
        %v899 = vld [vmem:[%s1 + $0x148] sm:$0xf]
        %v900 = vld [vmem:[%s1 + $0x14c] sm:$0xf]
        %v901 = vld [vmem:[%s1 + $0x150] sm:$0xf]
        %v902 = vld [vmem:[%s1 + $0x154] sm:$0xf]
        %v903 = vld [vmem:[%s1 + $0x158] sm:$0xf]
        %v904 = vld [vmem:[%s1 + $0x15c] sm:$0xf]
        %v905 = vld [vmem:[%s1 + $0x160] sm:$0xf]
        %v906 = vld [vmem:[%s1 + $0x164] sm:$0xf]
        %v907 = vld [vmem:[%s1 + $0x168] sm:$0xf]
        %v908 = vld [vmem:[%s1 + $0x16c] sm:$0xf]
        %v909 = vld [vmem:[%s1 + $0x170] sm:$0xf]
        %v910 = vld [vmem:[%s1 + $0x174] sm:$0xf]
        %v911 = vld [vmem:[%s1 + $0x178] sm:$0xf]
        %v912 = vld [vmem:[%s1 + $0x17c] sm:$0xf]
        %v913 = vld [vmem:[%s1 + $0x180] sm:$0xf]
        %v914 = vld [vmem:[%s1 + $0x184] sm:$0xf]
        %v915 = vld [vmem:[%s1 + $0x188] sm:$0xf]
        %v916 = vld [vmem:[%s1 + $0x18c] sm:$0xf]
        %v917 = vld [vmem:[%s1 + $0x190] sm:$0xf]
        %v918 = vld [vmem:[%s1 + $0x194] sm:$0xf]
        %v919 = vld [vmem:[%s1 + $0x198] sm:$0xf]
        %v920 = vld [vmem:[%s1 + $0x19c] sm:$0xf]
        %v921 = vld [vmem:[%s1 + $0x1a0] sm:$0xf]
        %v922 = vld [vmem:[%s1 + $0x1a4] sm:$0xf]
        %v923 = vld [vmem:[%s1 + $0x1a8] sm:$0xf]
        %v924 = vld [vmem:[%s1 + $0x1ac] sm:$0xf]
        %v925 = vld [vmem:[%s1 + $0x1b0] sm:$0xf]
        %v926 = vld [vmem:[%s1 + $0x1b4] sm:$0xf]
        %v927 = vld [vmem:[%s1 + $0x1b8] sm:$0xf]
        %v928 = vld [vmem:[%s1 + $0x1bc] sm:$0xf]
        %v929 = vld [vmem:[%s1 + $0x1c0] sm:$0xf]
        %v930 = vld [vmem:[%s1 + $0x1c4] sm:$0xf]
        %v931 = vld [vmem:[%s1 + $0x1c8] sm:$0xf]
        %v932 = vld [vmem:[%s1 + $0x1cc] sm:$0xf]
        %v933 = vld [vmem:[%s1 + $0x1d0] sm:$0xf]
        %v934 = vld [vmem:[%s1 + $0x1d4] sm:$0xf]
        %v935 = vld [vmem:[%s1 + $0x1d8] sm:$0xf]
        %v936 = vld [vmem:[%s1 + $0x1dc] sm:$0xf]
        %v937 = vld [vmem:[%s1 + $0x1e0] sm:$0xf]
        %v938 = vld [vmem:[%s1 + $0x1e4] sm:$0xf]
        %v939 = vld [vmem:[%s1 + $0x1e8] sm:$0xf]
        %v940 = vld [vmem:[%s1 + $0x1ec] sm:$0xf]
        %v941 = vld [vmem:[%s1 + $0x1f0] sm:$0xf]
        %v942 = vld [vmem:[%s1 + $0x1f4] sm:$0xf]
        %v943 = vld [vmem:[%s1 + $0x1f8] sm:$0xf]
        %v944 = vld [vmem:[%s1 + $0x1fc] sm:$0xf]
        %v945 = vld [vmem:[%s1 + $0x200] sm:$0xf]
        %v946 = vld [vmem:[%s1 + $0x204] sm:$0xf]
        %v947 = vld [vmem:[%s1 + $0x208] sm:$0xf]
        %v948 = vld [vmem:[%s1 + $0x20c] sm:$0xf]
        %v949 = vld [vmem:[%s1 + $0x210] sm:$0xf]
        %v950 = vld [vmem:[%s1 + $0x214] sm:$0xf]
        %v951 = vld [vmem:[%s1 + $0x218] sm:$0xf]
        %v952 = vld [vmem:[%s1 + $0x21c] sm:$0xf]
        %v953 = vld [vmem:[%s1 + $0x220] sm:$0xf]
        %v954 = vld [vmem:[%s1 + $0x224] sm:$0xf]
        %v955 = vld [vmem:[%s1 + $0x228] sm:$0xf]
        %v956 = vld [vmem:[%s1 + $0x22c] sm:$0xf]
        %v957 = vld [vmem:[%s1 + $0x230] sm:$0xf]
        %v958 = vld [vmem:[%s1 + $0x234] sm:$0xf]
        %v959 = vld [vmem:[%s1 + $0x238] sm:$0xf]
        %v960 = vld [vmem:[%s1 + $0x23c] sm:$0xf]
        %v1105 = vunpack.c.l.b16 %v817
        %v1106 = vunpack.c.l.b16 %v818
        %v1107 = vunpack.c.l.b16 %v819
        %v1108 = vunpack.c.l.b16 %v820
        %v1109 = vunpack.c.l.b16 %v821
        %v1110 = vunpack.c.l.b16 %v822
        %v1111 = vunpack.c.l.b16 %v823
        %v1112 = vunpack.c.l.b16 %v824
        %v1113 = vunpack.c.l.b16 %v825
        %v1114 = vunpack.c.l.b16 %v826
        %v1115 = vunpack.c.l.b16 %v827
        %v1116 = vunpack.c.l.b16 %v828
        %v1117 = vunpack.c.l.b16 %v829
        %v1118 = vunpack.c.l.b16 %v830
        %v1119 = vunpack.c.l.b16 %v831
        %v1120 = vunpack.c.l.b16 %v832
        %v1121 = vunpack.c.l.b16 %v833
        %v1122 = vunpack.c.l.b16 %v834
        %v1123 = vunpack.c.l.b16 %v835
        %v1124 = vunpack.c.l.b16 %v836
        %v1125 = vunpack.c.l.b16 %v837
        %v1126 = vunpack.c.l.b16 %v838
        %v1127 = vunpack.c.l.b16 %v839
        %v1128 = vunpack.c.l.b16 %v840
        %v1129 = vunpack.c.l.b16 %v841
        %v1130 = vunpack.c.l.b16 %v842
        %v1131 = vunpack.c.l.b16 %v843
        %v1132 = vunpack.c.l.b16 %v844
        %v1133 = vunpack.c.l.b16 %v845
        %v1134 = vunpack.c.l.b16 %v846
        %v1135 = vunpack.c.l.b16 %v847
        %v1136 = vunpack.c.l.b16 %v848
        %v1137 = vunpack.c.l.b16 %v849
        %v1138 = vunpack.c.l.b16 %v850
        %v1139 = vunpack.c.l.b16 %v851
        %v1140 = vunpack.c.l.b16 %v852
        %v1141 = vunpack.c.l.b16 %v853
        %v1142 = vunpack.c.l.b16 %v854
        %v1143 = vunpack.c.l.b16 %v855
        %v1144 = vunpack.c.l.b16 %v856
        %v1145 = vunpack.c.l.b16 %v857
        %v1146 = vunpack.c.l.b16 %v858
        %v1147 = vunpack.c.l.b16 %v859
        %v1148 = vunpack.c.l.b16 %v860
        %v1149 = vunpack.c.l.b16 %v861
        %v1150 = vunpack.c.l.b16 %v862
        %v1151 = vunpack.c.l.b16 %v863
        %v1152 = vunpack.c.l.b16 %v864
        %v1153 = vunpack.c.l.b16 %v865
        %v1154 = vunpack.c.l.b16 %v866
        %v1155 = vunpack.c.l.b16 %v867
        %v1156 = vunpack.c.l.b16 %v868
        %v1157 = vunpack.c.l.b16 %v869
        %v1158 = vunpack.c.l.b16 %v870
        %v1159 = vunpack.c.l.b16 %v871
        %v1160 = vunpack.c.l.b16 %v872
        %v1161 = vunpack.c.l.b16 %v873
        %v1162 = vunpack.c.l.b16 %v874
        %v1163 = vunpack.c.l.b16 %v875
        %v1164 = vunpack.c.l.b16 %v876
        %v1165 = vunpack.c.l.b16 %v877
        %v1166 = vunpack.c.l.b16 %v878
        %v1167 = vunpack.c.l.b16 %v879
        %v1168 = vunpack.c.l.b16 %v880
        %v1169 = vunpack.c.l.b16 %v881
        %v1170 = vunpack.c.l.b16 %v882
        %v1171 = vunpack.c.l.b16 %v883
        %v1172 = vunpack.c.l.b16 %v884
        %v1173 = vunpack.c.l.b16 %v885
        %v1174 = vunpack.c.l.b16 %v886
        %v1175 = vunpack.c.l.b16 %v887
        %v1176 = vunpack.c.l.b16 %v888
        %v1177 = vunpack.c.l.b16 %v889
        %v1178 = vunpack.c.l.b16 %v890
        %v1179 = vunpack.c.l.b16 %v891
        %v1180 = vunpack.c.l.b16 %v892
        %v1181 = vunpack.c.l.b16 %v893
        %v1182 = vunpack.c.l.b16 %v894
        %v1183 = vunpack.c.l.b16 %v895
        %v1184 = vunpack.c.l.b16 %v896
        %v1185 = vunpack.c.l.b16 %v897
        %v1186 = vunpack.c.l.b16 %v898
        %v1187 = vunpack.c.l.b16 %v899
        %v1188 = vunpack.c.l.b16 %v900
        %v1189 = vunpack.c.l.b16 %v901
        %v1190 = vunpack.c.l.b16 %v902
        %v1191 = vunpack.c.l.b16 %v903
        %v1192 = vunpack.c.l.b16 %v904
        %v1193 = vunpack.c.l.b16 %v905
        %v1194 = vunpack.c.l.b16 %v906
        %v1195 = vunpack.c.l.b16 %v907
        %v1196 = vunpack.c.l.b16 %v908
        %v1197 = vunpack.c.l.b16 %v909
        %v1198 = vunpack.c.l.b16 %v910
        %v1199 = vunpack.c.l.b16 %v911
        %v1200 = vunpack.c.l.b16 %v912
        %v1201 = vunpack.c.l.b16 %v913
        %v1202 = vunpack.c.l.b16 %v914
        %v1203 = vunpack.c.l.b16 %v915
        %v1204 = vunpack.c.l.b16 %v916
        %v1205 = vunpack.c.l.b16 %v917
        %v1206 = vunpack.c.l.b16 %v918
        %v1207 = vunpack.c.l.b16 %v919
        %v1208 = vunpack.c.l.b16 %v920
        %v1209 = vunpack.c.l.b16 %v921
        %v1210 = vunpack.c.l.b16 %v922
        %v1211 = vunpack.c.l.b16 %v923
        %v1212 = vunpack.c.l.b16 %v924
        %v1213 = vunpack.c.l.b16 %v925
        %v1214 = vunpack.c.l.b16 %v926
        %v1215 = vunpack.c.l.b16 %v927
        %v1216 = vunpack.c.l.b16 %v928
        %v1217 = vunpack.c.l.b16 %v929
        %v1218 = vunpack.c.l.b16 %v930
        %v1219 = vunpack.c.l.b16 %v931
        %v1220 = vunpack.c.l.b16 %v932
        %v1221 = vunpack.c.l.b16 %v933
        %v1222 = vunpack.c.l.b16 %v934
        %v1223 = vunpack.c.l.b16 %v935
        %v1224 = vunpack.c.l.b16 %v936
        %v1225 = vunpack.c.l.b16 %v937
        %v1226 = vunpack.c.l.b16 %v938
        %v1227 = vunpack.c.l.b16 %v939
        %v1228 = vunpack.c.l.b16 %v940
        %v1229 = vunpack.c.l.b16 %v941
        %v1230 = vunpack.c.l.b16 %v942
        %v1231 = vunpack.c.l.b16 %v943
        %v1232 = vunpack.c.l.b16 %v944
        %v1233 = vunpack.c.l.b16 %v945
        %v1234 = vunpack.c.l.b16 %v946
        %v1235 = vunpack.c.l.b16 %v947
        %v1236 = vunpack.c.l.b16 %v948
        %v1237 = vunpack.c.l.b16 %v949
        %v1238 = vunpack.c.l.b16 %v950
        %v1239 = vunpack.c.l.b16 %v951
        %v1240 = vunpack.c.l.b16 %v952
        %v1241 = vunpack.c.l.b16 %v953
        %v1242 = vunpack.c.l.b16 %v954
        %v1243 = vunpack.c.l.b16 %v955
        %v1244 = vunpack.c.l.b16 %v956
        %v1245 = vunpack.c.l.b16 %v957
        %v1246 = vunpack.c.l.b16 %v958
        %v1247 = vunpack.c.l.b16 %v959
        %v1248 = vunpack.c.l.b16 %v960
        %v1249 = vpack.c.b16 %v1106, %v1105
        %v1250 = vpack.c.b16 %v1108, %v1107
        %v1251 = vpack.c.b16 %v1110, %v1109
        %v1252 = vpack.c.b16 %v1112, %v1111
        %v1253 = vpack.c.b16 %v1114, %v1113
        %v1254 = vpack.c.b16 %v1116, %v1115
        %v1255 = vpack.c.b16 %v1118, %v1117
        %v1256 = vpack.c.b16 %v1120, %v1119
        %v1257 = vpack.c.b16 %v1122, %v1121
        %v1258 = vpack.c.b16 %v1124, %v1123
        %v1259 = vpack.c.b16 %v1126, %v1125
        %v1260 = vpack.c.b16 %v1128, %v1127
        %v1261 = vpack.c.b16 %v1130, %v1129
        %v1262 = vpack.c.b16 %v1132, %v1131
        %v1263 = vpack.c.b16 %v1134, %v1133
        %v1264 = vpack.c.b16 %v1136, %v1135
        %v1265 = vpack.c.b16 %v1138, %v1137
        %v1266 = vpack.c.b16 %v1140, %v1139
        %v1267 = vpack.c.b16 %v1142, %v1141
        %v1268 = vpack.c.b16 %v1144, %v1143
        %v1269 = vpack.c.b16 %v1146, %v1145
        %v1270 = vpack.c.b16 %v1148, %v1147
        %v1271 = vpack.c.b16 %v1150, %v1149
        %v1272 = vpack.c.b16 %v1152, %v1151
        %v1273 = vpack.c.b16 %v1154, %v1153
        %v1274 = vpack.c.b16 %v1156, %v1155
        %v1275 = vpack.c.b16 %v1158, %v1157
        %v1276 = vpack.c.b16 %v1160, %v1159
        %v1277 = vpack.c.b16 %v1162, %v1161
        %v1278 = vpack.c.b16 %v1164, %v1163
        %v1279 = vpack.c.b16 %v1166, %v1165
        %v1280 = vpack.c.b16 %v1168, %v1167
        %v1281 = vpack.c.b16 %v1170, %v1169
        %v1282 = vpack.c.b16 %v1172, %v1171
        %v1283 = vpack.c.b16 %v1174, %v1173
        %v1284 = vpack.c.b16 %v1176, %v1175
        %v1285 = vpack.c.b16 %v1178, %v1177
        %v1286 = vpack.c.b16 %v1180, %v1179
        %v1287 = vpack.c.b16 %v1182, %v1181
        %v1288 = vpack.c.b16 %v1184, %v1183
        %v1289 = vpack.c.b16 %v1186, %v1185
        %v1290 = vpack.c.b16 %v1188, %v1187
        %v1291 = vpack.c.b16 %v1190, %v1189
        %v1292 = vpack.c.b16 %v1192, %v1191
        %v1293 = vpack.c.b16 %v1194, %v1193
        %v1294 = vpack.c.b16 %v1196, %v1195
        %v1295 = vpack.c.b16 %v1198, %v1197
        %v1296 = vpack.c.b16 %v1200, %v1199
        %v1297 = vpack.c.b16 %v1202, %v1201
        %v1298 = vpack.c.b16 %v1204, %v1203
        %v1299 = vpack.c.b16 %v1206, %v1205
        %v1300 = vpack.c.b16 %v1208, %v1207
        %v1301 = vpack.c.b16 %v1210, %v1209
        %v1302 = vpack.c.b16 %v1212, %v1211
        %v1303 = vpack.c.b16 %v1214, %v1213
        %v1304 = vpack.c.b16 %v1216, %v1215
        %v1305 = vpack.c.b16 %v1218, %v1217
        %v1306 = vpack.c.b16 %v1220, %v1219
        %v1307 = vpack.c.b16 %v1222, %v1221
        %v1308 = vpack.c.b16 %v1224, %v1223
        %v1309 = vpack.c.b16 %v1226, %v1225
        %v1310 = vpack.c.b16 %v1228, %v1227
        %v1311 = vpack.c.b16 %v1230, %v1229
        %v1312 = vpack.c.b16 %v1232, %v1231
        %v1313 = vpack.c.b16 %v1234, %v1233
        %v1314 = vpack.c.b16 %v1236, %v1235
        %v1315 = vpack.c.b16 %v1238, %v1237
        %v1316 = vpack.c.b16 %v1240, %v1239
        %v1317 = vpack.c.b16 %v1242, %v1241
        %v1318 = vpack.c.b16 %v1244, %v1243
        %v1319 = vpack.c.b16 %v1246, %v1245
        %v1320 = vpack.c.b16 %v1248, %v1247
        %1393 = vmatprep.subr.bf16.mxu0 0
        %1394 = vmatpush1.bf16.msra.mxu0 %v1256
        %1395 = vmatprep.subr.bf16.mxu0 0
        %1396 = vmatpush1.bf16.msra.mxu0 %v1255
        %1397 = vmatprep.subr.bf16.mxu0 0
        %1398 = vmatpush1.bf16.msra.mxu0 %v1254
        %1399 = vmatprep.subr.bf16.mxu0 0
        %1400 = vmatpush1.bf16.msra.mxu0 %v1253
        %1401 = vmatprep.subr.bf16.mxu0 0
        %1402 = vmatpush1.bf16.msra.mxu0 %v1252
        %1403 = vmatprep.subr.bf16.mxu0 0
        %1404 = vmatpush1.bf16.msra.mxu0 %v1251
        %1405 = vmatprep.subr.bf16.mxu0 0
        %1406 = vmatpush1.bf16.msra.mxu0 %v1250
        %1407 = vmatprep.subr.bf16.mxu0 0
        %1408 = vmatpush1.bf16.msra.mxu0 %v1249
        %1409 = vmatprep.subr.bf16.mxu0 0
        %1410 = vmatpush2.bf16.msra.mxu0 %v1264
        %1411 = vmatprep.subr.bf16.mxu0 0
        %1412 = vmatpush2.bf16.msra.mxu0 %v1263
        %1413 = vmatprep.subr.bf16.mxu0 0
        %1414 = vmatpush2.bf16.msra.mxu0 %v1262
        %1415 = vmatprep.subr.bf16.mxu0 0
        %1416 = vmatpush2.bf16.msra.mxu0 %v1261
        %1417 = vmatprep.subr.bf16.mxu0 0
        %1418 = vmatpush2.bf16.msra.mxu0 %v1260
        %1419 = vmatprep.subr.bf16.mxu0 0
        %1420 = vmatpush2.bf16.msra.mxu0 %v1259
        %1421 = vmatprep.subr.bf16.mxu0 0
        %1422 = vmatpush2.bf16.msra.mxu0 %v1258
        %1423 = vmatprep.subr.bf16.mxu0 0
        %1424 = vmatpush2.bf16.msra.mxu0 %v1257
        %1425 = vmatprep.mubr.bf16.mxu0 %v503
        %1426 = vmatmul.mubr.bf16.gmra.mxu0 %v411
        %v1427 = vpop.f32.mrf.mxu0
        %v1428 = vadd.f32 0.0, %v1427
        %v1429 = vpop.f32.mrf.mxu0
        %v1430 = vpop.f32.mrf.mxu0
        %v1431 = vadd.f32 0.0, %v1430
        %v1432 = vpop.f32.mrf.mxu0
        %1433 = vmatprep.mubr.bf16.mxu0 %v515
        %1434 = vmatmul.mubr.bf16.gmra.mxu0 %v412
        %v1435 = vpop.f32.mrf.mxu0
        %v1436 = vadd.f32 0.0, %v1435
        %v1437 = vpop.f32.mrf.mxu0
        %v1438 = vpop.f32.mrf.mxu0
        %v1439 = vadd.f32 0.0, %v1438
        %v1440 = vpop.f32.mrf.mxu0
        %1441 = vmatprep.mubr.bf16.mxu0 %v527
        %1442 = vmatmul.mubr.bf16.gmra.mxu0 %v413
        %v1443 = vpop.f32.mrf.mxu0
        %v1444 = vadd.f32 0.0, %v1443
        %v1445 = vpop.f32.mrf.mxu0
        %v1446 = vpop.f32.mrf.mxu0
        %v1447 = vadd.f32 0.0, %v1446
        %v1448 = vpop.f32.mrf.mxu0
        %1449 = vmatprep.mubr.bf16.mxu0 %v539
        %1450 = vmatmul.mubr.bf16.gmra.mxu0 %v414
        %v1451 = vpop.f32.mrf.mxu0
        %v1452 = vadd.f32 0.0, %v1451
        %v1453 = vpop.f32.mrf.mxu0
        %v1454 = vpop.f32.mrf.mxu0
        %v1455 = vadd.f32 0.0, %v1454
        %v1456 = vpop.f32.mrf.mxu0
        %1457 = vmatprep.mubr.bf16.mxu0 %v551
        %1458 = vmatmul.mubr.bf16.gmra.mxu0 %v415
        %v1459 = vpop.f32.mrf.mxu0
        %v1460 = vadd.f32 0.0, %v1459
        %v1461 = vpop.f32.mrf.mxu0
        %v1462 = vpop.f32.mrf.mxu0
        %v1463 = vadd.f32 0.0, %v1462
        %v1464 = vpop.f32.mrf.mxu0
        %1465 = vmatprep.mubr.bf16.mxu0 %v563
        %1466 = vmatmul.mubr.bf16.gmra.mxu0 %v416
        %v1467 = vpop.f32.mrf.mxu0
        %v1468 = vadd.f32 0.0, %v1467
        %v1469 = vpop.f32.mrf.mxu0
        %v1470 = vpop.f32.mrf.mxu0
        %v1471 = vadd.f32 0.0, %v1470
        %v1472 = vpop.f32.mrf.mxu0
        %1473 = vmatprep.mubr.bf16.mxu0 %v575
        %1474 = vmatmul.mubr.bf16.gmra.mxu0 %v417
        %v1475 = vpop.f32.mrf.mxu0
        %v1476 = vadd.f32 0.0, %v1475
        %v1477 = vpop.f32.mrf.mxu0
        %v1478 = vpop.f32.mrf.mxu0
        %v1479 = vadd.f32 0.0, %v1478
        %v1480 = vpop.f32.mrf.mxu0
        %1481 = vmatprep.mubr.bf16.mxu0 %v587
        %1482 = vmatmul.mubr.bf16.gmra.mxu0 %v418
        %v1483 = vpop.f32.mrf.mxu0
        %v1484 = vadd.f32 0.0, %v1483
        %v1485 = vpop.f32.mrf.mxu0
        %v1486 = vpop.f32.mrf.mxu0
        %v1487 = vadd.f32 0.0, %v1486
        %v1488 = vpop.f32.mrf.mxu0
        %1489 = vmatprep.mubr.bf16.mxu0 %v599
        %1490 = vmatmul.mubr.bf16.gmra.mxu0 %v419
        %v1491 = vpop.f32.mrf.mxu0
        %v1492 = vadd.f32 0.0, %v1491
        %v1493 = vpop.f32.mrf.mxu0
        %v1494 = vpop.f32.mrf.mxu0
        %v1495 = vadd.f32 0.0, %v1494
        %v1496 = vpop.f32.mrf.mxu0
        %1497 = vmatprep.mubr.bf16.mxu0 %v611
        %1498 = vmatmul.mubr.bf16.gmra.mxu0 %v420
        %v1499 = vpop.f32.mrf.mxu0
        %v1500 = vadd.f32 0.0, %v1499
        %v1501 = vpop.f32.mrf.mxu0
        %v1502 = vpop.f32.mrf.mxu0
        %v1503 = vadd.f32 0.0, %v1502
        %v1504 = vpop.f32.mrf.mxu0
        %1505 = vmatprep.mubr.bf16.mxu0 %v623
        %1506 = vmatmul.mubr.bf16.gmra.mxu0 %v421
        %v1507 = vpop.f32.mrf.mxu0
        %v1508 = vadd.f32 0.0, %v1507
        %v1509 = vpop.f32.mrf.mxu0
        %v1510 = vpop.f32.mrf.mxu0
        %v1511 = vadd.f32 0.0, %v1510
        %v1512 = vpop.f32.mrf.mxu0
        %1513 = vmatprep.mubr.bf16.mxu0 %v635
        %1514 = vmatmul.mubr.bf16.gmra.mxu0 %v422
        %v1515 = vpop.f32.mrf.mxu0
        %v1516 = vadd.f32 0.0, %v1515
        %v1517 = vpop.f32.mrf.mxu0
        %v1518 = vpop.f32.mrf.mxu0
        %v1519 = vadd.f32 0.0, %v1518
        %v1520 = vpop.f32.mrf.mxu0
        %1521 = vmatprep.mubr.bf16.mxu0 %v647
        %1522 = vmatmul.mubr.bf16.gmra.mxu0 %v423
        %v1523 = vpop.f32.mrf.mxu0
        %v1524 = vadd.f32 0.0, %v1523
        %v1525 = vpop.f32.mrf.mxu0
        %v1526 = vpop.f32.mrf.mxu0
        %v1527 = vadd.f32 0.0, %v1526
        %v1528 = vpop.f32.mrf.mxu0
        %1529 = vmatprep.mubr.bf16.mxu0 %v659
        %1530 = vmatmul.mubr.bf16.gmra.mxu0 %v424
        %v1531 = vpop.f32.mrf.mxu0
        %v1532 = vadd.f32 0.0, %v1531
        %v1533 = vpop.f32.mrf.mxu0
        %v1534 = vpop.f32.mrf.mxu0
        %v1535 = vadd.f32 0.0, %v1534
        %v1536 = vpop.f32.mrf.mxu0
        %1537 = vmatprep.mubr.bf16.mxu0 %v671
        %1538 = vmatmul.mubr.bf16.gmra.mxu0 %v425
        %v1539 = vpop.f32.mrf.mxu0
        %v1540 = vadd.f32 0.0, %v1539
        %v1541 = vpop.f32.mrf.mxu0
        %v1542 = vpop.f32.mrf.mxu0
        %v1543 = vadd.f32 0.0, %v1542
        %v1544 = vpop.f32.mrf.mxu0
        %1545 = vmatprep.mubr.bf16.mxu0 %v683
        %1546 = vmatmul.mubr.bf16.gmra.mxu0 %v426
        %v1547 = vpop.f32.mrf.mxu0
        %v1548 = vadd.f32 0.0, %v1547
        %v1549 = vpop.f32.mrf.mxu0
        %v1550 = vpop.f32.mrf.mxu0
        %v1551 = vadd.f32 0.0, %v1550
        %v1552 = vpop.f32.mrf.mxu0
        %1553 = vdwg.mxu0
        %1554 = vmatprep.subr.bf16.mxu0 0
        %1555 = vmatpush1.bf16.msra.mxu0 %v1272
        %1556 = vmatprep.subr.bf16.mxu0 0
        %1557 = vmatpush1.bf16.msra.mxu0 %v1271
        %1558 = vmatprep.subr.bf16.mxu0 0
        %1559 = vmatpush1.bf16.msra.mxu0 %v1270
        %1560 = vmatprep.subr.bf16.mxu0 0
        %1561 = vmatpush1.bf16.msra.mxu0 %v1269
        %1562 = vmatprep.subr.bf16.mxu0 0
        %1563 = vmatpush1.bf16.msra.mxu0 %v1268
        %1564 = vmatprep.subr.bf16.mxu0 0
        %1565 = vmatpush1.bf16.msra.mxu0 %v1267
        %1566 = vmatprep.subr.bf16.mxu0 0
        %1567 = vmatpush1.bf16.msra.mxu0 %v1266
        %1568 = vmatprep.subr.bf16.mxu0 0
        %1569 = vmatpush1.bf16.msra.mxu0 %v1265
        %1570 = vmatprep.subr.bf16.mxu0 0
        %1571 = vmatpush2.bf16.msra.mxu0 %v1280
        %1572 = vmatprep.subr.bf16.mxu0 0
        %1573 = vmatpush2.bf16.msra.mxu0 %v1279
        %1574 = vmatprep.subr.bf16.mxu0 0
        %1575 = vmatpush2.bf16.msra.mxu0 %v1278
        %1576 = vmatprep.subr.bf16.mxu0 0
        %1577 = vmatpush2.bf16.msra.mxu0 %v1277
        %1578 = vmatprep.subr.bf16.mxu0 0
        %1579 = vmatpush2.bf16.msra.mxu0 %v1276
        %1580 = vmatprep.subr.bf16.mxu0 0
        %1581 = vmatpush2.bf16.msra.mxu0 %v1275
        %1582 = vmatprep.subr.bf16.mxu0 0
        %1583 = vmatpush2.bf16.msra.mxu0 %v1274
        %1584 = vmatprep.subr.bf16.mxu0 0
        %1585 = vmatpush2.bf16.msra.mxu0 %v1273
        %1586 = vmatprep.mubr.bf16.mxu0 %v412
        %1587 = vmatmul.mubr.bf16.gmra.mxu0 %v703
        %v1588 = vpop.f32.mrf.mxu0
        %v1589 = vadd.f32 %v1428, %v1588
        %v1590 = vpop.f32.mrf.mxu0
        %v1591 = vpop.f32.mrf.mxu0
        %v1592 = vadd.f32 %v1431, %v1591
        %v1593 = vpop.f32.mrf.mxu0
        %1594 = vmatprep.mubr.bf16.mxu0 %v413
        %1595 = vmatmul.mubr.bf16.gmra.mxu0 %v706
        %v1596 = vpop.f32.mrf.mxu0
        %v1597 = vadd.f32 %v1436, %v1596
        %v1598 = vpop.f32.mrf.mxu0
        %v1599 = vpop.f32.mrf.mxu0
        %v1600 = vadd.f32 %v1439, %v1599
        %v1601 = vpop.f32.mrf.mxu0
        %1602 = vmatprep.mubr.bf16.mxu0 %v414
        %1603 = vmatmul.mubr.bf16.gmra.mxu0 %v709
        %v1604 = vpop.f32.mrf.mxu0
        %v1605 = vadd.f32 %v1444, %v1604
        %v1606 = vpop.f32.mrf.mxu0
        %v1607 = vpop.f32.mrf.mxu0
        %v1608 = vadd.f32 %v1447, %v1607
        %v1609 = vpop.f32.mrf.mxu0
        %1610 = vmatprep.mubr.bf16.mxu0 %v415
        %1611 = vmatmul.mubr.bf16.gmra.mxu0 %v712
        %v1612 = vpop.f32.mrf.mxu0
        %v1613 = vadd.f32 %v1452, %v1612
        %v1614 = vpop.f32.mrf.mxu0
        %v1615 = vpop.f32.mrf.mxu0
        %v1616 = vadd.f32 %v1455, %v1615
        %v1617 = vpop.f32.mrf.mxu0
        %1618 = vmatprep.mubr.bf16.mxu0 %v416
        %1619 = vmatmul.mubr.bf16.gmra.mxu0 %v715
        %v1620 = vpop.f32.mrf.mxu0
        %v1621 = vadd.f32 %v1460, %v1620
        %v1622 = vpop.f32.mrf.mxu0
        %v1623 = vpop.f32.mrf.mxu0
        %v1624 = vadd.f32 %v1463, %v1623
        %v1625 = vpop.f32.mrf.mxu0
        %1626 = vmatprep.mubr.bf16.mxu0 %v417
        %1627 = vmatmul.mubr.bf16.gmra.mxu0 %v718
        %v1628 = vpop.f32.mrf.mxu0
        %v1629 = vadd.f32 %v1468, %v1628
        %v1630 = vpop.f32.mrf.mxu0
        %v1631 = vpop.f32.mrf.mxu0
        %v1632 = vadd.f32 %v1471, %v1631
        %v1633 = vpop.f32.mrf.mxu0
        %1634 = vmatprep.mubr.bf16.mxu0 %v418
        %1635 = vmatmul.mubr.bf16.gmra.mxu0 %v721
        %v1636 = vpop.f32.mrf.mxu0
        %v1637 = vadd.f32 %v1476, %v1636
        %v1638 = vpop.f32.mrf.mxu0
        %v1639 = vpop.f32.mrf.mxu0
        %v1640 = vadd.f32 %v1479, %v1639
        %v1641 = vpop.f32.mrf.mxu0
        %1642 = vmatprep.mubr.bf16.mxu0 %v419
        %1643 = vmatmul.mubr.bf16.gmra.mxu0 %v724
        %v1644 = vpop.f32.mrf.mxu0
        %v1645 = vadd.f32 %v1484, %v1644
        %v1646 = vpop.f32.mrf.mxu0
        %v1647 = vpop.f32.mrf.mxu0
        %v1648 = vadd.f32 %v1487, %v1647
        %v1649 = vpop.f32.mrf.mxu0
        %1650 = vmatprep.mubr.bf16.mxu0 %v420
        %1651 = vmatmul.mubr.bf16.gmra.mxu0 %v727
        %v1652 = vpop.f32.mrf.mxu0
        %v1653 = vadd.f32 %v1492, %v1652
        %v1654 = vpop.f32.mrf.mxu0
        %v1655 = vpop.f32.mrf.mxu0
        %v1656 = vadd.f32 %v1495, %v1655
        %v1657 = vpop.f32.mrf.mxu0
        %1658 = vmatprep.mubr.bf16.mxu0 %v421
        %1659 = vmatmul.mubr.bf16.gmra.mxu0 %v730
        %v1660 = vpop.f32.mrf.mxu0
        %v1661 = vadd.f32 %v1500, %v1660
        %v1662 = vpop.f32.mrf.mxu0
        %v1663 = vpop.f32.mrf.mxu0
        %v1664 = vadd.f32 %v1503, %v1663
        %v1665 = vpop.f32.mrf.mxu0
        %1666 = vmatprep.mubr.bf16.mxu0 %v422
        %1667 = vmatmul.mubr.bf16.gmra.mxu0 %v733
        %v1668 = vpop.f32.mrf.mxu0
        %v1669 = vadd.f32 %v1508, %v1668
        %v1670 = vpop.f32.mrf.mxu0
        %v1671 = vpop.f32.mrf.mxu0
        %v1672 = vadd.f32 %v1511, %v1671
        %v1673 = vpop.f32.mrf.mxu0
        %1674 = vmatprep.mubr.bf16.mxu0 %v423
        %1675 = vmatmul.mubr.bf16.gmra.mxu0 %v736
        %v1676 = vpop.f32.mrf.mxu0
        %v1677 = vadd.f32 %v1516, %v1676
        %v1678 = vpop.f32.mrf.mxu0
        %v1679 = vpop.f32.mrf.mxu0
        %v1680 = vadd.f32 %v1519, %v1679
        %v1681 = vpop.f32.mrf.mxu0
        %1682 = vmatprep.mubr.bf16.mxu0 %v424
        %1683 = vmatmul.mubr.bf16.gmra.mxu0 %v739
        %v1684 = vpop.f32.mrf.mxu0
        %v1685 = vadd.f32 %v1524, %v1684
        %v1686 = vpop.f32.mrf.mxu0
        %v1687 = vpop.f32.mrf.mxu0
        %v1688 = vadd.f32 %v1527, %v1687
        %v1689 = vpop.f32.mrf.mxu0
        %1690 = vmatprep.mubr.bf16.mxu0 %v425
        %1691 = vmatmul.mubr.bf16.gmra.mxu0 %v742
        %v1692 = vpop.f32.mrf.mxu0
        %v1693 = vadd.f32 %v1532, %v1692
        %v1694 = vpop.f32.mrf.mxu0
        %v1695 = vpop.f32.mrf.mxu0
        %v1696 = vadd.f32 %v1535, %v1695
        %v1697 = vpop.f32.mrf.mxu0
        %1698 = vmatprep.mubr.bf16.mxu0 %v426
        %1699 = vmatmul.mubr.bf16.gmra.mxu0 %v745
        %v1700 = vpop.f32.mrf.mxu0
        %v1701 = vadd.f32 %v1540, %v1700
        %v1702 = vpop.f32.mrf.mxu0
        %v1703 = vpop.f32.mrf.mxu0
        %v1704 = vadd.f32 %v1543, %v1703
        %v1705 = vpop.f32.mrf.mxu0
        %1706 = vmatprep.mubr.bf16.mxu0 %v769
        %1707 = vmatmul.mubr.bf16.gmra.mxu0 %v748
        %v1708 = vpop.f32.mrf.mxu0
        %v1709 = vadd.f32 %v1548, %v1708
        %v1710 = vpop.f32.mrf.mxu0
        %v1711 = vpop.f32.mrf.mxu0
        %v1712 = vadd.f32 %v1551, %v1711
        %v1713 = vpop.f32.mrf.mxu0
        %1714 = vdwg.mxu0
        %1715 = vmatprep.subr.bf16.mxu0 0
        %1716 = vmatpush1.bf16.msra.mxu0 %v1288
        %1717 = vmatprep.subr.bf16.mxu0 0
        %1718 = vmatpush1.bf16.msra.mxu0 %v1287
        %1719 = vmatprep.subr.bf16.mxu0 0
        %1720 = vmatpush1.bf16.msra.mxu0 %v1286
        %1721 = vmatprep.subr.bf16.mxu0 0
        %1722 = vmatpush1.bf16.msra.mxu0 %v1285
        %1723 = vmatprep.subr.bf16.mxu0 0
        %1724 = vmatpush1.bf16.msra.mxu0 %v1284
        %1725 = vmatprep.subr.bf16.mxu0 0
        %1726 = vmatpush1.bf16.msra.mxu0 %v1283
        %1727 = vmatprep.subr.bf16.mxu0 0
        %1728 = vmatpush1.bf16.msra.mxu0 %v1282
        %1729 = vmatprep.subr.bf16.mxu0 0
        %1730 = vmatpush1.bf16.msra.mxu0 %v1281
        %1731 = vmatprep.subr.bf16.mxu0 0
        %1732 = vmatpush2.bf16.msra.mxu0 %v1296
        %1733 = vmatprep.subr.bf16.mxu0 0
        %1734 = vmatpush2.bf16.msra.mxu0 %v1295
        %1735 = vmatprep.subr.bf16.mxu0 0
        %1736 = vmatpush2.bf16.msra.mxu0 %v1294
        %1737 = vmatprep.subr.bf16.mxu0 0
        %1738 = vmatpush2.bf16.msra.mxu0 %v1293
        %1739 = vmatprep.subr.bf16.mxu0 0
        %1740 = vmatpush2.bf16.msra.mxu0 %v1292
        %1741 = vmatprep.subr.bf16.mxu0 0
        %1742 = vmatpush2.bf16.msra.mxu0 %v1291
        %1743 = vmatprep.subr.bf16.mxu0 0
        %1744 = vmatpush2.bf16.msra.mxu0 %v1290
        %1745 = vmatprep.subr.bf16.mxu0 0
        %1746 = vmatpush2.bf16.msra.mxu0 %v1289
        %1747 = vmatprep.mubr.bf16.mxu0 %v706
        %1748 = vmatmul.mubr.bf16.gmra.mxu0 %v515
        %v1749 = vpop.f32.mrf.mxu0
        %v1750 = vadd.f32 %v1589, %v1749
        %v1751 = vpop.f32.mrf.mxu0
        %v1752 = vpop.f32.mrf.mxu0
        %v1753 = vadd.f32 %v1592, %v1752
        %v1754 = vpop.f32.mrf.mxu0
        %1755 = vmatprep.mubr.bf16.mxu0 %v709
        %1756 = vmatmul.mubr.bf16.gmra.mxu0 %v527
        %v1757 = vpop.f32.mrf.mxu0
        %v1758 = vadd.f32 %v1597, %v1757
        %v1759 = vpop.f32.mrf.mxu0
        %v1760 = vpop.f32.mrf.mxu0
        %v1761 = vadd.f32 %v1600, %v1760
        %v1762 = vpop.f32.mrf.mxu0
        %1763 = vmatprep.mubr.bf16.mxu0 %v712
        %1764 = vmatmul.mubr.bf16.gmra.mxu0 %v539
        %v1765 = vpop.f32.mrf.mxu0
        %v1766 = vadd.f32 %v1605, %v1765
        %v1767 = vpop.f32.mrf.mxu0
        %v1768 = vpop.f32.mrf.mxu0
        %v1769 = vadd.f32 %v1608, %v1768
        %v1770 = vpop.f32.mrf.mxu0
        %1771 = vmatprep.mubr.bf16.mxu0 %v715
        %1772 = vmatmul.mubr.bf16.gmra.mxu0 %v551
        %v1773 = vpop.f32.mrf.mxu0
        %v1774 = vadd.f32 %v1613, %v1773
        %v1775 = vpop.f32.mrf.mxu0
        %v1776 = vpop.f32.mrf.mxu0
        %v1777 = vadd.f32 %v1616, %v1776
        %v1778 = vpop.f32.mrf.mxu0
        %1779 = vmatprep.mubr.bf16.mxu0 %v718
        %1780 = vmatmul.mubr.bf16.gmra.mxu0 %v563
        %v1781 = vpop.f32.mrf.mxu0
        %v1782 = vadd.f32 %v1621, %v1781
        %v1783 = vpop.f32.mrf.mxu0
        %v1784 = vpop.f32.mrf.mxu0
        %v1785 = vadd.f32 %v1624, %v1784
        %v1786 = vpop.f32.mrf.mxu0
        %1787 = vmatprep.mubr.bf16.mxu0 %v721
        %1788 = vmatmul.mubr.bf16.gmra.mxu0 %v575
        %v1789 = vpop.f32.mrf.mxu0
        %v1790 = vadd.f32 %v1629, %v1789
        %v1791 = vpop.f32.mrf.mxu0
        %v1792 = vpop.f32.mrf.mxu0
        %v1793 = vadd.f32 %v1632, %v1792
        %v1794 = vpop.f32.mrf.mxu0
        %1795 = vmatprep.mubr.bf16.mxu0 %v724
        %1796 = vmatmul.mubr.bf16.gmra.mxu0 %v587
        %v1797 = vpop.f32.mrf.mxu0
        %v1798 = vadd.f32 %v1637, %v1797
        %v1799 = vpop.f32.mrf.mxu0
        %v1800 = vpop.f32.mrf.mxu0
        %v1801 = vadd.f32 %v1640, %v1800
        %v1802 = vpop.f32.mrf.mxu0
        %1803 = vmatprep.mubr.bf16.mxu0 %v727
        %1804 = vmatmul.mubr.bf16.gmra.mxu0 %v599
        %v1805 = vpop.f32.mrf.mxu0
        %v1806 = vadd.f32 %v1645, %v1805
        %v1807 = vpop.f32.mrf.mxu0
        %v1808 = vpop.f32.mrf.mxu0
        %v1809 = vadd.f32 %v1648, %v1808
        %v1810 = vpop.f32.mrf.mxu0
        %1811 = vmatprep.mubr.bf16.mxu0 %v730
        %1812 = vmatmul.mubr.bf16.gmra.mxu0 %v611
        %v1813 = vpop.f32.mrf.mxu0
        %v1814 = vadd.f32 %v1653, %v1813
        %v1815 = vpop.f32.mrf.mxu0
        %v1816 = vpop.f32.mrf.mxu0
        %v1817 = vadd.f32 %v1656, %v1816
        %v1818 = vpop.f32.mrf.mxu0
        %1819 = vmatprep.mubr.bf16.mxu0 %v733
        %1820 = vmatmul.mubr.bf16.gmra.mxu0 %v623
        %v1821 = vpop.f32.mrf.mxu0
        %v1822 = vadd.f32 %v1661, %v1821
        %v1823 = vpop.f32.mrf.mxu0
        %v1824 = vpop.f32.mrf.mxu0
        %v1825 = vadd.f32 %v1664, %v1824
        %v1826 = vpop.f32.mrf.mxu0
        %1827 = vmatprep.mubr.bf16.mxu0 %v736
        %1828 = vmatmul.mubr.bf16.gmra.mxu0 %v635
        %v1829 = vpop.f32.mrf.mxu0
        %v1830 = vadd.f32 %v1669, %v1829
        %v1831 = vpop.f32.mrf.mxu0
        %v1832 = vpop.f32.mrf.mxu0
        %v1833 = vadd.f32 %v1672, %v1832
        %v1834 = vpop.f32.mrf.mxu0
        %1835 = vmatprep.mubr.bf16.mxu0 %v739
        %1836 = vmatmul.mubr.bf16.gmra.mxu0 %v647
        %v1837 = vpop.f32.mrf.mxu0
        %v1838 = vadd.f32 %v1677, %v1837
        %v1839 = vpop.f32.mrf.mxu0
        %v1840 = vpop.f32.mrf.mxu0
        %v1841 = vadd.f32 %v1680, %v1840
        %v1842 = vpop.f32.mrf.mxu0
        %1843 = vmatprep.mubr.bf16.mxu0 %v742
        %1844 = vmatmul.mubr.bf16.gmra.mxu0 %v659
        %v1845 = vpop.f32.mrf.mxu0
        %v1846 = vadd.f32 %v1685, %v1845
        %v1847 = vpop.f32.mrf.mxu0
        %v1848 = vpop.f32.mrf.mxu0
        %v1849 = vadd.f32 %v1688, %v1848
        %v1850 = vpop.f32.mrf.mxu0
        %1851 = vmatprep.mubr.bf16.mxu0 %v745
        %1852 = vmatmul.mubr.bf16.gmra.mxu0 %v671
        %v1853 = vpop.f32.mrf.mxu0
        %v1854 = vadd.f32 %v1693, %v1853
        %v1855 = vpop.f32.mrf.mxu0
        %v1856 = vpop.f32.mrf.mxu0
        %v1857 = vadd.f32 %v1696, %v1856
        %v1858 = vpop.f32.mrf.mxu0
        %1859 = vmatprep.mubr.bf16.mxu0 %v748
        %1860 = vmatmul.mubr.bf16.gmra.mxu0 %v683
        %v1861 = vpop.f32.mrf.mxu0
        %v1862 = vadd.f32 %v1701, %v1861
        %v1863 = vpop.f32.mrf.mxu0
        %v1864 = vpop.f32.mrf.mxu0
        %v1865 = vadd.f32 %v1704, %v1864
        %v1866 = vpop.f32.mrf.mxu0
        %1867 = vmatprep.mubr.bf16.mxu0 %v789
        %1868 = vmatmul.mubr.bf16.gmra.mxu0 %v785
        %v1869 = vpop.f32.mrf.mxu0
        %v1870 = vadd.f32 %v1709, %v1869
        %v1871 = vpop.f32.mrf.mxu0
        %v1872 = vpop.f32.mrf.mxu0
        %v1873 = vadd.f32 %v1712, %v1872
        %v1874 = vpop.f32.mrf.mxu0
        %1875 = vdwg.mxu0
        %1876 = vmatprep.subr.bf16.mxu0 0
        %1877 = vmatpush1.bf16.msra.mxu0 %v1304
        %1878 = vmatprep.subr.bf16.mxu0 0
        %1879 = vmatpush1.bf16.msra.mxu0 %v1303
        %1880 = vmatprep.subr.bf16.mxu0 0
        %1881 = vmatpush1.bf16.msra.mxu0 %v1302
        %1882 = vmatprep.subr.bf16.mxu0 0
        %1883 = vmatpush1.bf16.msra.mxu0 %v1301
        %1884 = vmatprep.subr.bf16.mxu0 0
        %1885 = vmatpush1.bf16.msra.mxu0 %v1300
        %1886 = vmatprep.subr.bf16.mxu0 0
        %1887 = vmatpush1.bf16.msra.mxu0 %v1299
        %1888 = vmatprep.subr.bf16.mxu0 0
        %1889 = vmatpush1.bf16.msra.mxu0 %v1298
        %1890 = vmatprep.subr.bf16.mxu0 0
        %1891 = vmatpush1.bf16.msra.mxu0 %v1297
        %1892 = vmatprep.subr.bf16.mxu0 0
        %1893 = vmatpush2.bf16.msra.mxu0 %v1312
        %1894 = vmatprep.subr.bf16.mxu0 0
        %1895 = vmatpush2.bf16.msra.mxu0 %v1311
        %1896 = vmatprep.subr.bf16.mxu0 0
        %1897 = vmatpush2.bf16.msra.mxu0 %v1310
        %1898 = vmatprep.subr.bf16.mxu0 0
        %1899 = vmatpush2.bf16.msra.mxu0 %v1309
        %1900 = vmatprep.subr.bf16.mxu0 0
        %1901 = vmatpush2.bf16.msra.mxu0 %v1308
        %1902 = vmatprep.subr.bf16.mxu0 0
        %1903 = vmatpush2.bf16.msra.mxu0 %v1307
        %1904 = vmatprep.subr.bf16.mxu0 0
        %1905 = vmatpush2.bf16.msra.mxu0 %v1306
        %1906 = vmatprep.subr.bf16.mxu0 0
        %1907 = vmatpush2.bf16.msra.mxu0 %v1305
        %1908 = vmatprep.mubr.bf16.mxu0 %v527
        %1909 = vmatmul.mubr.bf16.gmra.mxu0 %v413
        %v1910 = vpop.f32.mrf.mxu0
        %v1911 = vadd.f32 %v1750, %v1910
        %v1912 = vpop.f32.mrf.mxu0
        %v1913 = vpop.f32.mrf.mxu0
        %v1914 = vadd.f32 %v1753, %v1913
        %v1915 = vpop.f32.mrf.mxu0
        %1916 = vmatprep.mubr.bf16.mxu0 %v539
        %1917 = vmatmul.mubr.bf16.gmra.mxu0 %v414
        %v1918 = vpop.f32.mrf.mxu0
        %v1919 = vadd.f32 %v1758, %v1918
        %v1920 = vpop.f32.mrf.mxu0
        %v1921 = vpop.f32.mrf.mxu0
        %v1922 = vadd.f32 %v1761, %v1921
        %v1923 = vpop.f32.mrf.mxu0
        %1924 = vmatprep.mubr.bf16.mxu0 %v551
        %1925 = vmatmul.mubr.bf16.gmra.mxu0 %v415
        %v1926 = vpop.f32.mrf.mxu0
        %v1927 = vadd.f32 %v1766, %v1926
        %v1928 = vpop.f32.mrf.mxu0
        %v1929 = vpop.f32.mrf.mxu0
        %v1930 = vadd.f32 %v1769, %v1929
        %v1931 = vpop.f32.mrf.mxu0
        %1932 = vmatprep.mubr.bf16.mxu0 %v563
        %1933 = vmatmul.mubr.bf16.gmra.mxu0 %v416
        %v1934 = vpop.f32.mrf.mxu0
        %v1935 = vadd.f32 %v1774, %v1934
        %v1936 = vpop.f32.mrf.mxu0
        %v1937 = vpop.f32.mrf.mxu0
        %v1938 = vadd.f32 %v1777, %v1937
        %v1939 = vpop.f32.mrf.mxu0
        %1940 = vmatprep.mubr.bf16.mxu0 %v575
        %1941 = vmatmul.mubr.bf16.gmra.mxu0 %v417
        %v1942 = vpop.f32.mrf.mxu0
        %v1943 = vadd.f32 %v1782, %v1942
        %v1944 = vpop.f32.mrf.mxu0
        %v1945 = vpop.f32.mrf.mxu0
        %v1946 = vadd.f32 %v1785, %v1945
        %v1947 = vpop.f32.mrf.mxu0
        %1948 = vmatprep.mubr.bf16.mxu0 %v587
        %1949 = vmatmul.mubr.bf16.gmra.mxu0 %v418
        %v1950 = vpop.f32.mrf.mxu0
        %v1951 = vadd.f32 %v1790, %v1950
        %v1952 = vpop.f32.mrf.mxu0
        %v1953 = vpop.f32.mrf.mxu0
        %v1954 = vadd.f32 %v1793, %v1953
        %v1955 = vpop.f32.mrf.mxu0
        %1956 = vmatprep.mubr.bf16.mxu0 %v599
        %1957 = vmatmul.mubr.bf16.gmra.mxu0 %v419
        %v1958 = vpop.f32.mrf.mxu0
        %v1959 = vadd.f32 %v1798, %v1958
        %v1960 = vpop.f32.mrf.mxu0
        %v1961 = vpop.f32.mrf.mxu0
        %v1962 = vadd.f32 %v1801, %v1961
        %v1963 = vpop.f32.mrf.mxu0
        %1964 = vmatprep.mubr.bf16.mxu0 %v611
        %1965 = vmatmul.mubr.bf16.gmra.mxu0 %v420
        %v1966 = vpop.f32.mrf.mxu0
        %v1967 = vadd.f32 %v1806, %v1966
        %v1968 = vpop.f32.mrf.mxu0
        %v1969 = vpop.f32.mrf.mxu0
        %v1970 = vadd.f32 %v1809, %v1969
        %v1971 = vpop.f32.mrf.mxu0
        %1972 = vmatprep.mubr.bf16.mxu0 %v623
        %1973 = vmatmul.mubr.bf16.gmra.mxu0 %v421
        %v1974 = vpop.f32.mrf.mxu0
        %v1975 = vadd.f32 %v1814, %v1974
        %v1976 = vpop.f32.mrf.mxu0
        %v1977 = vpop.f32.mrf.mxu0
        %v1978 = vadd.f32 %v1817, %v1977
        %v1979 = vpop.f32.mrf.mxu0
        %1980 = vmatprep.mubr.bf16.mxu0 %v635
        %1981 = vmatmul.mubr.bf16.gmra.mxu0 %v422
        %v1982 = vpop.f32.mrf.mxu0
        %v1983 = vadd.f32 %v1822, %v1982
        %v1984 = vpop.f32.mrf.mxu0
        %v1985 = vpop.f32.mrf.mxu0
        %v1986 = vadd.f32 %v1825, %v1985
        %v1987 = vpop.f32.mrf.mxu0
        %1988 = vmatprep.mubr.bf16.mxu0 %v647
        %1989 = vmatmul.mubr.bf16.gmra.mxu0 %v423
        %v1990 = vpop.f32.mrf.mxu0
        %v1991 = vadd.f32 %v1830, %v1990
        %v1992 = vpop.f32.mrf.mxu0
        %v1993 = vpop.f32.mrf.mxu0
        %v1994 = vadd.f32 %v1833, %v1993
        %v1995 = vpop.f32.mrf.mxu0
        %1996 = vmatprep.mubr.bf16.mxu0 %v659
        %1997 = vmatmul.mubr.bf16.gmra.mxu0 %v424
        %v1998 = vpop.f32.mrf.mxu0
        %v1999 = vadd.f32 %v1838, %v1998
        %v2000 = vpop.f32.mrf.mxu0
        %v2001 = vpop.f32.mrf.mxu0
        %v2002 = vadd.f32 %v1841, %v2001
        %v2003 = vpop.f32.mrf.mxu0
        %2004 = vmatprep.mubr.bf16.mxu0 %v671
        %2005 = vmatmul.mubr.bf16.gmra.mxu0 %v425
        %v2006 = vpop.f32.mrf.mxu0
        %v2007 = vadd.f32 %v1846, %v2006
        %v2008 = vpop.f32.mrf.mxu0
        %v2009 = vpop.f32.mrf.mxu0
        %v2010 = vadd.f32 %v1849, %v2009
        %v2011 = vpop.f32.mrf.mxu0
        %2012 = vmatprep.mubr.bf16.mxu0 %v683
        %2013 = vmatmul.mubr.bf16.gmra.mxu0 %v426
        %v2014 = vpop.f32.mrf.mxu0
        %v2015 = vadd.f32 %v1854, %v2014
        %v2016 = vpop.f32.mrf.mxu0
        %v2017 = vpop.f32.mrf.mxu0
        %v2018 = vadd.f32 %v1857, %v2017
        %v2019 = vpop.f32.mrf.mxu0
        %2020 = vmatprep.mubr.bf16.mxu0 %v785
        %2021 = vmatmul.mubr.bf16.gmra.mxu0 %v769
        %v2022 = vpop.f32.mrf.mxu0
        %v2023 = vadd.f32 %v1862, %v2022
        %v2024 = vpop.f32.mrf.mxu0
        %v2025 = vpop.f32.mrf.mxu0
        %v2026 = vadd.f32 %v1865, %v2025
        %v2027 = vpop.f32.mrf.mxu0
        %2028 = vmatprep.mubr.bf16.mxu0 %v811
        %2029 = vmatmul.mubr.bf16.gmra.mxu0 %v795
        %v2030 = vpop.f32.mrf.mxu0
        %v2031 = vadd.f32 %v1870, %v2030
        %v2032 = vpop.f32.mrf.mxu0
        %v2033 = vpop.f32.mrf.mxu0
        %v2034 = vadd.f32 %v1873, %v2033
        %v2035 = vpop.f32.mrf.mxu0
        %2036 = vdwg.mxu0
        %2037 = vmatprep.subr.bf16.mxu0 0
        %2038 = vmatpush1.bf16.msra.mxu0 %v1320
        %2039 = vmatprep.subr.bf16.mxu0 0
        %2040 = vmatpush1.bf16.msra.mxu0 %v1319
        %2041 = vmatprep.subr.bf16.mxu0 0
        %2042 = vmatpush1.bf16.msra.mxu0 %v1318
        %2043 = vmatprep.subr.bf16.mxu0 0
        %2044 = vmatpush1.bf16.msra.mxu0 %v1317
        %2045 = vmatprep.subr.bf16.mxu0 0
        %2046 = vmatpush1.bf16.msra.mxu0 %v1316
        %2047 = vmatprep.subr.bf16.mxu0 0
        %2048 = vmatpush1.bf16.msra.mxu0 %v1315
        %2049 = vmatprep.subr.bf16.mxu0 0
        %2050 = vmatpush1.bf16.msra.mxu0 %v1314
        %2051 = vmatprep.subr.bf16.mxu0 0
        %2052 = vmatpush1.bf16.msra.mxu0 %v1313
        %2053 = vmatprep.subr.bf16.mxu0 0
        %2054 = vmatpush2.bf16.msra.mxu0 0
        %2055 = vmatprep.subr.bf16.mxu0 0
        %2056 = vmatpush2.bf16.msra.mxu0 0
        %2057 = vmatprep.subr.bf16.mxu0 0
        %2058 = vmatpush2.bf16.msra.mxu0 0
        %2059 = vmatprep.subr.bf16.mxu0 0
        %2060 = vmatpush2.bf16.msra.mxu0 0
        %2061 = vmatprep.subr.bf16.mxu0 0
        %2062 = vmatpush2.bf16.msra.mxu0 0
        %2063 = vmatprep.subr.bf16.mxu0 0
        %2064 = vmatpush2.bf16.msra.mxu0 0
        %2065 = vmatprep.subr.bf16.mxu0 0
        %2066 = vmatpush2.bf16.msra.mxu0 0
        %2067 = vmatprep.subr.bf16.mxu0 0
        %2068 = vmatpush2.bf16.msra.mxu0 0
        %2069 = vmatprep.mubr.bf16.mxu0 0
        %2070 = vmatmul.mubr.bf16.gmra.mxu0 %v709
        %v2071 = vpop.f32.mrf.mxu0
        %v2072 = vadd.f32 %v1911, %v2071
        %v2073 = vpop.f32.mrf.mxu0
        %v2074 = vpop.f32.mrf.mxu0
        %v2075 = vadd.f32 %v1914, %v2074
        %v2076 = vpop.f32.mrf.mxu0
        %2077 = vmatprep.mubr.bf16.mxu0 0
        %2078 = vmatmul.mubr.bf16.gmra.mxu0 %v712
        %v2079 = vpop.f32.mrf.mxu0
        %v2080 = vadd.f32 %v1919, %v2079
        %v2081 = vpop.f32.mrf.mxu0
        %v2082 = vpop.f32.mrf.mxu0
        %v2083 = vadd.f32 %v1922, %v2082
        %v2084 = vpop.f32.mrf.mxu0
        %2085 = vmatprep.mubr.bf16.mxu0 0
        %2086 = vmatmul.mubr.bf16.gmra.mxu0 %v715
        %v2087 = vpop.f32.mrf.mxu0
        %v2088 = vadd.f32 %v1927, %v2087
        %v2089 = vpop.f32.mrf.mxu0
        %v2090 = vpop.f32.mrf.mxu0
        %v2091 = vadd.f32 %v1930, %v2090
        %v2092 = vpop.f32.mrf.mxu0
        %2093 = vmatprep.mubr.bf16.mxu0 0
        %2094 = vmatmul.mubr.bf16.gmra.mxu0 %v718
        %v2095 = vpop.f32.mrf.mxu0
        %v2096 = vadd.f32 %v1935, %v2095
        %v2097 = vpop.f32.mrf.mxu0
        %v2098 = vpop.f32.mrf.mxu0
        %v2099 = vadd.f32 %v1938, %v2098
        %v2100 = vpop.f32.mrf.mxu0
        %2101 = vmatprep.mubr.bf16.mxu0 0
        %2102 = vmatmul.mubr.bf16.gmra.mxu0 %v721
        %v2103 = vpop.f32.mrf.mxu0
        %v2104 = vadd.f32 %v1943, %v2103
        %v2105 = vpop.f32.mrf.mxu0
        %v2106 = vpop.f32.mrf.mxu0
        %v2107 = vadd.f32 %v1946, %v2106
        %v2108 = vpop.f32.mrf.mxu0
        %2109 = vmatprep.mubr.bf16.mxu0 0
        %2110 = vmatmul.mubr.bf16.gmra.mxu0 %v724
        %v2111 = vpop.f32.mrf.mxu0
        %v2112 = vadd.f32 %v1951, %v2111
        %v2113 = vpop.f32.mrf.mxu0
        %v2114 = vpop.f32.mrf.mxu0
        %v2115 = vadd.f32 %v1954, %v2114
        %v2116 = vpop.f32.mrf.mxu0
        %2117 = vmatprep.mubr.bf16.mxu0 0
        %2118 = vmatmul.mubr.bf16.gmra.mxu0 %v727
        %v2119 = vpop.f32.mrf.mxu0
        %v2120 = vadd.f32 %v1959, %v2119
        %v2121 = vpop.f32.mrf.mxu0
        %v2122 = vpop.f32.mrf.mxu0
        %v2123 = vadd.f32 %v1962, %v2122
        %v2124 = vpop.f32.mrf.mxu0
        %2125 = vmatprep.mubr.bf16.mxu0 0
        %2126 = vmatmul.mubr.bf16.gmra.mxu0 %v730
        %v2127 = vpop.f32.mrf.mxu0
        %v2128 = vadd.f32 %v1967, %v2127
        %v2129 = vpop.f32.mrf.mxu0
        %v2130 = vpop.f32.mrf.mxu0
        %v2131 = vadd.f32 %v1970, %v2130
        %v2132 = vpop.f32.mrf.mxu0
        %2133 = vmatprep.mubr.bf16.mxu0 0
        %2134 = vmatmul.mubr.bf16.gmra.mxu0 %v733
        %v2135 = vpop.f32.mrf.mxu0
        %v2136 = vadd.f32 %v1975, %v2135
        %v2137 = vpop.f32.mrf.mxu0
        %v2138 = vpop.f32.mrf.mxu0
        %v2139 = vadd.f32 %v1978, %v2138
        %v2140 = vpop.f32.mrf.mxu0
        %2141 = vmatprep.mubr.bf16.mxu0 0
        %2142 = vmatmul.mubr.bf16.gmra.mxu0 %v736
        %v2143 = vpop.f32.mrf.mxu0
        %v2144 = vadd.f32 %v1983, %v2143
        %v2145 = vpop.f32.mrf.mxu0
        %v2146 = vpop.f32.mrf.mxu0
        %v2147 = vadd.f32 %v1986, %v2146
        %v2148 = vpop.f32.mrf.mxu0
        %2149 = vmatprep.mubr.bf16.mxu0 0
        %2150 = vmatmul.mubr.bf16.gmra.mxu0 %v739
        %v2151 = vpop.f32.mrf.mxu0
        %v2152 = vadd.f32 %v1991, %v2151
        %v2153 = vpop.f32.mrf.mxu0
        %v2154 = vpop.f32.mrf.mxu0
        %v2155 = vadd.f32 %v1994, %v2154
        %v2156 = vpop.f32.mrf.mxu0
        %2157 = vmatprep.mubr.bf16.mxu0 0
        %2158 = vmatmul.mubr.bf16.gmra.mxu0 %v742
        %v2159 = vpop.f32.mrf.mxu0
        %v2160 = vadd.f32 %v1999, %v2159
        %v2161 = vpop.f32.mrf.mxu0
        %v2162 = vpop.f32.mrf.mxu0
        %v2163 = vadd.f32 %v2002, %v2162
        %v2164 = vpop.f32.mrf.mxu0
        %2165 = vmatprep.mubr.bf16.mxu0 0
        %2166 = vmatmul.mubr.bf16.gmra.mxu0 %v745
        %v2167 = vpop.f32.mrf.mxu0
        %v2168 = vadd.f32 %v2007, %v2167
        %v2169 = vpop.f32.mrf.mxu0
        %v2170 = vpop.f32.mrf.mxu0
        %v2171 = vadd.f32 %v2010, %v2170
        %v2172 = vpop.f32.mrf.mxu0
        %2173 = vmatprep.mubr.bf16.mxu0 0
        %2174 = vmatmul.mubr.bf16.gmra.mxu0 %v748
        %v2175 = vpop.f32.mrf.mxu0
        %v2176 = vadd.f32 %v2015, %v2175
        %v2177 = vpop.f32.mrf.mxu0
        %v2178 = vpop.f32.mrf.mxu0
        %v2179 = vadd.f32 %v2018, %v2178
        %v2180 = vpop.f32.mrf.mxu0
        %2181 = vmatprep.mubr.bf16.mxu0 0
        %2182 = vmatmul.mubr.bf16.gmra.mxu0 %v789
        %v2183 = vpop.f32.mrf.mxu0
        %v2184 = vadd.f32 %v2023, %v2183
        %v2185 = vpop.f32.mrf.mxu0
        %v2186 = vpop.f32.mrf.mxu0
        %v2187 = vadd.f32 %v2026, %v2186
        %v2188 = vpop.f32.mrf.mxu0
        %2189 = vmatprep.mubr.bf16.mxu0 0
        %2190 = vmatmul.mubr.bf16.gmra.mxu0 %v815
        %v2191 = vpop.f32.mrf.mxu0
        %v2192 = vadd.f32 %v2031, %v2191
        %v2193 = vpop.f32.mrf.mxu0
        %v2194 = vpop.f32.mrf.mxu0
        %v2195 = vadd.f32 %v2034, %v2194
        %v2196 = vpop.f32.mrf.mxu0
        %2197 = vdwg.mxu0
        %v2198 = vld [vmem:[%s2] sm:$0x1]
        %v2200 = vlaneseq
        %v2201 = vshrl.u32 %v2200, 7
        %v2202 = vsub.s32 0, %v2201
        %v2203 = vrot.slane %v2198, %v2202
        %v2205 = vmul.f32 %v2072, %v2203
        %v2206 = vmul.f32 %v2075, %v2203
        %v2207 = vmul.f32 %v2080, %v2203
        %v2208 = vmul.f32 %v2083, %v2203
        %v2209 = vmul.f32 %v2088, %v2203
        %v2210 = vmul.f32 %v2091, %v2203
        %v2211 = vmul.f32 %v2096, %v2203
        %v2212 = vmul.f32 %v2099, %v2203
        %v2213 = vmul.f32 %v2104, %v2203
        %v2214 = vmul.f32 %v2107, %v2203
        %v2215 = vmul.f32 %v2112, %v2203
        %v2216 = vmul.f32 %v2115, %v2203
        %v2217 = vmul.f32 %v2120, %v2203
        %v2218 = vmul.f32 %v2123, %v2203
        %v2219 = vmul.f32 %v2128, %v2203
        %v2220 = vmul.f32 %v2131, %v2203
        %v2221 = vmul.f32 %v2136, %v2203
        %v2222 = vmul.f32 %v2139, %v2203
        %v2223 = vmul.f32 %v2144, %v2203
        %v2224 = vmul.f32 %v2147, %v2203
        %v2225 = vmul.f32 %v2152, %v2203
        %v2226 = vmul.f32 %v2155, %v2203
        %v2227 = vmul.f32 %v2160, %v2203
        %v2228 = vmul.f32 %v2163, %v2203
        %v2229 = vmul.f32 %v2168, %v2203
        %v2230 = vmul.f32 %v2171, %v2203
        %v2231 = vmul.f32 %v2176, %v2203
        %v2232 = vmul.f32 %v2179, %v2203
        %v2233 = vmul.f32 %v2184, %v2203
        %v2234 = vmul.f32 %v2187, %v2203
        %v2235 = vmul.f32 %v2192, %v2203
        %v2236 = vmul.f32 %v2195, %v2203
        %v2237 = vld [vmem:[%s3] sm:$0x1]
        %v2239 = vlaneseq
        %v2240 = vshrl.u32 %v2239, 7
        %v2241 = vsub.s32 0, %v2240
        %v2242 = vrot.slane %v2237, %v2241
        %v2244 = vadd.f32 %v2205, %v2242
        %v2245 = vadd.f32 %v2206, %v2242
        %v2246 = vadd.f32 %v2207, %v2242
        %v2247 = vadd.f32 %v2208, %v2242
        %v2248 = vadd.f32 %v2209, %v2242
        %v2249 = vadd.f32 %v2210, %v2242
        %v2250 = vadd.f32 %v2211, %v2242
        %v2251 = vadd.f32 %v2212, %v2242
        %v2252 = vadd.f32 %v2213, %v2242
        %v2253 = vadd.f32 %v2214, %v2242
        %v2254 = vadd.f32 %v2215, %v2242
        %v2255 = vadd.f32 %v2216, %v2242
        %v2256 = vadd.f32 %v2217, %v2242
        %v2257 = vadd.f32 %v2218, %v2242
        %v2258 = vadd.f32 %v2219, %v2242
        %v2259 = vadd.f32 %v2220, %v2242
        %v2260 = vadd.f32 %v2221, %v2242
        %v2261 = vadd.f32 %v2222, %v2242
        %v2262 = vadd.f32 %v2223, %v2242
        %v2263 = vadd.f32 %v2224, %v2242
        %v2264 = vadd.f32 %v2225, %v2242
        %v2265 = vadd.f32 %v2226, %v2242
        %v2266 = vadd.f32 %v2227, %v2242
        %v2267 = vadd.f32 %v2228, %v2242
        %v2268 = vadd.f32 %v2229, %v2242
        %v2269 = vadd.f32 %v2230, %v2242
        %v2270 = vadd.f32 %v2231, %v2242
        %v2271 = vadd.f32 %v2232, %v2242
        %v2272 = vadd.f32 %v2233, %v2242
        %v2273 = vadd.f32 %v2234, %v2242
        %v2274 = vadd.f32 %v2235, %v2242
        %v2275 = vadd.f32 %v2236, %v2242
        %v2276 = vmax.f32 %v2244, 0.0
        %v2277 = vmax.f32 %v2245, 0.0
        %v2278 = vmax.f32 %v2246, 0.0
        %v2279 = vmax.f32 %v2247, 0.0
        %v2280 = vmax.f32 %v2248, 0.0
        %v2281 = vmax.f32 %v2249, 0.0
        %v2282 = vmax.f32 %v2250, 0.0
        %v2283 = vmax.f32 %v2251, 0.0
        %v2284 = vmax.f32 %v2252, 0.0
        %v2285 = vmax.f32 %v2253, 0.0
        %v2286 = vmax.f32 %v2254, 0.0
        %v2287 = vmax.f32 %v2255, 0.0
        %v2288 = vmax.f32 %v2256, 0.0
        %v2289 = vmax.f32 %v2257, 0.0
        %v2290 = vmax.f32 %v2258, 0.0
        %v2291 = vmax.f32 %v2259, 0.0
        %v2292 = vmax.f32 %v2260, 0.0
        %v2293 = vmax.f32 %v2261, 0.0
        %v2294 = vmax.f32 %v2262, 0.0
        %v2295 = vmax.f32 %v2263, 0.0
        %v2296 = vmax.f32 %v2264, 0.0
        %v2297 = vmax.f32 %v2265, 0.0
        %v2298 = vmax.f32 %v2266, 0.0
        %v2299 = vmax.f32 %v2267, 0.0
        %v2300 = vmax.f32 %v2268, 0.0
        %v2301 = vmax.f32 %v2269, 0.0
        %v2302 = vmax.f32 %v2270, 0.0
        %v2303 = vmax.f32 %v2271, 0.0
        %v2304 = vmax.f32 %v2272, 0.0
        %v2305 = vmax.f32 %v2273, 0.0
        %v2306 = vmax.f32 %v2274, 0.0
        %v2307 = vmax.f32 %v2275, 0.0
        %2308 = vst [vmem:[#allocation2] sm:$0xf] 0
        %2309 = vst [vmem:[#allocation2 + $0x4] sm:$0xf] 0
        %2310 = vst [vmem:[#allocation2 + $0x8] sm:$0x1] 0
        %s2311 = scalar_lea.vmem [#allocation2], 204
        %2312 = vst [vmem:[%s2311] sm:$0xf] 0
        %2313 = vst [vmem:[%s2311 + $0x4] sm:$0xf] 0
        %2314 = vst [vmem:[%s2311 + $0x8] sm:$0x1] 0
        %s2315 = scalar_lea.vmem [#allocation2], 12
        %vm2316 = vcmask 1040384
        %vm2317 = vsmask.f32 256
        %vm2318 = vmand %vm2316, %vm2317
        %v2319 = vld [vmem:[%s2315] sm:$0x1]
        %v2320 = vsel %vm2318, 0, %v2319
        %2321 = vst [vmem:[%s2315] sm:$0x1] %v2320
        %v2322 = vld [vmem:[%s2315 + $0xc] sm:$0x1]
        %v2323 = vsel %vm2318, 0, %v2322
        %2324 = vst [vmem:[%s2315 + $0xc] sm:$0x1] %v2323
        %v2325 = vld [vmem:[%s2315 + $0x18] sm:$0x1]
        %v2326 = vsel %vm2318, 0, %v2325
        %2327 = vst [vmem:[%s2315 + $0x18] sm:$0x1] %v2326
        %v2328 = vld [vmem:[%s2315 + $0x24] sm:$0x1]
        %v2329 = vsel %vm2318, 0, %v2328
        %2330 = vst [vmem:[%s2315 + $0x24] sm:$0x1] %v2329
        %v2331 = vld [vmem:[%s2315 + $0x30] sm:$0x1]
        %v2332 = vsel %vm2318, 0, %v2331
        %2333 = vst [vmem:[%s2315 + $0x30] sm:$0x1] %v2332
        %v2334 = vld [vmem:[%s2315 + $0x3c] sm:$0x1]
        %v2335 = vsel %vm2318, 0, %v2334
        %2336 = vst [vmem:[%s2315 + $0x3c] sm:$0x1] %v2335
        %v2337 = vld [vmem:[%s2315 + $0x48] sm:$0x1]
        %v2338 = vsel %vm2318, 0, %v2337
        %2339 = vst [vmem:[%s2315 + $0x48] sm:$0x1] %v2338
        %v2340 = vld [vmem:[%s2315 + $0x54] sm:$0x1]
        %v2341 = vsel %vm2318, 0, %v2340
        %2342 = vst [vmem:[%s2315 + $0x54] sm:$0x1] %v2341
        %v2343 = vld [vmem:[%s2315 + $0x60] sm:$0x1]
        %v2344 = vsel %vm2318, 0, %v2343
        %2345 = vst [vmem:[%s2315 + $0x60] sm:$0x1] %v2344
        %v2346 = vld [vmem:[%s2315 + $0x6c] sm:$0x1]
        %v2347 = vsel %vm2318, 0, %v2346
        %2348 = vst [vmem:[%s2315 + $0x6c] sm:$0x1] %v2347
        %v2349 = vld [vmem:[%s2315 + $0x78] sm:$0x1]
        %v2350 = vsel %vm2318, 0, %v2349
        %2351 = vst [vmem:[%s2315 + $0x78] sm:$0x1] %v2350
        %v2352 = vld [vmem:[%s2315 + $0x84] sm:$0x1]
        %v2353 = vsel %vm2318, 0, %v2352
        %2354 = vst [vmem:[%s2315 + $0x84] sm:$0x1] %v2353
        %v2355 = vld [vmem:[%s2315 + $0x90] sm:$0x1]
        %v2356 = vsel %vm2318, 0, %v2355
        %2357 = vst [vmem:[%s2315 + $0x90] sm:$0x1] %v2356
        %v2358 = vld [vmem:[%s2315 + $0x9c] sm:$0x1]
        %v2359 = vsel %vm2318, 0, %v2358
        %2360 = vst [vmem:[%s2315 + $0x9c] sm:$0x1] %v2359
        %v2361 = vld [vmem:[%s2315 + $0xa8] sm:$0x1]
        %v2362 = vsel %vm2318, 0, %v2361
        %2363 = vst [vmem:[%s2315 + $0xa8] sm:$0x1] %v2362
        %v2364 = vld [vmem:[%s2315 + $0xb4] sm:$0x1]
        %v2365 = vsel %vm2318, 0, %v2364
        %2366 = vst [vmem:[%s2315 + $0xb4] sm:$0x1] %v2365
        %vm2367 = vsmask.f32 7938
        %vm2368 = vmand %vm2316, %vm2367
        %v2369 = vld [vmem:[%s2315 + $0x8] sm:$0x1]
        %v2370 = vsel %vm2368, 0, %v2369
        %2371 = vst [vmem:[%s2315 + $0x8] sm:$0x1] %v2370
        %v2372 = vld [vmem:[%s2315 + $0x14] sm:$0x1]
        %v2373 = vsel %vm2368, 0, %v2372
        %2374 = vst [vmem:[%s2315 + $0x14] sm:$0x1] %v2373
        %v2375 = vld [vmem:[%s2315 + $0x20] sm:$0x1]
        %v2376 = vsel %vm2368, 0, %v2375
        %2377 = vst [vmem:[%s2315 + $0x20] sm:$0x1] %v2376
        %v2378 = vld [vmem:[%s2315 + $0x2c] sm:$0x1]
        %v2379 = vsel %vm2368, 0, %v2378
        %2380 = vst [vmem:[%s2315 + $0x2c] sm:$0x1] %v2379
        %v2381 = vld [vmem:[%s2315 + $0x38] sm:$0x1]
        %v2382 = vsel %vm2368, 0, %v2381
        %2383 = vst [vmem:[%s2315 + $0x38] sm:$0x1] %v2382
        %v2384 = vld [vmem:[%s2315 + $0x44] sm:$0x1]
        %v2385 = vsel %vm2368, 0, %v2384
        %2386 = vst [vmem:[%s2315 + $0x44] sm:$0x1] %v2385
        %v2387 = vld [vmem:[%s2315 + $0x50] sm:$0x1]
        %v2388 = vsel %vm2368, 0, %v2387
        %2389 = vst [vmem:[%s2315 + $0x50] sm:$0x1] %v2388
        %v2390 = vld [vmem:[%s2315 + $0x5c] sm:$0x1]
        %v2391 = vsel %vm2368, 0, %v2390
        %2392 = vst [vmem:[%s2315 + $0x5c] sm:$0x1] %v2391
        %v2393 = vld [vmem:[%s2315 + $0x68] sm:$0x1]
        %v2394 = vsel %vm2368, 0, %v2393
        %2395 = vst [vmem:[%s2315 + $0x68] sm:$0x1] %v2394
        %v2396 = vld [vmem:[%s2315 + $0x74] sm:$0x1]
        %v2397 = vsel %vm2368, 0, %v2396
        %2398 = vst [vmem:[%s2315 + $0x74] sm:$0x1] %v2397
        %v2399 = vld [vmem:[%s2315 + $0x80] sm:$0x1]
        %v2400 = vsel %vm2368, 0, %v2399
        %2401 = vst [vmem:[%s2315 + $0x80] sm:$0x1] %v2400
        %v2402 = vld [vmem:[%s2315 + $0x8c] sm:$0x1]
        %v2403 = vsel %vm2368, 0, %v2402
        %2404 = vst [vmem:[%s2315 + $0x8c] sm:$0x1] %v2403
        %v2405 = vld [vmem:[%s2315 + $0x98] sm:$0x1]
        %v2406 = vsel %vm2368, 0, %v2405
        %2407 = vst [vmem:[%s2315 + $0x98] sm:$0x1] %v2406
        %v2408 = vld [vmem:[%s2315 + $0xa4] sm:$0x1]
        %v2409 = vsel %vm2368, 0, %v2408
        %2410 = vst [vmem:[%s2315 + $0xa4] sm:$0x1] %v2409
        %v2411 = vld [vmem:[%s2315 + $0xb0] sm:$0x1]
        %v2412 = vsel %vm2368, 0, %v2411
        %2413 = vst [vmem:[%s2315 + $0xb0] sm:$0x1] %v2412
        %v2414 = vld [vmem:[%s2315 + $0xbc] sm:$0x1]
        %v2415 = vsel %vm2368, 0, %v2414
        %2416 = vst [vmem:[%s2315 + $0xbc] sm:$0x1] %v2415
        %v2417 = vpack.c.bf16 %v2277, %v2276
        %v2418 = vpack.c.bf16 %v2279, %v2278
        %v2419 = vpack.c.bf16 %v2281, %v2280
        %v2420 = vpack.c.bf16 %v2283, %v2282
        %v2421 = vpack.c.bf16 %v2285, %v2284
        %v2422 = vpack.c.bf16 %v2287, %v2286
        %v2423 = vpack.c.bf16 %v2289, %v2288
        %v2424 = vpack.c.bf16 %v2291, %v2290
        %v2425 = vpack.c.bf16 %v2293, %v2292
        %v2426 = vpack.c.bf16 %v2295, %v2294
        %v2427 = vpack.c.bf16 %v2297, %v2296
        %v2428 = vpack.c.bf16 %v2299, %v2298
        %v2429 = vpack.c.bf16 %v2301, %v2300
        %v2430 = vpack.c.bf16 %v2303, %v2302
        %v2431 = vpack.c.bf16 %v2305, %v2304
        %v2432 = vpack.c.bf16 %v2307, %v2306
        %v2449 = vunpack.c.l.b16 %v2417
        %v2450 = vunpack.c.h.b16 %v2417
        %v2451 = vunpack.c.l.b16 %v2418
        %v2452 = vunpack.c.h.b16 %v2418
        %v2453 = vunpack.c.l.b16 %v2419
        %v2454 = vunpack.c.h.b16 %v2419
        %v2455 = vunpack.c.l.b16 %v2420
        %v2456 = vunpack.c.h.b16 %v2420
        %v2457 = vunpack.c.l.b16 %v2421
        %v2458 = vunpack.c.h.b16 %v2421
        %v2459 = vunpack.c.l.b16 %v2422
        %v2460 = vunpack.c.h.b16 %v2422
        %v2461 = vunpack.c.l.b16 %v2423
        %v2462 = vunpack.c.h.b16 %v2423
        %v2463 = vunpack.c.l.b16 %v2424
        %v2464 = vunpack.c.h.b16 %v2424
        %v2465 = vunpack.c.l.b16 %v2425
        %v2466 = vunpack.c.h.b16 %v2425
        %v2467 = vunpack.c.l.b16 %v2426
        %v2468 = vunpack.c.h.b16 %v2426
        %v2469 = vunpack.c.l.b16 %v2427
        %v2470 = vunpack.c.h.b16 %v2427
        %v2471 = vunpack.c.l.b16 %v2428
        %v2472 = vunpack.c.h.b16 %v2428
        %v2473 = vunpack.c.l.b16 %v2429
        %v2474 = vunpack.c.h.b16 %v2429
        %v2475 = vunpack.c.l.b16 %v2430
        %v2476 = vunpack.c.h.b16 %v2430
        %v2477 = vunpack.c.l.b16 %v2431
        %v2478 = vunpack.c.h.b16 %v2431
        %v2479 = vunpack.c.l.b16 %v2432
        %v2480 = vunpack.c.h.b16 %v2432
        %v2481 = vpack.c.b16 %v2449, %v2449
        %v2482 = vpack.c.b16 %v2450, %v2450
        %v2483 = vpack.c.b16 %v2451, %v2451
        %v2484 = vpack.c.b16 %v2452, %v2452
        %v2485 = vpack.c.b16 %v2453, %v2453
        %v2486 = vpack.c.b16 %v2454, %v2454
        %v2487 = vpack.c.b16 %v2455, %v2455
        %v2488 = vpack.c.b16 %v2456, %v2456
        %v2489 = vpack.c.b16 %v2457, %v2457
        %v2490 = vpack.c.b16 %v2458, %v2458
        %v2491 = vpack.c.b16 %v2459, %v2459
        %v2492 = vpack.c.b16 %v2460, %v2460
        %v2493 = vpack.c.b16 %v2461, %v2461
        %v2494 = vpack.c.b16 %v2462, %v2462
        %v2495 = vpack.c.b16 %v2463, %v2463
        %v2496 = vpack.c.b16 %v2464, %v2464
        %v2497 = vpack.c.b16 %v2465, %v2465
        %v2498 = vpack.c.b16 %v2466, %v2466
        %v2499 = vpack.c.b16 %v2467, %v2467
        %v2500 = vpack.c.b16 %v2468, %v2468
        %v2501 = vpack.c.b16 %v2469, %v2469
        %v2502 = vpack.c.b16 %v2470, %v2470
        %v2503 = vpack.c.b16 %v2471, %v2471
        %v2504 = vpack.c.b16 %v2472, %v2472
        %v2505 = vpack.c.b16 %v2473, %v2473
        %v2506 = vpack.c.b16 %v2474, %v2474
        %v2507 = vpack.c.b16 %v2475, %v2475
        %v2508 = vpack.c.b16 %v2476, %v2476
        %v2509 = vpack.c.b16 %v2477, %v2477
        %v2510 = vpack.c.b16 %v2478, %v2478
        %v2511 = vpack.c.b16 %v2479, %v2479
        %v2512 = vpack.c.b16 %v2480, %v2480
        %vm2513 = vsmask.f32 4368
        %vm2514 = vmor %vm2317, %vm2513
        %v2516 = vshrl.u32 %v2481, 16
        %v2518 = vrot.slane %v2516, 7
        %v2519 = vshll.u32 %v2481, 16
        %v2521 = vor.u32 %v2518, %v2519
        %v2522 = vrot.slane %v2518, 4
        %v2524 = vshrl.u32 %v2482, 16
        %v2526 = vrot.slane %v2524, 7
        %v2527 = vshll.u32 %v2482, 16
        %v2529 = vor.u32 %v2526, %v2527
        %v2530 = vsel %vm2514, %v2522, %v2529
        %v2531 = vrot.slane %v2526, 4
        %v2533 = vshrl.u32 %v2483, 16
        %v2535 = vrot.slane %v2533, 7
        %v2536 = vshll.u32 %v2483, 16
        %v2538 = vor.u32 %v2535, %v2536
        %v2539 = vrot.slane %v2535, 4
        %v2541 = vshrl.u32 %v2484, 16
        %v2543 = vrot.slane %v2541, 7
        %v2544 = vshll.u32 %v2484, 16
        %v2546 = vor.u32 %v2543, %v2544
        %v2547 = vsel %vm2514, %v2539, %v2546
        %v2548 = vrot.slane %v2543, 4
        %v2550 = vshrl.u32 %v2485, 16
        %v2552 = vrot.slane %v2550, 7
        %v2553 = vshll.u32 %v2485, 16
        %v2555 = vor.u32 %v2552, %v2553
        %v2556 = vrot.slane %v2552, 4
        %v2558 = vshrl.u32 %v2486, 16
        %v2560 = vrot.slane %v2558, 7
        %v2561 = vshll.u32 %v2486, 16
        %v2563 = vor.u32 %v2560, %v2561
        %v2564 = vsel %vm2514, %v2556, %v2563
        %v2565 = vrot.slane %v2560, 4
        %v2567 = vshrl.u32 %v2487, 16
        %v2569 = vrot.slane %v2567, 7
        %v2570 = vshll.u32 %v2487, 16
        %v2572 = vor.u32 %v2569, %v2570
        %v2573 = vrot.slane %v2569, 4
        %v2575 = vshrl.u32 %v2488, 16
        %v2577 = vrot.slane %v2575, 7
        %v2578 = vshll.u32 %v2488, 16
        %v2580 = vor.u32 %v2577, %v2578
        %v2581 = vsel %vm2514, %v2573, %v2580
        %v2582 = vrot.slane %v2577, 4
        %v2584 = vshrl.u32 %v2489, 16
        %v2586 = vrot.slane %v2584, 7
        %v2587 = vshll.u32 %v2489, 16
        %v2589 = vor.u32 %v2586, %v2587
        %v2590 = vrot.slane %v2586, 4
        %v2592 = vshrl.u32 %v2490, 16
        %v2594 = vrot.slane %v2592, 7
        %v2595 = vshll.u32 %v2490, 16
        %v2597 = vor.u32 %v2594, %v2595
        %v2598 = vsel %vm2514, %v2590, %v2597
        %v2599 = vrot.slane %v2594, 4
        %v2601 = vshrl.u32 %v2491, 16
        %v2603 = vrot.slane %v2601, 7
        %v2604 = vshll.u32 %v2491, 16
        %v2606 = vor.u32 %v2603, %v2604
        %v2607 = vrot.slane %v2603, 4
        %v2609 = vshrl.u32 %v2492, 16
        %v2611 = vrot.slane %v2609, 7
        %v2612 = vshll.u32 %v2492, 16
        %v2614 = vor.u32 %v2611, %v2612
        %v2615 = vsel %vm2514, %v2607, %v2614
        %v2616 = vrot.slane %v2611, 4
        %v2618 = vshrl.u32 %v2493, 16
        %v2620 = vrot.slane %v2618, 7
        %v2621 = vshll.u32 %v2493, 16
        %v2623 = vor.u32 %v2620, %v2621
        %v2624 = vrot.slane %v2620, 4
        %v2626 = vshrl.u32 %v2494, 16
        %v2628 = vrot.slane %v2626, 7
        %v2629 = vshll.u32 %v2494, 16
        %v2631 = vor.u32 %v2628, %v2629
        %v2632 = vsel %vm2514, %v2624, %v2631
        %v2633 = vrot.slane %v2628, 4
        %v2635 = vshrl.u32 %v2495, 16
        %v2637 = vrot.slane %v2635, 7
        %v2638 = vshll.u32 %v2495, 16
        %v2640 = vor.u32 %v2637, %v2638
        %v2641 = vrot.slane %v2637, 4
        %v2643 = vshrl.u32 %v2496, 16
        %v2645 = vrot.slane %v2643, 7
        %v2646 = vshll.u32 %v2496, 16
        %v2648 = vor.u32 %v2645, %v2646
        %v2649 = vsel %vm2514, %v2641, %v2648
        %v2650 = vrot.slane %v2645, 4
        %v2652 = vshrl.u32 %v2497, 16
        %v2654 = vrot.slane %v2652, 7
        %v2655 = vshll.u32 %v2497, 16
        %v2657 = vor.u32 %v2654, %v2655
        %v2658 = vrot.slane %v2654, 4
        %v2660 = vshrl.u32 %v2498, 16
        %v2662 = vrot.slane %v2660, 7
        %v2663 = vshll.u32 %v2498, 16
        %v2665 = vor.u32 %v2662, %v2663
        %v2666 = vsel %vm2514, %v2658, %v2665
        %v2667 = vrot.slane %v2662, 4
        %v2669 = vshrl.u32 %v2499, 16
        %v2671 = vrot.slane %v2669, 7
        %v2672 = vshll.u32 %v2499, 16
        %v2674 = vor.u32 %v2671, %v2672
        %v2675 = vrot.slane %v2671, 4
        %v2677 = vshrl.u32 %v2500, 16
        %v2679 = vrot.slane %v2677, 7
        %v2680 = vshll.u32 %v2500, 16
        %v2682 = vor.u32 %v2679, %v2680
        %v2683 = vsel %vm2514, %v2675, %v2682
        %v2684 = vrot.slane %v2679, 4
        %v2686 = vshrl.u32 %v2501, 16
        %v2688 = vrot.slane %v2686, 7
        %v2689 = vshll.u32 %v2501, 16
        %v2691 = vor.u32 %v2688, %v2689
        %v2692 = vrot.slane %v2688, 4
        %v2694 = vshrl.u32 %v2502, 16
        %v2696 = vrot.slane %v2694, 7
        %v2697 = vshll.u32 %v2502, 16
        %v2699 = vor.u32 %v2696, %v2697
        %v2700 = vsel %vm2514, %v2692, %v2699
        %v2701 = vrot.slane %v2696, 4
        %v2703 = vshrl.u32 %v2503, 16
        %v2705 = vrot.slane %v2703, 7
        %v2706 = vshll.u32 %v2503, 16
        %v2708 = vor.u32 %v2705, %v2706
        %v2709 = vrot.slane %v2705, 4
        %v2711 = vshrl.u32 %v2504, 16
        %v2713 = vrot.slane %v2711, 7
        %v2714 = vshll.u32 %v2504, 16
        %v2716 = vor.u32 %v2713, %v2714
        %v2717 = vsel %vm2514, %v2709, %v2716
        %v2718 = vrot.slane %v2713, 4
        %v2720 = vshrl.u32 %v2505, 16
        %v2722 = vrot.slane %v2720, 7
        %v2723 = vshll.u32 %v2505, 16
        %v2725 = vor.u32 %v2722, %v2723
        %v2726 = vrot.slane %v2722, 4
        %v2728 = vshrl.u32 %v2506, 16
        %v2730 = vrot.slane %v2728, 7
        %v2731 = vshll.u32 %v2506, 16
        %v2733 = vor.u32 %v2730, %v2731
        %v2734 = vsel %vm2514, %v2726, %v2733
        %v2735 = vrot.slane %v2730, 4
        %v2737 = vshrl.u32 %v2507, 16
        %v2739 = vrot.slane %v2737, 7
        %v2740 = vshll.u32 %v2507, 16
        %v2742 = vor.u32 %v2739, %v2740
        %v2743 = vrot.slane %v2739, 4
        %v2745 = vshrl.u32 %v2508, 16
        %v2747 = vrot.slane %v2745, 7
        %v2748 = vshll.u32 %v2508, 16
        %v2750 = vor.u32 %v2747, %v2748
        %v2751 = vsel %vm2514, %v2743, %v2750
        %v2752 = vrot.slane %v2747, 4
        %v2754 = vshrl.u32 %v2509, 16
        %v2756 = vrot.slane %v2754, 7
        %v2757 = vshll.u32 %v2509, 16
        %v2759 = vor.u32 %v2756, %v2757
        %v2760 = vrot.slane %v2756, 4
        %v2762 = vshrl.u32 %v2510, 16
        %v2764 = vrot.slane %v2762, 7
        %v2765 = vshll.u32 %v2510, 16
        %v2767 = vor.u32 %v2764, %v2765
        %v2768 = vsel %vm2514, %v2760, %v2767
        %v2769 = vrot.slane %v2764, 4
        %v2771 = vshrl.u32 %v2511, 16
        %v2773 = vrot.slane %v2771, 7
        %v2774 = vshll.u32 %v2511, 16
        %v2776 = vor.u32 %v2773, %v2774
        %v2777 = vrot.slane %v2773, 4
        %v2779 = vshrl.u32 %v2512, 16
        %v2781 = vrot.slane %v2779, 7
        %v2782 = vshll.u32 %v2512, 16
        %v2784 = vor.u32 %v2781, %v2782
        %v2785 = vsel %vm2514, %v2777, %v2784
        %v2786 = vrot.slane %v2781, 4
        %vm2835 = vcmask 1043456
        %vm2836 = vmand %vm2835, %vm2367
        %v2837 = vld [vmem:[%s2315] sm:$0xf]
        %v2838 = vsel %vm2836, %v2521, %v2837
        %2839 = vst [vmem:[%s2315] sm:$0xf] %v2838
        %2840 = vst [vmem:[%s2315 + $0x4] sm:$0xf] %v2530
        %v2841 = vld [vmem:[%s2315 + $0x8] sm:$0x1]
        %v2842 = vsel %vm2318, %v2531, %v2841
        %2843 = vst [vmem:[%s2315 + $0x8] sm:$0x1] %v2842
        %v2844 = vld [vmem:[%s2315 + $0xc] sm:$0xf]
        %v2845 = vsel %vm2836, %v2538, %v2844
        %2846 = vst [vmem:[%s2315 + $0xc] sm:$0xf] %v2845
        %2847 = vst [vmem:[%s2315 + $0x10] sm:$0xf] %v2547
        %v2848 = vld [vmem:[%s2315 + $0x14] sm:$0x1]
        %v2849 = vsel %vm2318, %v2548, %v2848
        %2850 = vst [vmem:[%s2315 + $0x14] sm:$0x1] %v2849
        %v2851 = vld [vmem:[%s2315 + $0x18] sm:$0xf]
        %v2852 = vsel %vm2836, %v2555, %v2851
        %2853 = vst [vmem:[%s2315 + $0x18] sm:$0xf] %v2852
        %2854 = vst [vmem:[%s2315 + $0x1c] sm:$0xf] %v2564
        %v2855 = vld [vmem:[%s2315 + $0x20] sm:$0x1]
        %v2856 = vsel %vm2318, %v2565, %v2855
        %2857 = vst [vmem:[%s2315 + $0x20] sm:$0x1] %v2856
        %v2858 = vld [vmem:[%s2315 + $0x24] sm:$0xf]
        %v2859 = vsel %vm2836, %v2572, %v2858
        %2860 = vst [vmem:[%s2315 + $0x24] sm:$0xf] %v2859
        %2861 = vst [vmem:[%s2315 + $0x28] sm:$0xf] %v2581
        %v2862 = vld [vmem:[%s2315 + $0x2c] sm:$0x1]
        %v2863 = vsel %vm2318, %v2582, %v2862
        %2864 = vst [vmem:[%s2315 + $0x2c] sm:$0x1] %v2863
        %v2865 = vld [vmem:[%s2315 + $0x30] sm:$0xf]
        %v2866 = vsel %vm2836, %v2589, %v2865
        %2867 = vst [vmem:[%s2315 + $0x30] sm:$0xf] %v2866
        %2868 = vst [vmem:[%s2315 + $0x34] sm:$0xf] %v2598
        %v2869 = vld [vmem:[%s2315 + $0x38] sm:$0x1]
        %v2870 = vsel %vm2318, %v2599, %v2869
        %2871 = vst [vmem:[%s2315 + $0x38] sm:$0x1] %v2870
        %v2872 = vld [vmem:[%s2315 + $0x3c] sm:$0xf]
        %v2873 = vsel %vm2836, %v2606, %v2872
        %2874 = vst [vmem:[%s2315 + $0x3c] sm:$0xf] %v2873
        %2875 = vst [vmem:[%s2315 + $0x40] sm:$0xf] %v2615
        %v2876 = vld [vmem:[%s2315 + $0x44] sm:$0x1]
        %v2877 = vsel %vm2318, %v2616, %v2876
        %2878 = vst [vmem:[%s2315 + $0x44] sm:$0x1] %v2877
        %v2879 = vld [vmem:[%s2315 + $0x48] sm:$0xf]
        %v2880 = vsel %vm2836, %v2623, %v2879
        %2881 = vst [vmem:[%s2315 + $0x48] sm:$0xf] %v2880
        %2882 = vst [vmem:[%s2315 + $0x4c] sm:$0xf] %v2632
        %v2883 = vld [vmem:[%s2315 + $0x50] sm:$0x1]
        %v2884 = vsel %vm2318, %v2633, %v2883
        %2885 = vst [vmem:[%s2315 + $0x50] sm:$0x1] %v2884
        %v2886 = vld [vmem:[%s2315 + $0x54] sm:$0xf]
        %v2887 = vsel %vm2836, %v2640, %v2886
        %2888 = vst [vmem:[%s2315 + $0x54] sm:$0xf] %v2887
        %2889 = vst [vmem:[%s2315 + $0x58] sm:$0xf] %v2649
        %v2890 = vld [vmem:[%s2315 + $0x5c] sm:$0x1]
        %v2891 = vsel %vm2318, %v2650, %v2890
        %2892 = vst [vmem:[%s2315 + $0x5c] sm:$0x1] %v2891
        %v2893 = vld [vmem:[%s2315 + $0x60] sm:$0xf]
        %v2894 = vsel %vm2836, %v2657, %v2893
        %2895 = vst [vmem:[%s2315 + $0x60] sm:$0xf] %v2894
        %2896 = vst [vmem:[%s2315 + $0x64] sm:$0xf] %v2666
        %v2897 = vld [vmem:[%s2315 + $0x68] sm:$0x1]
        %v2898 = vsel %vm2318, %v2667, %v2897
        %2899 = vst [vmem:[%s2315 + $0x68] sm:$0x1] %v2898
        %v2900 = vld [vmem:[%s2315 + $0x6c] sm:$0xf]
        %v2901 = vsel %vm2836, %v2674, %v2900
        %2902 = vst [vmem:[%s2315 + $0x6c] sm:$0xf] %v2901
        %2903 = vst [vmem:[%s2315 + $0x70] sm:$0xf] %v2683
        %v2904 = vld [vmem:[%s2315 + $0x74] sm:$0x1]
        %v2905 = vsel %vm2318, %v2684, %v2904
        %2906 = vst [vmem:[%s2315 + $0x74] sm:$0x1] %v2905
        %v2907 = vld [vmem:[%s2315 + $0x78] sm:$0xf]
        %v2908 = vsel %vm2836, %v2691, %v2907
        %2909 = vst [vmem:[%s2315 + $0x78] sm:$0xf] %v2908
        %2910 = vst [vmem:[%s2315 + $0x7c] sm:$0xf] %v2700
        %v2911 = vld [vmem:[%s2315 + $0x80] sm:$0x1]
        %v2912 = vsel %vm2318, %v2701, %v2911
        %2913 = vst [vmem:[%s2315 + $0x80] sm:$0x1] %v2912
        %v2914 = vld [vmem:[%s2315 + $0x84] sm:$0xf]
        %v2915 = vsel %vm2836, %v2708, %v2914
        %2916 = vst [vmem:[%s2315 + $0x84] sm:$0xf] %v2915
        %2917 = vst [vmem:[%s2315 + $0x88] sm:$0xf] %v2717
        %v2918 = vld [vmem:[%s2315 + $0x8c] sm:$0x1]
        %v2919 = vsel %vm2318, %v2718, %v2918
        %2920 = vst [vmem:[%s2315 + $0x8c] sm:$0x1] %v2919
        %v2921 = vld [vmem:[%s2315 + $0x90] sm:$0xf]
        %v2922 = vsel %vm2836, %v2725, %v2921
        %2923 = vst [vmem:[%s2315 + $0x90] sm:$0xf] %v2922
        %2924 = vst [vmem:[%s2315 + $0x94] sm:$0xf] %v2734
        %v2925 = vld [vmem:[%s2315 + $0x98] sm:$0x1]
        %v2926 = vsel %vm2318, %v2735, %v2925
        %2927 = vst [vmem:[%s2315 + $0x98] sm:$0x1] %v2926
        %v2928 = vld [vmem:[%s2315 + $0x9c] sm:$0xf]
        %v2929 = vsel %vm2836, %v2742, %v2928
        %2930 = vst [vmem:[%s2315 + $0x9c] sm:$0xf] %v2929
        %2931 = vst [vmem:[%s2315 + $0xa0] sm:$0xf] %v2751
        %v2932 = vld [vmem:[%s2315 + $0xa4] sm:$0x1]
        %v2933 = vsel %vm2318, %v2752, %v2932
        %2934 = vst [vmem:[%s2315 + $0xa4] sm:$0x1] %v2933
        %v2935 = vld [vmem:[%s2315 + $0xa8] sm:$0xf]
        %v2936 = vsel %vm2836, %v2759, %v2935
        %2937 = vst [vmem:[%s2315 + $0xa8] sm:$0xf] %v2936
        %2938 = vst [vmem:[%s2315 + $0xac] sm:$0xf] %v2768
        %v2939 = vld [vmem:[%s2315 + $0xb0] sm:$0x1]
        %v2940 = vsel %vm2318, %v2769, %v2939
        %2941 = vst [vmem:[%s2315 + $0xb0] sm:$0x1] %v2940
        %v2942 = vld [vmem:[%s2315 + $0xb4] sm:$0xf]
        %v2943 = vsel %vm2836, %v2776, %v2942
        %2944 = vst [vmem:[%s2315 + $0xb4] sm:$0xf] %v2943
        %2945 = vst [vmem:[%s2315 + $0xb8] sm:$0xf] %v2785
        %v2946 = vld [vmem:[%s2315 + $0xbc] sm:$0x1]
        %v2947 = vsel %vm2318, %v2786, %v2946
        %2948 = vst [vmem:[%s2315 + $0xbc] sm:$0x1] %v2947
        %v2949 = vld [vmem:[#allocation2] sm:$0xf]
        %v2950 = vld [vmem:[#allocation2 + $0x4] sm:$0xf]
        %v2951 = vld [vmem:[#allocation2 + $0x8] sm:$0x1]
        %v2952 = vld [vmem:[#allocation2 + $0xc] sm:$0xf]
        %v2953 = vld [vmem:[#allocation2 + $0x10] sm:$0xf]
        %v2954 = vld [vmem:[#allocation2 + $0x14] sm:$0x1]
        %v2955 = vld [vmem:[#allocation2 + $0x18] sm:$0xf]
        %v2956 = vld [vmem:[#allocation2 + $0x1c] sm:$0xf]
        %v2957 = vld [vmem:[#allocation2 + $0x20] sm:$0x1]
        %v2958 = vld [vmem:[#allocation2 + $0x24] sm:$0xf]
        %v2959 = vld [vmem:[#allocation2 + $0x28] sm:$0xf]
        %v2960 = vld [vmem:[#allocation2 + $0x2c] sm:$0x1]
        %v2961 = vld [vmem:[#allocation2 + $0x30] sm:$0xf]
        %v2962 = vld [vmem:[#allocation2 + $0x34] sm:$0xf]
        %v2963 = vld [vmem:[#allocation2 + $0x38] sm:$0x1]
        %v2964 = vld [vmem:[#allocation2 + $0x3c] sm:$0xf]
        %v2965 = vld [vmem:[#allocation2 + $0x40] sm:$0xf]
        %v2966 = vld [vmem:[#allocation2 + $0x44] sm:$0x1]
        %v2967 = vld [vmem:[#allocation2 + $0x48] sm:$0xf]
        %v2968 = vld [vmem:[#allocation2 + $0x4c] sm:$0xf]
        %v2969 = vld [vmem:[#allocation2 + $0x50] sm:$0x1]
        %v2970 = vld [vmem:[#allocation2 + $0x54] sm:$0xf]
        %v2971 = vld [vmem:[#allocation2 + $0x58] sm:$0xf]
        %v2972 = vld [vmem:[#allocation2 + $0x5c] sm:$0x1]
        %v2973 = vld [vmem:[#allocation2 + $0x60] sm:$0xf]
        %v2974 = vld [vmem:[#allocation2 + $0x64] sm:$0xf]
        %v2975 = vld [vmem:[#allocation2 + $0x68] sm:$0x1]
        %v2976 = vld [vmem:[#allocation2 + $0x6c] sm:$0xf]
        %v2977 = vld [vmem:[#allocation2 + $0x70] sm:$0xf]
        %v2978 = vld [vmem:[#allocation2 + $0x74] sm:$0x1]
        %v2979 = vld [vmem:[#allocation2 + $0x78] sm:$0xf]
        %v2980 = vld [vmem:[#allocation2 + $0x7c] sm:$0xf]
        %v2981 = vld [vmem:[#allocation2 + $0x80] sm:$0x1]
        %v2982 = vld [vmem:[#allocation2 + $0x84] sm:$0xf]
        %v2983 = vld [vmem:[#allocation2 + $0x88] sm:$0xf]
        %v2984 = vld [vmem:[#allocation2 + $0x8c] sm:$0x1]
        %v2985 = vld [vmem:[#allocation2 + $0x90] sm:$0xf]
        %v2986 = vld [vmem:[#allocation2 + $0x94] sm:$0xf]
        %v2987 = vld [vmem:[#allocation2 + $0x98] sm:$0x1]
        %v2988 = vld [vmem:[#allocation2 + $0x9c] sm:$0xf]
        %v2989 = vld [vmem:[#allocation2 + $0xa0] sm:$0xf]
        %v2990 = vld [vmem:[#allocation2 + $0xa4] sm:$0x1]
        %v2991 = vld [vmem:[#allocation2 + $0xa8] sm:$0xf]
        %v2992 = vld [vmem:[#allocation2 + $0xac] sm:$0xf]
        %v2993 = vld [vmem:[#allocation2 + $0xb0] sm:$0x1]
        %v2994 = vld [vmem:[#allocation2 + $0xb4] sm:$0xf]
        %v2995 = vld [vmem:[#allocation2 + $0xb8] sm:$0xf]
        %v2996 = vld [vmem:[#allocation2 + $0xbc] sm:$0x1]
        %v2997 = vld [vmem:[#allocation2 + $0xc0] sm:$0xf]
        %v2998 = vld [vmem:[#allocation2 + $0xc4] sm:$0xf]
        %v2999 = vld [vmem:[#allocation2 + $0xc8] sm:$0x1]
        %v3000 = vld [vmem:[#allocation2 + $0xcc] sm:$0xf]
        %v3001 = vld [vmem:[#allocation2 + $0xd0] sm:$0xf]
        %v3002 = vld [vmem:[#allocation2 + $0xd4] sm:$0x1]
        %v3035 = vunpack.c.l.b16 %v2949
        %v3036 = vunpack.c.l.b16 %v2950
        %v3037 = vunpack.c.l.b16 %v2952
        %v3038 = vunpack.c.l.b16 %v2953
        %v3039 = vunpack.c.l.b16 %v2955
        %v3040 = vunpack.c.l.b16 %v2956
        %v3041 = vunpack.c.l.b16 %v2958
        %v3042 = vunpack.c.l.b16 %v2959
        %v3043 = vunpack.c.l.b16 %v2961
        %v3044 = vunpack.c.l.b16 %v2962
        %v3045 = vunpack.c.l.b16 %v2964
        %v3046 = vunpack.c.l.b16 %v2965
        %v3047 = vunpack.c.l.b16 %v2967
        %v3048 = vunpack.c.l.b16 %v2968
        %v3049 = vunpack.c.l.b16 %v2970
        %v3050 = vunpack.c.l.b16 %v2971
        %v3051 = vunpack.c.l.b16 %v2973
        %v3052 = vunpack.c.l.b16 %v2974
        %v3053 = vunpack.c.l.b16 %v2976
        %v3054 = vunpack.c.l.b16 %v2977
        %v3055 = vunpack.c.l.b16 %v2979
        %v3056 = vunpack.c.l.b16 %v2980
        %v3057 = vunpack.c.l.b16 %v2982
        %v3058 = vunpack.c.l.b16 %v2983
        %v3059 = vunpack.c.l.b16 %v2985
        %v3060 = vunpack.c.l.b16 %v2986
        %v3061 = vunpack.c.l.b16 %v2988
        %v3062 = vunpack.c.l.b16 %v2989
        %v3063 = vunpack.c.l.b16 %v2991
        %v3064 = vunpack.c.l.b16 %v2992
        %v3065 = vunpack.c.l.b16 %v2994
        %v3066 = vunpack.c.l.b16 %v2995
        %v3067 = vpack.c.b16 %v3036, %v3035
        %v3068 = vpack.c.b16 %v3038, %v3037
        %v3069 = vpack.c.b16 %v3040, %v3039
        %v3070 = vpack.c.b16 %v3042, %v3041
        %v3071 = vpack.c.b16 %v3044, %v3043
        %v3072 = vpack.c.b16 %v3046, %v3045
        %v3073 = vpack.c.b16 %v3048, %v3047
        %v3074 = vpack.c.b16 %v3050, %v3049
        %v3075 = vpack.c.b16 %v3052, %v3051
        %v3076 = vpack.c.b16 %v3054, %v3053
        %v3077 = vpack.c.b16 %v3056, %v3055
        %v3078 = vpack.c.b16 %v3058, %v3057
        %v3079 = vpack.c.b16 %v3060, %v3059
        %v3080 = vpack.c.b16 %v3062, %v3061
        %v3081 = vpack.c.b16 %v3064, %v3063
        %v3082 = vpack.c.b16 %v3066, %v3065
        %v3115 = vunpack.c.l.b16 %v2951
        %v3116 = vunpack.c.l.b16 %v2954
        %v3117 = vunpack.c.l.b16 %v2957
        %v3118 = vunpack.c.l.b16 %v2960
        %v3119 = vunpack.c.l.b16 %v2963
        %v3120 = vunpack.c.l.b16 %v2966
        %v3121 = vunpack.c.l.b16 %v2969
        %v3122 = vunpack.c.l.b16 %v2972
        %v3123 = vunpack.c.l.b16 %v2975
        %v3124 = vunpack.c.l.b16 %v2978
        %v3125 = vunpack.c.l.b16 %v2981
        %v3126 = vunpack.c.l.b16 %v2984
        %v3127 = vunpack.c.l.b16 %v2987
        %v3128 = vunpack.c.l.b16 %v2990
        %v3129 = vunpack.c.l.b16 %v2993
        %v3130 = vunpack.c.l.b16 %v2996
        %v3131 = vpack.c.b16 %v3115, %v3115
        %v3132 = vpack.c.b16 %v3116, %v3116
        %v3133 = vpack.c.b16 %v3117, %v3117
        %v3134 = vpack.c.b16 %v3118, %v3118
        %v3135 = vpack.c.b16 %v3119, %v3119
        %v3136 = vpack.c.b16 %v3120, %v3120
        %v3137 = vpack.c.b16 %v3121, %v3121
        %v3138 = vpack.c.b16 %v3122, %v3122
        %v3139 = vpack.c.b16 %v3123, %v3123
        %v3140 = vpack.c.b16 %v3124, %v3124
        %v3141 = vpack.c.b16 %v3125, %v3125
        %v3142 = vpack.c.b16 %v3126, %v3126
        %v3143 = vpack.c.b16 %v3127, %v3127
        %v3144 = vpack.c.b16 %v3128, %v3128
        %v3145 = vpack.c.b16 %v3129, %v3129
        %v3146 = vpack.c.b16 %v3130, %v3130
        %v3148 = vshrl.u32 %v3067, 16
        %v3150 = vshll.u32 %v3067, 16
        %v3152 = vrot.slane %v3150, 1
        %v3153 = vor.u32 %v3148, %v3152
        %v3155 = vshll.u32 %v3131, 16
        %v3157 = vrot.slane %v3155, 1
        %v3158 = vsel %vm491, %v3153, %v3157
        %v3160 = vshrl.u32 %v3068, 16
        %v3162 = vshll.u32 %v3068, 16
        %v3164 = vrot.slane %v3162, 1
        %v3165 = vor.u32 %v3160, %v3164
        %v3167 = vshll.u32 %v3132, 16
        %v3169 = vrot.slane %v3167, 1
        %v3170 = vsel %vm491, %v3165, %v3169
        %v3172 = vshrl.u32 %v3069, 16
        %v3174 = vshll.u32 %v3069, 16
        %v3176 = vrot.slane %v3174, 1
        %v3177 = vor.u32 %v3172, %v3176
        %v3179 = vshll.u32 %v3133, 16
        %v3181 = vrot.slane %v3179, 1
        %v3182 = vsel %vm491, %v3177, %v3181
        %v3184 = vshrl.u32 %v3070, 16
        %v3186 = vshll.u32 %v3070, 16
        %v3188 = vrot.slane %v3186, 1
        %v3189 = vor.u32 %v3184, %v3188
        %v3191 = vshll.u32 %v3134, 16
        %v3193 = vrot.slane %v3191, 1
        %v3194 = vsel %vm491, %v3189, %v3193
        %v3196 = vshrl.u32 %v3071, 16
        %v3198 = vshll.u32 %v3071, 16
        %v3200 = vrot.slane %v3198, 1
        %v3201 = vor.u32 %v3196, %v3200
        %v3203 = vshll.u32 %v3135, 16
        %v3205 = vrot.slane %v3203, 1
        %v3206 = vsel %vm491, %v3201, %v3205
        %v3208 = vshrl.u32 %v3072, 16
        %v3210 = vshll.u32 %v3072, 16
        %v3212 = vrot.slane %v3210, 1
        %v3213 = vor.u32 %v3208, %v3212
        %v3215 = vshll.u32 %v3136, 16
        %v3217 = vrot.slane %v3215, 1
        %v3218 = vsel %vm491, %v3213, %v3217
        %v3220 = vshrl.u32 %v3073, 16
        %v3222 = vshll.u32 %v3073, 16
        %v3224 = vrot.slane %v3222, 1
        %v3225 = vor.u32 %v3220, %v3224
        %v3227 = vshll.u32 %v3137, 16
        %v3229 = vrot.slane %v3227, 1
        %v3230 = vsel %vm491, %v3225, %v3229
        %v3232 = vshrl.u32 %v3074, 16
        %v3234 = vshll.u32 %v3074, 16
        %v3236 = vrot.slane %v3234, 1
        %v3237 = vor.u32 %v3232, %v3236
        %v3239 = vshll.u32 %v3138, 16
        %v3241 = vrot.slane %v3239, 1
        %v3242 = vsel %vm491, %v3237, %v3241
        %v3244 = vshrl.u32 %v3075, 16
        %v3246 = vshll.u32 %v3075, 16
        %v3248 = vrot.slane %v3246, 1
        %v3249 = vor.u32 %v3244, %v3248
        %v3251 = vshll.u32 %v3139, 16
        %v3253 = vrot.slane %v3251, 1
        %v3254 = vsel %vm491, %v3249, %v3253
        %v3256 = vshrl.u32 %v3076, 16
        %v3258 = vshll.u32 %v3076, 16
        %v3260 = vrot.slane %v3258, 1
        %v3261 = vor.u32 %v3256, %v3260
        %v3263 = vshll.u32 %v3140, 16
        %v3265 = vrot.slane %v3263, 1
        %v3266 = vsel %vm491, %v3261, %v3265
        %v3268 = vshrl.u32 %v3077, 16
        %v3270 = vshll.u32 %v3077, 16
        %v3272 = vrot.slane %v3270, 1
        %v3273 = vor.u32 %v3268, %v3272
        %v3275 = vshll.u32 %v3141, 16
        %v3277 = vrot.slane %v3275, 1
        %v3278 = vsel %vm491, %v3273, %v3277
        %v3280 = vshrl.u32 %v3078, 16
        %v3282 = vshll.u32 %v3078, 16
        %v3284 = vrot.slane %v3282, 1
        %v3285 = vor.u32 %v3280, %v3284
        %v3287 = vshll.u32 %v3142, 16
        %v3289 = vrot.slane %v3287, 1
        %v3290 = vsel %vm491, %v3285, %v3289
        %v3292 = vshrl.u32 %v3079, 16
        %v3294 = vshll.u32 %v3079, 16
        %v3296 = vrot.slane %v3294, 1
        %v3297 = vor.u32 %v3292, %v3296
        %v3299 = vshll.u32 %v3143, 16
        %v3301 = vrot.slane %v3299, 1
        %v3302 = vsel %vm491, %v3297, %v3301
        %v3304 = vshrl.u32 %v3080, 16
        %v3306 = vshll.u32 %v3080, 16
        %v3308 = vrot.slane %v3306, 1
        %v3309 = vor.u32 %v3304, %v3308
        %v3311 = vshll.u32 %v3144, 16
        %v3313 = vrot.slane %v3311, 1
        %v3314 = vsel %vm491, %v3309, %v3313
        %v3316 = vshrl.u32 %v3081, 16
        %v3318 = vshll.u32 %v3081, 16
        %v3320 = vrot.slane %v3318, 1
        %v3321 = vor.u32 %v3316, %v3320
        %v3323 = vshll.u32 %v3145, 16
        %v3325 = vrot.slane %v3323, 1
        %v3326 = vsel %vm491, %v3321, %v3325
        %v3328 = vshrl.u32 %v3082, 16
        %v3330 = vshll.u32 %v3082, 16
        %v3332 = vrot.slane %v3330, 1
        %v3333 = vor.u32 %v3328, %v3332
        %v3335 = vshll.u32 %v3146, 16
        %v3337 = vrot.slane %v3335, 1
        %v3338 = vsel %vm491, %v3333, %v3337
        %v3355 = vrot.slane %v3067, 1
        %v3356 = vrot.slane %v3131, 1
        %v3357 = vsel %vm700, %v3355, %v3356
        %v3358 = vrot.slane %v3068, 1
        %v3359 = vrot.slane %v3132, 1
        %v3360 = vsel %vm700, %v3358, %v3359
        %v3361 = vrot.slane %v3069, 1
        %v3362 = vrot.slane %v3133, 1
        %v3363 = vsel %vm700, %v3361, %v3362
        %v3364 = vrot.slane %v3070, 1
        %v3365 = vrot.slane %v3134, 1
        %v3366 = vsel %vm700, %v3364, %v3365
        %v3367 = vrot.slane %v3071, 1
        %v3368 = vrot.slane %v3135, 1
        %v3369 = vsel %vm700, %v3367, %v3368
        %v3370 = vrot.slane %v3072, 1
        %v3371 = vrot.slane %v3136, 1
        %v3372 = vsel %vm700, %v3370, %v3371
        %v3373 = vrot.slane %v3073, 1
        %v3374 = vrot.slane %v3137, 1
        %v3375 = vsel %vm700, %v3373, %v3374
        %v3376 = vrot.slane %v3074, 1
        %v3377 = vrot.slane %v3138, 1
        %v3378 = vsel %vm700, %v3376, %v3377
        %v3379 = vrot.slane %v3075, 1
        %v3380 = vrot.slane %v3139, 1
        %v3381 = vsel %vm700, %v3379, %v3380
        %v3382 = vrot.slane %v3076, 1
        %v3383 = vrot.slane %v3140, 1
        %v3384 = vsel %vm700, %v3382, %v3383
        %v3385 = vrot.slane %v3077, 1
        %v3386 = vrot.slane %v3141, 1
        %v3387 = vsel %vm700, %v3385, %v3386
        %v3388 = vrot.slane %v3078, 1
        %v3389 = vrot.slane %v3142, 1
        %v3390 = vsel %vm700, %v3388, %v3389
        %v3391 = vrot.slane %v3079, 1
        %v3392 = vrot.slane %v3143, 1
        %v3393 = vsel %vm700, %v3391, %v3392
        %v3394 = vrot.slane %v3080, 1
        %v3395 = vrot.slane %v3144, 1
        %v3396 = vsel %vm700, %v3394, %v3395
        %v3397 = vrot.slane %v3081, 1
        %v3398 = vrot.slane %v3145, 1
        %v3399 = vsel %vm700, %v3397, %v3398
        %v3400 = vrot.slane %v3082, 1
        %v3401 = vrot.slane %v3146, 1
        %v3402 = vsel %vm700, %v3400, %v3401
        %v3421 = vunpack.c.l.b16 %v2997
        %v3422 = vunpack.c.l.b16 %v2998
        %v3423 = vpack.c.b16 %v3422, %v3421
        %v3426 = vunpack.c.l.b16 %v2999
        %v3427 = vpack.c.b16 %v3426, %v3426
        %v3429 = vshrl.u32 %v3423, 16
        %v3431 = vshll.u32 %v3423, 16
        %v3433 = vrot.slane %v3431, 1
        %v3434 = vor.u32 %v3429, %v3433
        %v3436 = vshll.u32 %v3427, 16
        %v3438 = vrot.slane %v3436, 1
        %v3439 = vsel %vm491, %v3434, %v3438
        %v3441 = vrot.slane %v3423, 1
        %v3442 = vrot.slane %v3427, 1
        %v3443 = vsel %vm700, %v3441, %v3442
        %v3447 = vunpack.c.l.b16 %v3000
        %v3448 = vunpack.c.l.b16 %v3001
        %v3449 = vpack.c.b16 %v3448, %v3447
        %v3452 = vunpack.c.l.b16 %v3002
        %v3453 = vpack.c.b16 %v3452, %v3452
        %v3455 = vshrl.u32 %v3449, 16
        %v3457 = vshll.u32 %v3449, 16
        %v3459 = vrot.slane %v3457, 1
        %v3460 = vor.u32 %v3455, %v3459
        %v3462 = vshll.u32 %v3453, 16
        %v3464 = vrot.slane %v3462, 1
        %v3465 = vsel %vm491, %v3460, %v3464
        %v3467 = vrot.slane %v3449, 1
        %v3468 = vrot.slane %v3453, 1
        %v3469 = vsel %vm700, %v3467, %v3468
        %v3471 = vld [vmem:[#allocation3] sm:$0xf]
        %v3472 = vld [vmem:[#allocation3 + $0x4] sm:$0xf]
        %v3473 = vld [vmem:[#allocation3 + $0x8] sm:$0xf]
        %v3474 = vld [vmem:[#allocation3 + $0xc] sm:$0xf]
        %v3475 = vld [vmem:[#allocation3 + $0x10] sm:$0xf]
        %v3476 = vld [vmem:[#allocation3 + $0x14] sm:$0xf]
        %v3477 = vld [vmem:[#allocation3 + $0x18] sm:$0xf]
        %v3478 = vld [vmem:[#allocation3 + $0x1c] sm:$0xf]
        %v3479 = vld [vmem:[#allocation3 + $0x20] sm:$0xf]
        %v3480 = vld [vmem:[#allocation3 + $0x24] sm:$0xf]
        %v3481 = vld [vmem:[#allocation3 + $0x28] sm:$0xf]
        %v3482 = vld [vmem:[#allocation3 + $0x2c] sm:$0xf]
        %v3483 = vld [vmem:[#allocation3 + $0x30] sm:$0xf]
        %v3484 = vld [vmem:[#allocation3 + $0x34] sm:$0xf]
        %v3485 = vld [vmem:[#allocation3 + $0x38] sm:$0xf]
        %v3486 = vld [vmem:[#allocation3 + $0x3c] sm:$0xf]
        %v3487 = vld [vmem:[#allocation3 + $0x40] sm:$0xf]
        %v3488 = vld [vmem:[#allocation3 + $0x44] sm:$0xf]
        %v3489 = vld [vmem:[#allocation3 + $0x48] sm:$0xf]
        %v3490 = vld [vmem:[#allocation3 + $0x4c] sm:$0xf]
        %v3491 = vld [vmem:[#allocation3 + $0x50] sm:$0xf]
        %v3492 = vld [vmem:[#allocation3 + $0x54] sm:$0xf]
        %v3493 = vld [vmem:[#allocation3 + $0x58] sm:$0xf]
        %v3494 = vld [vmem:[#allocation3 + $0x5c] sm:$0xf]
        %v3495 = vld [vmem:[#allocation3 + $0x60] sm:$0xf]
        %v3496 = vld [vmem:[#allocation3 + $0x64] sm:$0xf]
        %v3497 = vld [vmem:[#allocation3 + $0x68] sm:$0xf]
        %v3498 = vld [vmem:[#allocation3 + $0x6c] sm:$0xf]
        %v3499 = vld [vmem:[#allocation3 + $0x70] sm:$0xf]
        %v3500 = vld [vmem:[#allocation3 + $0x74] sm:$0xf]
        %v3501 = vld [vmem:[#allocation3 + $0x78] sm:$0xf]
        %v3502 = vld [vmem:[#allocation3 + $0x7c] sm:$0xf]
        %v3503 = vld [vmem:[#allocation3 + $0x80] sm:$0xf]
        %v3504 = vld [vmem:[#allocation3 + $0x84] sm:$0xf]
        %v3505 = vld [vmem:[#allocation3 + $0x88] sm:$0xf]
        %v3506 = vld [vmem:[#allocation3 + $0x8c] sm:$0xf]
        %v3507 = vld [vmem:[#allocation3 + $0x90] sm:$0xf]
        %v3508 = vld [vmem:[#allocation3 + $0x94] sm:$0xf]
        %v3509 = vld [vmem:[#allocation3 + $0x98] sm:$0xf]
        %v3510 = vld [vmem:[#allocation3 + $0x9c] sm:$0xf]
        %v3511 = vld [vmem:[#allocation3 + $0xa0] sm:$0xf]
        %v3512 = vld [vmem:[#allocation3 + $0xa4] sm:$0xf]
        %v3513 = vld [vmem:[#allocation3 + $0xa8] sm:$0xf]
        %v3514 = vld [vmem:[#allocation3 + $0xac] sm:$0xf]
        %v3515 = vld [vmem:[#allocation3 + $0xb0] sm:$0xf]
        %v3516 = vld [vmem:[#allocation3 + $0xb4] sm:$0xf]
        %v3517 = vld [vmem:[#allocation3 + $0xb8] sm:$0xf]
        %v3518 = vld [vmem:[#allocation3 + $0xbc] sm:$0xf]
        %v3519 = vld [vmem:[#allocation3 + $0xc0] sm:$0xf]
        %v3520 = vld [vmem:[#allocation3 + $0xc4] sm:$0xf]
        %v3521 = vld [vmem:[#allocation3 + $0xc8] sm:$0xf]
        %v3522 = vld [vmem:[#allocation3 + $0xcc] sm:$0xf]
        %v3523 = vld [vmem:[#allocation3 + $0xd0] sm:$0xf]
        %v3524 = vld [vmem:[#allocation3 + $0xd4] sm:$0xf]
        %v3525 = vld [vmem:[#allocation3 + $0xd8] sm:$0xf]
        %v3526 = vld [vmem:[#allocation3 + $0xdc] sm:$0xf]
        %v3527 = vld [vmem:[#allocation3 + $0xe0] sm:$0xf]
        %v3528 = vld [vmem:[#allocation3 + $0xe4] sm:$0xf]
        %v3529 = vld [vmem:[#allocation3 + $0xe8] sm:$0xf]
        %v3530 = vld [vmem:[#allocation3 + $0xec] sm:$0xf]
        %v3531 = vld [vmem:[#allocation3 + $0xf0] sm:$0xf]
        %v3532 = vld [vmem:[#allocation3 + $0xf4] sm:$0xf]
        %v3533 = vld [vmem:[#allocation3 + $0xf8] sm:$0xf]
        %v3534 = vld [vmem:[#allocation3 + $0xfc] sm:$0xf]
        %v3535 = vld [vmem:[#allocation3 + $0x100] sm:$0xf]
        %v3536 = vld [vmem:[#allocation3 + $0x104] sm:$0xf]
        %v3537 = vld [vmem:[#allocation3 + $0x108] sm:$0xf]
        %v3538 = vld [vmem:[#allocation3 + $0x10c] sm:$0xf]
        %v3539 = vld [vmem:[#allocation3 + $0x110] sm:$0xf]
        %v3540 = vld [vmem:[#allocation3 + $0x114] sm:$0xf]
        %v3541 = vld [vmem:[#allocation3 + $0x118] sm:$0xf]
        %v3542 = vld [vmem:[#allocation3 + $0x11c] sm:$0xf]
        %v3543 = vld [vmem:[#allocation3 + $0x120] sm:$0xf]
        %v3544 = vld [vmem:[#allocation3 + $0x124] sm:$0xf]
        %v3545 = vld [vmem:[#allocation3 + $0x128] sm:$0xf]
        %v3546 = vld [vmem:[#allocation3 + $0x12c] sm:$0xf]
        %v3547 = vld [vmem:[#allocation3 + $0x130] sm:$0xf]
        %v3548 = vld [vmem:[#allocation3 + $0x134] sm:$0xf]
        %v3549 = vld [vmem:[#allocation3 + $0x138] sm:$0xf]
        %v3550 = vld [vmem:[#allocation3 + $0x13c] sm:$0xf]
        %v3551 = vld [vmem:[#allocation3 + $0x140] sm:$0xf]
        %v3552 = vld [vmem:[#allocation3 + $0x144] sm:$0xf]
        %v3553 = vld [vmem:[#allocation3 + $0x148] sm:$0xf]
        %v3554 = vld [vmem:[#allocation3 + $0x14c] sm:$0xf]
        %v3555 = vld [vmem:[#allocation3 + $0x150] sm:$0xf]
        %v3556 = vld [vmem:[#allocation3 + $0x154] sm:$0xf]
        %v3557 = vld [vmem:[#allocation3 + $0x158] sm:$0xf]
        %v3558 = vld [vmem:[#allocation3 + $0x15c] sm:$0xf]
        %v3559 = vld [vmem:[#allocation3 + $0x160] sm:$0xf]
        %v3560 = vld [vmem:[#allocation3 + $0x164] sm:$0xf]
        %v3561 = vld [vmem:[#allocation3 + $0x168] sm:$0xf]
        %v3562 = vld [vmem:[#allocation3 + $0x16c] sm:$0xf]
        %v3563 = vld [vmem:[#allocation3 + $0x170] sm:$0xf]
        %v3564 = vld [vmem:[#allocation3 + $0x174] sm:$0xf]
        %v3565 = vld [vmem:[#allocation3 + $0x178] sm:$0xf]
        %v3566 = vld [vmem:[#allocation3 + $0x17c] sm:$0xf]
        %v3567 = vld [vmem:[#allocation3 + $0x180] sm:$0xf]
        %v3568 = vld [vmem:[#allocation3 + $0x184] sm:$0xf]
        %v3569 = vld [vmem:[#allocation3 + $0x188] sm:$0xf]
        %v3570 = vld [vmem:[#allocation3 + $0x18c] sm:$0xf]
        %v3571 = vld [vmem:[#allocation3 + $0x190] sm:$0xf]
        %v3572 = vld [vmem:[#allocation3 + $0x194] sm:$0xf]
        %v3573 = vld [vmem:[#allocation3 + $0x198] sm:$0xf]
        %v3574 = vld [vmem:[#allocation3 + $0x19c] sm:$0xf]
        %v3575 = vld [vmem:[#allocation3 + $0x1a0] sm:$0xf]
        %v3576 = vld [vmem:[#allocation3 + $0x1a4] sm:$0xf]
        %v3577 = vld [vmem:[#allocation3 + $0x1a8] sm:$0xf]
        %v3578 = vld [vmem:[#allocation3 + $0x1ac] sm:$0xf]
        %v3579 = vld [vmem:[#allocation3 + $0x1b0] sm:$0xf]
        %v3580 = vld [vmem:[#allocation3 + $0x1b4] sm:$0xf]
        %v3581 = vld [vmem:[#allocation3 + $0x1b8] sm:$0xf]
        %v3582 = vld [vmem:[#allocation3 + $0x1bc] sm:$0xf]
        %v3583 = vld [vmem:[#allocation3 + $0x1c0] sm:$0xf]
        %v3584 = vld [vmem:[#allocation3 + $0x1c4] sm:$0xf]
        %v3585 = vld [vmem:[#allocation3 + $0x1c8] sm:$0xf]
        %v3586 = vld [vmem:[#allocation3 + $0x1cc] sm:$0xf]
        %v3587 = vld [vmem:[#allocation3 + $0x1d0] sm:$0xf]
        %v3588 = vld [vmem:[#allocation3 + $0x1d4] sm:$0xf]
        %v3589 = vld [vmem:[#allocation3 + $0x1d8] sm:$0xf]
        %v3590 = vld [vmem:[#allocation3 + $0x1dc] sm:$0xf]
        %v3591 = vld [vmem:[#allocation3 + $0x1e0] sm:$0xf]
        %v3592 = vld [vmem:[#allocation3 + $0x1e4] sm:$0xf]
        %v3593 = vld [vmem:[#allocation3 + $0x1e8] sm:$0xf]
        %v3594 = vld [vmem:[#allocation3 + $0x1ec] sm:$0xf]
        %v3595 = vld [vmem:[#allocation3 + $0x1f0] sm:$0xf]
        %v3596 = vld [vmem:[#allocation3 + $0x1f4] sm:$0xf]
        %v3597 = vld [vmem:[#allocation3 + $0x1f8] sm:$0xf]
        %v3598 = vld [vmem:[#allocation3 + $0x1fc] sm:$0xf]
        %v3599 = vld [vmem:[#allocation3 + $0x200] sm:$0xf]
        %v3600 = vld [vmem:[#allocation3 + $0x204] sm:$0xf]
        %v3601 = vld [vmem:[#allocation3 + $0x208] sm:$0xf]
        %v3602 = vld [vmem:[#allocation3 + $0x20c] sm:$0xf]
        %v3603 = vld [vmem:[#allocation3 + $0x210] sm:$0xf]
        %v3604 = vld [vmem:[#allocation3 + $0x214] sm:$0xf]
        %v3605 = vld [vmem:[#allocation3 + $0x218] sm:$0xf]
        %v3606 = vld [vmem:[#allocation3 + $0x21c] sm:$0xf]
        %v3607 = vld [vmem:[#allocation3 + $0x220] sm:$0xf]
        %v3608 = vld [vmem:[#allocation3 + $0x224] sm:$0xf]
        %v3609 = vld [vmem:[#allocation3 + $0x228] sm:$0xf]
        %v3610 = vld [vmem:[#allocation3 + $0x22c] sm:$0xf]
        %v3611 = vld [vmem:[#allocation3 + $0x230] sm:$0xf]
        %v3612 = vld [vmem:[#allocation3 + $0x234] sm:$0xf]
        %v3613 = vld [vmem:[#allocation3 + $0x238] sm:$0xf]
        %v3614 = vld [vmem:[#allocation3 + $0x23c] sm:$0xf]
        %v3759 = vunpack.c.l.b16 %v3471
        %v3760 = vunpack.c.l.b16 %v3472
        %v3761 = vunpack.c.l.b16 %v3473
        %v3762 = vunpack.c.l.b16 %v3474
        %v3763 = vunpack.c.l.b16 %v3475
        %v3764 = vunpack.c.l.b16 %v3476
        %v3765 = vunpack.c.l.b16 %v3477
        %v3766 = vunpack.c.l.b16 %v3478
        %v3767 = vunpack.c.l.b16 %v3479
        %v3768 = vunpack.c.l.b16 %v3480
        %v3769 = vunpack.c.l.b16 %v3481
        %v3770 = vunpack.c.l.b16 %v3482
        %v3771 = vunpack.c.l.b16 %v3483
        %v3772 = vunpack.c.l.b16 %v3484
        %v3773 = vunpack.c.l.b16 %v3485
        %v3774 = vunpack.c.l.b16 %v3486
        %v3775 = vunpack.c.l.b16 %v3487
        %v3776 = vunpack.c.l.b16 %v3488
        %v3777 = vunpack.c.l.b16 %v3489
        %v3778 = vunpack.c.l.b16 %v3490
        %v3779 = vunpack.c.l.b16 %v3491
        %v3780 = vunpack.c.l.b16 %v3492
        %v3781 = vunpack.c.l.b16 %v3493
        %v3782 = vunpack.c.l.b16 %v3494
        %v3783 = vunpack.c.l.b16 %v3495
        %v3784 = vunpack.c.l.b16 %v3496
        %v3785 = vunpack.c.l.b16 %v3497
        %v3786 = vunpack.c.l.b16 %v3498
        %v3787 = vunpack.c.l.b16 %v3499
        %v3788 = vunpack.c.l.b16 %v3500
        %v3789 = vunpack.c.l.b16 %v3501
        %v3790 = vunpack.c.l.b16 %v3502
        %v3791 = vunpack.c.l.b16 %v3503
        %v3792 = vunpack.c.l.b16 %v3504
        %v3793 = vunpack.c.l.b16 %v3505
        %v3794 = vunpack.c.l.b16 %v3506
        %v3795 = vunpack.c.l.b16 %v3507
        %v3796 = vunpack.c.l.b16 %v3508
        %v3797 = vunpack.c.l.b16 %v3509
        %v3798 = vunpack.c.l.b16 %v3510
        %v3799 = vunpack.c.l.b16 %v3511
        %v3800 = vunpack.c.l.b16 %v3512
        %v3801 = vunpack.c.l.b16 %v3513
        %v3802 = vunpack.c.l.b16 %v3514
        %v3803 = vunpack.c.l.b16 %v3515
        %v3804 = vunpack.c.l.b16 %v3516
        %v3805 = vunpack.c.l.b16 %v3517
        %v3806 = vunpack.c.l.b16 %v3518
        %v3807 = vunpack.c.l.b16 %v3519
        %v3808 = vunpack.c.l.b16 %v3520
        %v3809 = vunpack.c.l.b16 %v3521
        %v3810 = vunpack.c.l.b16 %v3522
        %v3811 = vunpack.c.l.b16 %v3523
        %v3812 = vunpack.c.l.b16 %v3524
        %v3813 = vunpack.c.l.b16 %v3525
        %v3814 = vunpack.c.l.b16 %v3526
        %v3815 = vunpack.c.l.b16 %v3527
        %v3816 = vunpack.c.l.b16 %v3528
        %v3817 = vunpack.c.l.b16 %v3529
        %v3818 = vunpack.c.l.b16 %v3530
        %v3819 = vunpack.c.l.b16 %v3531
        %v3820 = vunpack.c.l.b16 %v3532
        %v3821 = vunpack.c.l.b16 %v3533
        %v3822 = vunpack.c.l.b16 %v3534
        %v3823 = vunpack.c.l.b16 %v3535
        %v3824 = vunpack.c.l.b16 %v3536
        %v3825 = vunpack.c.l.b16 %v3537
        %v3826 = vunpack.c.l.b16 %v3538
        %v3827 = vunpack.c.l.b16 %v3539
        %v3828 = vunpack.c.l.b16 %v3540
        %v3829 = vunpack.c.l.b16 %v3541
        %v3830 = vunpack.c.l.b16 %v3542
        %v3831 = vunpack.c.l.b16 %v3543
        %v3832 = vunpack.c.l.b16 %v3544
        %v3833 = vunpack.c.l.b16 %v3545
        %v3834 = vunpack.c.l.b16 %v3546
        %v3835 = vunpack.c.l.b16 %v3547
        %v3836 = vunpack.c.l.b16 %v3548
        %v3837 = vunpack.c.l.b16 %v3549
        %v3838 = vunpack.c.l.b16 %v3550
        %v3839 = vunpack.c.l.b16 %v3551
        %v3840 = vunpack.c.l.b16 %v3552
        %v3841 = vunpack.c.l.b16 %v3553
        %v3842 = vunpack.c.l.b16 %v3554
        %v3843 = vunpack.c.l.b16 %v3555
        %v3844 = vunpack.c.l.b16 %v3556
        %v3845 = vunpack.c.l.b16 %v3557
        %v3846 = vunpack.c.l.b16 %v3558
        %v3847 = vunpack.c.l.b16 %v3559
        %v3848 = vunpack.c.l.b16 %v3560
        %v3849 = vunpack.c.l.b16 %v3561
        %v3850 = vunpack.c.l.b16 %v3562
        %v3851 = vunpack.c.l.b16 %v3563
        %v3852 = vunpack.c.l.b16 %v3564
        %v3853 = vunpack.c.l.b16 %v3565
        %v3854 = vunpack.c.l.b16 %v3566
        %v3855 = vunpack.c.l.b16 %v3567
        %v3856 = vunpack.c.l.b16 %v3568
        %v3857 = vunpack.c.l.b16 %v3569
        %v3858 = vunpack.c.l.b16 %v3570
        %v3859 = vunpack.c.l.b16 %v3571
        %v3860 = vunpack.c.l.b16 %v3572
        %v3861 = vunpack.c.l.b16 %v3573
        %v3862 = vunpack.c.l.b16 %v3574
        %v3863 = vunpack.c.l.b16 %v3575
        %v3864 = vunpack.c.l.b16 %v3576
        %v3865 = vunpack.c.l.b16 %v3577
        %v3866 = vunpack.c.l.b16 %v3578
        %v3867 = vunpack.c.l.b16 %v3579
        %v3868 = vunpack.c.l.b16 %v3580
        %v3869 = vunpack.c.l.b16 %v3581
        %v3870 = vunpack.c.l.b16 %v3582
        %v3871 = vunpack.c.l.b16 %v3583
        %v3872 = vunpack.c.l.b16 %v3584
        %v3873 = vunpack.c.l.b16 %v3585
        %v3874 = vunpack.c.l.b16 %v3586
        %v3875 = vunpack.c.l.b16 %v3587
        %v3876 = vunpack.c.l.b16 %v3588
        %v3877 = vunpack.c.l.b16 %v3589
        %v3878 = vunpack.c.l.b16 %v3590
        %v3879 = vunpack.c.l.b16 %v3591
        %v3880 = vunpack.c.l.b16 %v3592
        %v3881 = vunpack.c.l.b16 %v3593
        %v3882 = vunpack.c.l.b16 %v3594
        %v3883 = vunpack.c.l.b16 %v3595
        %v3884 = vunpack.c.l.b16 %v3596
        %v3885 = vunpack.c.l.b16 %v3597
        %v3886 = vunpack.c.l.b16 %v3598
        %v3887 = vunpack.c.l.b16 %v3599
        %v3888 = vunpack.c.l.b16 %v3600
        %v3889 = vunpack.c.l.b16 %v3601
        %v3890 = vunpack.c.l.b16 %v3602
        %v3891 = vunpack.c.l.b16 %v3603
        %v3892 = vunpack.c.l.b16 %v3604
        %v3893 = vunpack.c.l.b16 %v3605
        %v3894 = vunpack.c.l.b16 %v3606
        %v3895 = vunpack.c.l.b16 %v3607
        %v3896 = vunpack.c.l.b16 %v3608
        %v3897 = vunpack.c.l.b16 %v3609
        %v3898 = vunpack.c.l.b16 %v3610
        %v3899 = vunpack.c.l.b16 %v3611
        %v3900 = vunpack.c.l.b16 %v3612
        %v3901 = vunpack.c.l.b16 %v3613
        %v3902 = vunpack.c.l.b16 %v3614
        %v3903 = vpack.c.b16 %v3760, %v3759
        %v3904 = vpack.c.b16 %v3762, %v3761
        %v3905 = vpack.c.b16 %v3764, %v3763
        %v3906 = vpack.c.b16 %v3766, %v3765
        %v3907 = vpack.c.b16 %v3768, %v3767
        %v3908 = vpack.c.b16 %v3770, %v3769
        %v3909 = vpack.c.b16 %v3772, %v3771
        %v3910 = vpack.c.b16 %v3774, %v3773
        %v3911 = vpack.c.b16 %v3776, %v3775
        %v3912 = vpack.c.b16 %v3778, %v3777
        %v3913 = vpack.c.b16 %v3780, %v3779
        %v3914 = vpack.c.b16 %v3782, %v3781
        %v3915 = vpack.c.b16 %v3784, %v3783
        %v3916 = vpack.c.b16 %v3786, %v3785
        %v3917 = vpack.c.b16 %v3788, %v3787
        %v3918 = vpack.c.b16 %v3790, %v3789
        %v3919 = vpack.c.b16 %v3792, %v3791
        %v3920 = vpack.c.b16 %v3794, %v3793
        %v3921 = vpack.c.b16 %v3796, %v3795
        %v3922 = vpack.c.b16 %v3798, %v3797
        %v3923 = vpack.c.b16 %v3800, %v3799
        %v3924 = vpack.c.b16 %v3802, %v3801
        %v3925 = vpack.c.b16 %v3804, %v3803
        %v3926 = vpack.c.b16 %v3806, %v3805
        %v3927 = vpack.c.b16 %v3808, %v3807
        %v3928 = vpack.c.b16 %v3810, %v3809
        %v3929 = vpack.c.b16 %v3812, %v3811
        %v3930 = vpack.c.b16 %v3814, %v3813
        %v3931 = vpack.c.b16 %v3816, %v3815
        %v3932 = vpack.c.b16 %v3818, %v3817
        %v3933 = vpack.c.b16 %v3820, %v3819
        %v3934 = vpack.c.b16 %v3822, %v3821
        %v3935 = vpack.c.b16 %v3824, %v3823
        %v3936 = vpack.c.b16 %v3826, %v3825
        %v3937 = vpack.c.b16 %v3828, %v3827
        %v3938 = vpack.c.b16 %v3830, %v3829
        %v3939 = vpack.c.b16 %v3832, %v3831
        %v3940 = vpack.c.b16 %v3834, %v3833
        %v3941 = vpack.c.b16 %v3836, %v3835
        %v3942 = vpack.c.b16 %v3838, %v3837
        %v3943 = vpack.c.b16 %v3840, %v3839
        %v3944 = vpack.c.b16 %v3842, %v3841
        %v3945 = vpack.c.b16 %v3844, %v3843
        %v3946 = vpack.c.b16 %v3846, %v3845
        %v3947 = vpack.c.b16 %v3848, %v3847
        %v3948 = vpack.c.b16 %v3850, %v3849
        %v3949 = vpack.c.b16 %v3852, %v3851
        %v3950 = vpack.c.b16 %v3854, %v3853
        %v3951 = vpack.c.b16 %v3856, %v3855
        %v3952 = vpack.c.b16 %v3858, %v3857
        %v3953 = vpack.c.b16 %v3860, %v3859
        %v3954 = vpack.c.b16 %v3862, %v3861
        %v3955 = vpack.c.b16 %v3864, %v3863
        %v3956 = vpack.c.b16 %v3866, %v3865
        %v3957 = vpack.c.b16 %v3868, %v3867
        %v3958 = vpack.c.b16 %v3870, %v3869
        %v3959 = vpack.c.b16 %v3872, %v3871
        %v3960 = vpack.c.b16 %v3874, %v3873
        %v3961 = vpack.c.b16 %v3876, %v3875
        %v3962 = vpack.c.b16 %v3878, %v3877
        %v3963 = vpack.c.b16 %v3880, %v3879
        %v3964 = vpack.c.b16 %v3882, %v3881
        %v3965 = vpack.c.b16 %v3884, %v3883
        %v3966 = vpack.c.b16 %v3886, %v3885
        %v3967 = vpack.c.b16 %v3888, %v3887
        %v3968 = vpack.c.b16 %v3890, %v3889
        %v3969 = vpack.c.b16 %v3892, %v3891
        %v3970 = vpack.c.b16 %v3894, %v3893
        %v3971 = vpack.c.b16 %v3896, %v3895
        %v3972 = vpack.c.b16 %v3898, %v3897
        %v3973 = vpack.c.b16 %v3900, %v3899
        %v3974 = vpack.c.b16 %v3902, %v3901
        %4047 = vmatprep.subr.bf16.mxu0 0
        %4048 = vmatpush1.bf16.msra.mxu0 %v3910
        %4049 = vmatprep.subr.bf16.mxu0 0
        %4050 = vmatpush1.bf16.msra.mxu0 %v3909
        %4051 = vmatprep.subr.bf16.mxu0 0
        %4052 = vmatpush1.bf16.msra.mxu0 %v3908
        %4053 = vmatprep.subr.bf16.mxu0 0
        %4054 = vmatpush1.bf16.msra.mxu0 %v3907
        %4055 = vmatprep.subr.bf16.mxu0 0
        %4056 = vmatpush1.bf16.msra.mxu0 %v3906
        %4057 = vmatprep.subr.bf16.mxu0 0
        %4058 = vmatpush1.bf16.msra.mxu0 %v3905
        %4059 = vmatprep.subr.bf16.mxu0 0
        %4060 = vmatpush1.bf16.msra.mxu0 %v3904
        %4061 = vmatprep.subr.bf16.mxu0 0
        %4062 = vmatpush1.bf16.msra.mxu0 %v3903
        %4063 = vmatprep.subr.bf16.mxu0 0
        %4064 = vmatpush2.bf16.msra.mxu0 %v3918
        %4065 = vmatprep.subr.bf16.mxu0 0
        %4066 = vmatpush2.bf16.msra.mxu0 %v3917
        %4067 = vmatprep.subr.bf16.mxu0 0
        %4068 = vmatpush2.bf16.msra.mxu0 %v3916
        %4069 = vmatprep.subr.bf16.mxu0 0
        %4070 = vmatpush2.bf16.msra.mxu0 %v3915
        %4071 = vmatprep.subr.bf16.mxu0 0
        %4072 = vmatpush2.bf16.msra.mxu0 %v3914
        %4073 = vmatprep.subr.bf16.mxu0 0
        %4074 = vmatpush2.bf16.msra.mxu0 %v3913
        %4075 = vmatprep.subr.bf16.mxu0 0
        %4076 = vmatpush2.bf16.msra.mxu0 %v3912
        %4077 = vmatprep.subr.bf16.mxu0 0
        %4078 = vmatpush2.bf16.msra.mxu0 %v3911
        %4079 = vmatprep.mubr.bf16.mxu0 %v3158
        %4080 = vmatmul.mubr.bf16.gmra.mxu0 %v3067
        %v4081 = vpop.f32.mrf.mxu0
        %v4082 = vadd.f32 0.0, %v4081
        %v4083 = vpop.f32.mrf.mxu0
        %v4084 = vpop.f32.mrf.mxu0
        %v4085 = vadd.f32 0.0, %v4084
        %v4086 = vpop.f32.mrf.mxu0
        %4087 = vmatprep.mubr.bf16.mxu0 %v3170
        %4088 = vmatmul.mubr.bf16.gmra.mxu0 %v3068
        %v4089 = vpop.f32.mrf.mxu0
        %v4090 = vadd.f32 0.0, %v4089
        %v4091 = vpop.f32.mrf.mxu0
        %v4092 = vpop.f32.mrf.mxu0
        %v4093 = vadd.f32 0.0, %v4092
        %v4094 = vpop.f32.mrf.mxu0
        %4095 = vmatprep.mubr.bf16.mxu0 %v3182
        %4096 = vmatmul.mubr.bf16.gmra.mxu0 %v3069
        %v4097 = vpop.f32.mrf.mxu0
        %v4098 = vadd.f32 0.0, %v4097
        %v4099 = vpop.f32.mrf.mxu0
        %v4100 = vpop.f32.mrf.mxu0
        %v4101 = vadd.f32 0.0, %v4100
        %v4102 = vpop.f32.mrf.mxu0
        %4103 = vmatprep.mubr.bf16.mxu0 %v3194
        %4104 = vmatmul.mubr.bf16.gmra.mxu0 %v3070
        %v4105 = vpop.f32.mrf.mxu0
        %v4106 = vadd.f32 0.0, %v4105
        %v4107 = vpop.f32.mrf.mxu0
        %v4108 = vpop.f32.mrf.mxu0
        %v4109 = vadd.f32 0.0, %v4108
        %v4110 = vpop.f32.mrf.mxu0
        %4111 = vmatprep.mubr.bf16.mxu0 %v3206
        %4112 = vmatmul.mubr.bf16.gmra.mxu0 %v3071
        %v4113 = vpop.f32.mrf.mxu0
        %v4114 = vadd.f32 0.0, %v4113
        %v4115 = vpop.f32.mrf.mxu0
        %v4116 = vpop.f32.mrf.mxu0
        %v4117 = vadd.f32 0.0, %v4116
        %v4118 = vpop.f32.mrf.mxu0
        %4119 = vmatprep.mubr.bf16.mxu0 %v3218
        %4120 = vmatmul.mubr.bf16.gmra.mxu0 %v3072
        %v4121 = vpop.f32.mrf.mxu0
        %v4122 = vadd.f32 0.0, %v4121
        %v4123 = vpop.f32.mrf.mxu0
        %v4124 = vpop.f32.mrf.mxu0
        %v4125 = vadd.f32 0.0, %v4124
        %v4126 = vpop.f32.mrf.mxu0
        %4127 = vmatprep.mubr.bf16.mxu0 %v3230
        %4128 = vmatmul.mubr.bf16.gmra.mxu0 %v3073
        %v4129 = vpop.f32.mrf.mxu0
        %v4130 = vadd.f32 0.0, %v4129
        %v4131 = vpop.f32.mrf.mxu0
        %v4132 = vpop.f32.mrf.mxu0
        %v4133 = vadd.f32 0.0, %v4132
        %v4134 = vpop.f32.mrf.mxu0
        %4135 = vmatprep.mubr.bf16.mxu0 %v3242
        %4136 = vmatmul.mubr.bf16.gmra.mxu0 %v3074
        %v4137 = vpop.f32.mrf.mxu0
        %v4138 = vadd.f32 0.0, %v4137
        %v4139 = vpop.f32.mrf.mxu0
        %v4140 = vpop.f32.mrf.mxu0
        %v4141 = vadd.f32 0.0, %v4140
        %v4142 = vpop.f32.mrf.mxu0
        %4143 = vmatprep.mubr.bf16.mxu0 %v3254
        %4144 = vmatmul.mubr.bf16.gmra.mxu0 %v3075
        %v4145 = vpop.f32.mrf.mxu0
        %v4146 = vadd.f32 0.0, %v4145
        %v4147 = vpop.f32.mrf.mxu0
        %v4148 = vpop.f32.mrf.mxu0
        %v4149 = vadd.f32 0.0, %v4148
        %v4150 = vpop.f32.mrf.mxu0
        %4151 = vmatprep.mubr.bf16.mxu0 %v3266
        %4152 = vmatmul.mubr.bf16.gmra.mxu0 %v3076
        %v4153 = vpop.f32.mrf.mxu0
        %v4154 = vadd.f32 0.0, %v4153
        %v4155 = vpop.f32.mrf.mxu0
        %v4156 = vpop.f32.mrf.mxu0
        %v4157 = vadd.f32 0.0, %v4156
        %v4158 = vpop.f32.mrf.mxu0
        %4159 = vmatprep.mubr.bf16.mxu0 %v3278
        %4160 = vmatmul.mubr.bf16.gmra.mxu0 %v3077
        %v4161 = vpop.f32.mrf.mxu0
        %v4162 = vadd.f32 0.0, %v4161
        %v4163 = vpop.f32.mrf.mxu0
        %v4164 = vpop.f32.mrf.mxu0
        %v4165 = vadd.f32 0.0, %v4164
        %v4166 = vpop.f32.mrf.mxu0
        %4167 = vmatprep.mubr.bf16.mxu0 %v3290
        %4168 = vmatmul.mubr.bf16.gmra.mxu0 %v3078
        %v4169 = vpop.f32.mrf.mxu0
        %v4170 = vadd.f32 0.0, %v4169
        %v4171 = vpop.f32.mrf.mxu0
        %v4172 = vpop.f32.mrf.mxu0
        %v4173 = vadd.f32 0.0, %v4172
        %v4174 = vpop.f32.mrf.mxu0
        %4175 = vmatprep.mubr.bf16.mxu0 %v3302
        %4176 = vmatmul.mubr.bf16.gmra.mxu0 %v3079
        %v4177 = vpop.f32.mrf.mxu0
        %v4178 = vadd.f32 0.0, %v4177
        %v4179 = vpop.f32.mrf.mxu0
        %v4180 = vpop.f32.mrf.mxu0
        %v4181 = vadd.f32 0.0, %v4180
        %v4182 = vpop.f32.mrf.mxu0
        %4183 = vmatprep.mubr.bf16.mxu0 %v3314
        %4184 = vmatmul.mubr.bf16.gmra.mxu0 %v3080
        %v4185 = vpop.f32.mrf.mxu0
        %v4186 = vadd.f32 0.0, %v4185
        %v4187 = vpop.f32.mrf.mxu0
        %v4188 = vpop.f32.mrf.mxu0
        %v4189 = vadd.f32 0.0, %v4188
        %v4190 = vpop.f32.mrf.mxu0
        %4191 = vmatprep.mubr.bf16.mxu0 %v3326
        %4192 = vmatmul.mubr.bf16.gmra.mxu0 %v3081
        %v4193 = vpop.f32.mrf.mxu0
        %v4194 = vadd.f32 0.0, %v4193
        %v4195 = vpop.f32.mrf.mxu0
        %v4196 = vpop.f32.mrf.mxu0
        %v4197 = vadd.f32 0.0, %v4196
        %v4198 = vpop.f32.mrf.mxu0
        %4199 = vmatprep.mubr.bf16.mxu0 %v3338
        %4200 = vmatmul.mubr.bf16.gmra.mxu0 %v3082
        %v4201 = vpop.f32.mrf.mxu0
        %v4202 = vadd.f32 0.0, %v4201
        %v4203 = vpop.f32.mrf.mxu0
        %v4204 = vpop.f32.mrf.mxu0
        %v4205 = vadd.f32 0.0, %v4204
        %v4206 = vpop.f32.mrf.mxu0
        %4207 = vdwg.mxu0
        %4208 = vmatprep.subr.bf16.mxu0 0
        %4209 = vmatpush1.bf16.msra.mxu0 %v3926
        %4210 = vmatprep.subr.bf16.mxu0 0
        %4211 = vmatpush1.bf16.msra.mxu0 %v3925
        %4212 = vmatprep.subr.bf16.mxu0 0
        %4213 = vmatpush1.bf16.msra.mxu0 %v3924
        %4214 = vmatprep.subr.bf16.mxu0 0
        %4215 = vmatpush1.bf16.msra.mxu0 %v3923
        %4216 = vmatprep.subr.bf16.mxu0 0
        %4217 = vmatpush1.bf16.msra.mxu0 %v3922
        %4218 = vmatprep.subr.bf16.mxu0 0
        %4219 = vmatpush1.bf16.msra.mxu0 %v3921
        %4220 = vmatprep.subr.bf16.mxu0 0
        %4221 = vmatpush1.bf16.msra.mxu0 %v3920
        %4222 = vmatprep.subr.bf16.mxu0 0
        %4223 = vmatpush1.bf16.msra.mxu0 %v3919
        %4224 = vmatprep.subr.bf16.mxu0 0
        %4225 = vmatpush2.bf16.msra.mxu0 %v3934
        %4226 = vmatprep.subr.bf16.mxu0 0
        %4227 = vmatpush2.bf16.msra.mxu0 %v3933
        %4228 = vmatprep.subr.bf16.mxu0 0
        %4229 = vmatpush2.bf16.msra.mxu0 %v3932
        %4230 = vmatprep.subr.bf16.mxu0 0
        %4231 = vmatpush2.bf16.msra.mxu0 %v3931
        %4232 = vmatprep.subr.bf16.mxu0 0
        %4233 = vmatpush2.bf16.msra.mxu0 %v3930
        %4234 = vmatprep.subr.bf16.mxu0 0
        %4235 = vmatpush2.bf16.msra.mxu0 %v3929
        %4236 = vmatprep.subr.bf16.mxu0 0
        %4237 = vmatpush2.bf16.msra.mxu0 %v3928
        %4238 = vmatprep.subr.bf16.mxu0 0
        %4239 = vmatpush2.bf16.msra.mxu0 %v3927
        %4240 = vmatprep.mubr.bf16.mxu0 %v3068
        %4241 = vmatmul.mubr.bf16.gmra.mxu0 %v3357
        %v4242 = vpop.f32.mrf.mxu0
        %v4243 = vadd.f32 %v4082, %v4242
        %v4244 = vpop.f32.mrf.mxu0
        %v4245 = vpop.f32.mrf.mxu0
        %v4246 = vadd.f32 %v4085, %v4245
        %v4247 = vpop.f32.mrf.mxu0
        %4248 = vmatprep.mubr.bf16.mxu0 %v3069
        %4249 = vmatmul.mubr.bf16.gmra.mxu0 %v3360
        %v4250 = vpop.f32.mrf.mxu0
        %v4251 = vadd.f32 %v4090, %v4250
        %v4252 = vpop.f32.mrf.mxu0
        %v4253 = vpop.f32.mrf.mxu0
        %v4254 = vadd.f32 %v4093, %v4253
        %v4255 = vpop.f32.mrf.mxu0
        %4256 = vmatprep.mubr.bf16.mxu0 %v3070
        %4257 = vmatmul.mubr.bf16.gmra.mxu0 %v3363
        %v4258 = vpop.f32.mrf.mxu0
        %v4259 = vadd.f32 %v4098, %v4258
        %v4260 = vpop.f32.mrf.mxu0
        %v4261 = vpop.f32.mrf.mxu0
        %v4262 = vadd.f32 %v4101, %v4261
        %v4263 = vpop.f32.mrf.mxu0
        %4264 = vmatprep.mubr.bf16.mxu0 %v3071
        %4265 = vmatmul.mubr.bf16.gmra.mxu0 %v3366
        %v4266 = vpop.f32.mrf.mxu0
        %v4267 = vadd.f32 %v4106, %v4266
        %v4268 = vpop.f32.mrf.mxu0
        %v4269 = vpop.f32.mrf.mxu0
        %v4270 = vadd.f32 %v4109, %v4269
        %v4271 = vpop.f32.mrf.mxu0
        %4272 = vmatprep.mubr.bf16.mxu0 %v3072
        %4273 = vmatmul.mubr.bf16.gmra.mxu0 %v3369
        %v4274 = vpop.f32.mrf.mxu0
        %v4275 = vadd.f32 %v4114, %v4274
        %v4276 = vpop.f32.mrf.mxu0
        %v4277 = vpop.f32.mrf.mxu0
        %v4278 = vadd.f32 %v4117, %v4277
        %v4279 = vpop.f32.mrf.mxu0
        %4280 = vmatprep.mubr.bf16.mxu0 %v3073
        %4281 = vmatmul.mubr.bf16.gmra.mxu0 %v3372
        %v4282 = vpop.f32.mrf.mxu0
        %v4283 = vadd.f32 %v4122, %v4282
        %v4284 = vpop.f32.mrf.mxu0
        %v4285 = vpop.f32.mrf.mxu0
        %v4286 = vadd.f32 %v4125, %v4285
        %v4287 = vpop.f32.mrf.mxu0
        %4288 = vmatprep.mubr.bf16.mxu0 %v3074
        %4289 = vmatmul.mubr.bf16.gmra.mxu0 %v3375
        %v4290 = vpop.f32.mrf.mxu0
        %v4291 = vadd.f32 %v4130, %v4290
        %v4292 = vpop.f32.mrf.mxu0
        %v4293 = vpop.f32.mrf.mxu0
        %v4294 = vadd.f32 %v4133, %v4293
        %v4295 = vpop.f32.mrf.mxu0
        %4296 = vmatprep.mubr.bf16.mxu0 %v3075
        %4297 = vmatmul.mubr.bf16.gmra.mxu0 %v3378
        %v4298 = vpop.f32.mrf.mxu0
        %v4299 = vadd.f32 %v4138, %v4298
        %v4300 = vpop.f32.mrf.mxu0
        %v4301 = vpop.f32.mrf.mxu0
        %v4302 = vadd.f32 %v4141, %v4301
        %v4303 = vpop.f32.mrf.mxu0
        %4304 = vmatprep.mubr.bf16.mxu0 %v3076
        %4305 = vmatmul.mubr.bf16.gmra.mxu0 %v3381
        %v4306 = vpop.f32.mrf.mxu0
        %v4307 = vadd.f32 %v4146, %v4306
        %v4308 = vpop.f32.mrf.mxu0
        %v4309 = vpop.f32.mrf.mxu0
        %v4310 = vadd.f32 %v4149, %v4309
        %v4311 = vpop.f32.mrf.mxu0
        %4312 = vmatprep.mubr.bf16.mxu0 %v3077
        %4313 = vmatmul.mubr.bf16.gmra.mxu0 %v3384
        %v4314 = vpop.f32.mrf.mxu0
        %v4315 = vadd.f32 %v4154, %v4314
        %v4316 = vpop.f32.mrf.mxu0
        %v4317 = vpop.f32.mrf.mxu0
        %v4318 = vadd.f32 %v4157, %v4317
        %v4319 = vpop.f32.mrf.mxu0
        %4320 = vmatprep.mubr.bf16.mxu0 %v3078
        %4321 = vmatmul.mubr.bf16.gmra.mxu0 %v3387
        %v4322 = vpop.f32.mrf.mxu0
        %v4323 = vadd.f32 %v4162, %v4322
        %v4324 = vpop.f32.mrf.mxu0
        %v4325 = vpop.f32.mrf.mxu0
        %v4326 = vadd.f32 %v4165, %v4325
        %v4327 = vpop.f32.mrf.mxu0
        %4328 = vmatprep.mubr.bf16.mxu0 %v3079
        %4329 = vmatmul.mubr.bf16.gmra.mxu0 %v3390
        %v4330 = vpop.f32.mrf.mxu0
        %v4331 = vadd.f32 %v4170, %v4330
        %v4332 = vpop.f32.mrf.mxu0
        %v4333 = vpop.f32.mrf.mxu0
        %v4334 = vadd.f32 %v4173, %v4333
        %v4335 = vpop.f32.mrf.mxu0
        %4336 = vmatprep.mubr.bf16.mxu0 %v3080
        %4337 = vmatmul.mubr.bf16.gmra.mxu0 %v3393
        %v4338 = vpop.f32.mrf.mxu0
        %v4339 = vadd.f32 %v4178, %v4338
        %v4340 = vpop.f32.mrf.mxu0
        %v4341 = vpop.f32.mrf.mxu0
        %v4342 = vadd.f32 %v4181, %v4341
        %v4343 = vpop.f32.mrf.mxu0
        %4344 = vmatprep.mubr.bf16.mxu0 %v3081
        %4345 = vmatmul.mubr.bf16.gmra.mxu0 %v3396
        %v4346 = vpop.f32.mrf.mxu0
        %v4347 = vadd.f32 %v4186, %v4346
        %v4348 = vpop.f32.mrf.mxu0
        %v4349 = vpop.f32.mrf.mxu0
        %v4350 = vadd.f32 %v4189, %v4349
        %v4351 = vpop.f32.mrf.mxu0
        %4352 = vmatprep.mubr.bf16.mxu0 %v3082
        %4353 = vmatmul.mubr.bf16.gmra.mxu0 %v3399
        %v4354 = vpop.f32.mrf.mxu0
        %v4355 = vadd.f32 %v4194, %v4354
        %v4356 = vpop.f32.mrf.mxu0
        %v4357 = vpop.f32.mrf.mxu0
        %v4358 = vadd.f32 %v4197, %v4357
        %v4359 = vpop.f32.mrf.mxu0
        %4360 = vmatprep.mubr.bf16.mxu0 %v3423
        %4361 = vmatmul.mubr.bf16.gmra.mxu0 %v3402
        %v4362 = vpop.f32.mrf.mxu0
        %v4363 = vadd.f32 %v4202, %v4362
        %v4364 = vpop.f32.mrf.mxu0
        %v4365 = vpop.f32.mrf.mxu0
        %v4366 = vadd.f32 %v4205, %v4365
        %v4367 = vpop.f32.mrf.mxu0
        %4368 = vdwg.mxu0
        %4369 = vmatprep.subr.bf16.mxu0 0
        %4370 = vmatpush1.bf16.msra.mxu0 %v3942
        %4371 = vmatprep.subr.bf16.mxu0 0
        %4372 = vmatpush1.bf16.msra.mxu0 %v3941
        %4373 = vmatprep.subr.bf16.mxu0 0
        %4374 = vmatpush1.bf16.msra.mxu0 %v3940
        %4375 = vmatprep.subr.bf16.mxu0 0
        %4376 = vmatpush1.bf16.msra.mxu0 %v3939
        %4377 = vmatprep.subr.bf16.mxu0 0
        %4378 = vmatpush1.bf16.msra.mxu0 %v3938
        %4379 = vmatprep.subr.bf16.mxu0 0
        %4380 = vmatpush1.bf16.msra.mxu0 %v3937
        %4381 = vmatprep.subr.bf16.mxu0 0
        %4382 = vmatpush1.bf16.msra.mxu0 %v3936
        %4383 = vmatprep.subr.bf16.mxu0 0
        %4384 = vmatpush1.bf16.msra.mxu0 %v3935
        %4385 = vmatprep.subr.bf16.mxu0 0
        %4386 = vmatpush2.bf16.msra.mxu0 %v3950
        %4387 = vmatprep.subr.bf16.mxu0 0
        %4388 = vmatpush2.bf16.msra.mxu0 %v3949
        %4389 = vmatprep.subr.bf16.mxu0 0
        %4390 = vmatpush2.bf16.msra.mxu0 %v3948
        %4391 = vmatprep.subr.bf16.mxu0 0
        %4392 = vmatpush2.bf16.msra.mxu0 %v3947
        %4393 = vmatprep.subr.bf16.mxu0 0
        %4394 = vmatpush2.bf16.msra.mxu0 %v3946
        %4395 = vmatprep.subr.bf16.mxu0 0
        %4396 = vmatpush2.bf16.msra.mxu0 %v3945
        %4397 = vmatprep.subr.bf16.mxu0 0
        %4398 = vmatpush2.bf16.msra.mxu0 %v3944
        %4399 = vmatprep.subr.bf16.mxu0 0
        %4400 = vmatpush2.bf16.msra.mxu0 %v3943
        %4401 = vmatprep.mubr.bf16.mxu0 %v3360
        %4402 = vmatmul.mubr.bf16.gmra.mxu0 %v3170
        %v4403 = vpop.f32.mrf.mxu0
        %v4404 = vadd.f32 %v4243, %v4403
        %v4405 = vpop.f32.mrf.mxu0
        %v4406 = vpop.f32.mrf.mxu0
        %v4407 = vadd.f32 %v4246, %v4406
        %v4408 = vpop.f32.mrf.mxu0
        %4409 = vmatprep.mubr.bf16.mxu0 %v3363
        %4410 = vmatmul.mubr.bf16.gmra.mxu0 %v3182
        %v4411 = vpop.f32.mrf.mxu0
        %v4412 = vadd.f32 %v4251, %v4411
        %v4413 = vpop.f32.mrf.mxu0
        %v4414 = vpop.f32.mrf.mxu0
        %v4415 = vadd.f32 %v4254, %v4414
        %v4416 = vpop.f32.mrf.mxu0
        %4417 = vmatprep.mubr.bf16.mxu0 %v3366
        %4418 = vmatmul.mubr.bf16.gmra.mxu0 %v3194
        %v4419 = vpop.f32.mrf.mxu0
        %v4420 = vadd.f32 %v4259, %v4419
        %v4421 = vpop.f32.mrf.mxu0
        %v4422 = vpop.f32.mrf.mxu0
        %v4423 = vadd.f32 %v4262, %v4422
        %v4424 = vpop.f32.mrf.mxu0
        %4425 = vmatprep.mubr.bf16.mxu0 %v3369
        %4426 = vmatmul.mubr.bf16.gmra.mxu0 %v3206
        %v4427 = vpop.f32.mrf.mxu0
        %v4428 = vadd.f32 %v4267, %v4427
        %v4429 = vpop.f32.mrf.mxu0
        %v4430 = vpop.f32.mrf.mxu0
        %v4431 = vadd.f32 %v4270, %v4430
        %v4432 = vpop.f32.mrf.mxu0
        %4433 = vmatprep.mubr.bf16.mxu0 %v3372
        %4434 = vmatmul.mubr.bf16.gmra.mxu0 %v3218
        %v4435 = vpop.f32.mrf.mxu0
        %v4436 = vadd.f32 %v4275, %v4435
        %v4437 = vpop.f32.mrf.mxu0
        %v4438 = vpop.f32.mrf.mxu0
        %v4439 = vadd.f32 %v4278, %v4438
        %v4440 = vpop.f32.mrf.mxu0
        %4441 = vmatprep.mubr.bf16.mxu0 %v3375
        %4442 = vmatmul.mubr.bf16.gmra.mxu0 %v3230
        %v4443 = vpop.f32.mrf.mxu0
        %v4444 = vadd.f32 %v4283, %v4443
        %v4445 = vpop.f32.mrf.mxu0
        %v4446 = vpop.f32.mrf.mxu0
        %v4447 = vadd.f32 %v4286, %v4446
        %v4448 = vpop.f32.mrf.mxu0
        %4449 = vmatprep.mubr.bf16.mxu0 %v3378
        %4450 = vmatmul.mubr.bf16.gmra.mxu0 %v3242
        %v4451 = vpop.f32.mrf.mxu0
        %v4452 = vadd.f32 %v4291, %v4451
        %v4453 = vpop.f32.mrf.mxu0
        %v4454 = vpop.f32.mrf.mxu0
        %v4455 = vadd.f32 %v4294, %v4454
        %v4456 = vpop.f32.mrf.mxu0
        %4457 = vmatprep.mubr.bf16.mxu0 %v3381
        %4458 = vmatmul.mubr.bf16.gmra.mxu0 %v3254
        %v4459 = vpop.f32.mrf.mxu0
        %v4460 = vadd.f32 %v4299, %v4459
        %v4461 = vpop.f32.mrf.mxu0
        %v4462 = vpop.f32.mrf.mxu0
        %v4463 = vadd.f32 %v4302, %v4462
        %v4464 = vpop.f32.mrf.mxu0
        %4465 = vmatprep.mubr.bf16.mxu0 %v3384
        %4466 = vmatmul.mubr.bf16.gmra.mxu0 %v3266
        %v4467 = vpop.f32.mrf.mxu0
        %v4468 = vadd.f32 %v4307, %v4467
        %v4469 = vpop.f32.mrf.mxu0
        %v4470 = vpop.f32.mrf.mxu0
        %v4471 = vadd.f32 %v4310, %v4470
        %v4472 = vpop.f32.mrf.mxu0
        %4473 = vmatprep.mubr.bf16.mxu0 %v3387
        %4474 = vmatmul.mubr.bf16.gmra.mxu0 %v3278
        %v4475 = vpop.f32.mrf.mxu0
        %v4476 = vadd.f32 %v4315, %v4475
        %v4477 = vpop.f32.mrf.mxu0
        %v4478 = vpop.f32.mrf.mxu0
        %v4479 = vadd.f32 %v4318, %v4478
        %v4480 = vpop.f32.mrf.mxu0
        %4481 = vmatprep.mubr.bf16.mxu0 %v3390
        %4482 = vmatmul.mubr.bf16.gmra.mxu0 %v3290
        %v4483 = vpop.f32.mrf.mxu0
        %v4484 = vadd.f32 %v4323, %v4483
        %v4485 = vpop.f32.mrf.mxu0
        %v4486 = vpop.f32.mrf.mxu0
        %v4487 = vadd.f32 %v4326, %v4486
        %v4488 = vpop.f32.mrf.mxu0
        %4489 = vmatprep.mubr.bf16.mxu0 %v3393
        %4490 = vmatmul.mubr.bf16.gmra.mxu0 %v3302
        %v4491 = vpop.f32.mrf.mxu0
        %v4492 = vadd.f32 %v4331, %v4491
        %v4493 = vpop.f32.mrf.mxu0
        %v4494 = vpop.f32.mrf.mxu0
        %v4495 = vadd.f32 %v4334, %v4494
        %v4496 = vpop.f32.mrf.mxu0
        %4497 = vmatprep.mubr.bf16.mxu0 %v3396
        %4498 = vmatmul.mubr.bf16.gmra.mxu0 %v3314
        %v4499 = vpop.f32.mrf.mxu0
        %v4500 = vadd.f32 %v4339, %v4499
        %v4501 = vpop.f32.mrf.mxu0
        %v4502 = vpop.f32.mrf.mxu0
        %v4503 = vadd.f32 %v4342, %v4502
        %v4504 = vpop.f32.mrf.mxu0
        %4505 = vmatprep.mubr.bf16.mxu0 %v3399
        %4506 = vmatmul.mubr.bf16.gmra.mxu0 %v3326
        %v4507 = vpop.f32.mrf.mxu0
        %v4508 = vadd.f32 %v4347, %v4507
        %v4509 = vpop.f32.mrf.mxu0
        %v4510 = vpop.f32.mrf.mxu0
        %v4511 = vadd.f32 %v4350, %v4510
        %v4512 = vpop.f32.mrf.mxu0
        %4513 = vmatprep.mubr.bf16.mxu0 %v3402
        %4514 = vmatmul.mubr.bf16.gmra.mxu0 %v3338
        %v4515 = vpop.f32.mrf.mxu0
        %v4516 = vadd.f32 %v4355, %v4515
        %v4517 = vpop.f32.mrf.mxu0
        %v4518 = vpop.f32.mrf.mxu0
        %v4519 = vadd.f32 %v4358, %v4518
        %v4520 = vpop.f32.mrf.mxu0
        %4521 = vmatprep.mubr.bf16.mxu0 %v3443
        %4522 = vmatmul.mubr.bf16.gmra.mxu0 %v3439
        %v4523 = vpop.f32.mrf.mxu0
        %v4524 = vadd.f32 %v4363, %v4523
        %v4525 = vpop.f32.mrf.mxu0
        %v4526 = vpop.f32.mrf.mxu0
        %v4527 = vadd.f32 %v4366, %v4526
        %v4528 = vpop.f32.mrf.mxu0
        %4529 = vdwg.mxu0
        %4530 = vmatprep.subr.bf16.mxu0 0
        %4531 = vmatpush1.bf16.msra.mxu0 %v3958
        %4532 = vmatprep.subr.bf16.mxu0 0
        %4533 = vmatpush1.bf16.msra.mxu0 %v3957
        %4534 = vmatprep.subr.bf16.mxu0 0
        %4535 = vmatpush1.bf16.msra.mxu0 %v3956
        %4536 = vmatprep.subr.bf16.mxu0 0
        %4537 = vmatpush1.bf16.msra.mxu0 %v3955
        %4538 = vmatprep.subr.bf16.mxu0 0
        %4539 = vmatpush1.bf16.msra.mxu0 %v3954
        %4540 = vmatprep.subr.bf16.mxu0 0
        %4541 = vmatpush1.bf16.msra.mxu0 %v3953
        %4542 = vmatprep.subr.bf16.mxu0 0
        %4543 = vmatpush1.bf16.msra.mxu0 %v3952
        %4544 = vmatprep.subr.bf16.mxu0 0
        %4545 = vmatpush1.bf16.msra.mxu0 %v3951
        %4546 = vmatprep.subr.bf16.mxu0 0
        %4547 = vmatpush2.bf16.msra.mxu0 %v3966
        %4548 = vmatprep.subr.bf16.mxu0 0
        %4549 = vmatpush2.bf16.msra.mxu0 %v3965
        %4550 = vmatprep.subr.bf16.mxu0 0
        %4551 = vmatpush2.bf16.msra.mxu0 %v3964
        %4552 = vmatprep.subr.bf16.mxu0 0
        %4553 = vmatpush2.bf16.msra.mxu0 %v3963
        %4554 = vmatprep.subr.bf16.mxu0 0
        %4555 = vmatpush2.bf16.msra.mxu0 %v3962
        %4556 = vmatprep.subr.bf16.mxu0 0
        %4557 = vmatpush2.bf16.msra.mxu0 %v3961
        %4558 = vmatprep.subr.bf16.mxu0 0
        %4559 = vmatpush2.bf16.msra.mxu0 %v3960
        %4560 = vmatprep.subr.bf16.mxu0 0
        %4561 = vmatpush2.bf16.msra.mxu0 %v3959
        %4562 = vmatprep.mubr.bf16.mxu0 %v3182
        %4563 = vmatmul.mubr.bf16.gmra.mxu0 %v3069
        %v4564 = vpop.f32.mrf.mxu0
        %v4565 = vadd.f32 %v4404, %v4564
        %v4566 = vpop.f32.mrf.mxu0
        %v4567 = vpop.f32.mrf.mxu0
        %v4568 = vadd.f32 %v4407, %v4567
        %v4569 = vpop.f32.mrf.mxu0
        %4570 = vmatprep.mubr.bf16.mxu0 %v3194
        %4571 = vmatmul.mubr.bf16.gmra.mxu0 %v3070
        %v4572 = vpop.f32.mrf.mxu0
        %v4573 = vadd.f32 %v4412, %v4572
        %v4574 = vpop.f32.mrf.mxu0
        %v4575 = vpop.f32.mrf.mxu0
        %v4576 = vadd.f32 %v4415, %v4575
        %v4577 = vpop.f32.mrf.mxu0
        %4578 = vmatprep.mubr.bf16.mxu0 %v3206
        %4579 = vmatmul.mubr.bf16.gmra.mxu0 %v3071
        %v4580 = vpop.f32.mrf.mxu0
        %v4581 = vadd.f32 %v4420, %v4580
        %v4582 = vpop.f32.mrf.mxu0
        %v4583 = vpop.f32.mrf.mxu0
        %v4584 = vadd.f32 %v4423, %v4583
        %v4585 = vpop.f32.mrf.mxu0
        %4586 = vmatprep.mubr.bf16.mxu0 %v3218
        %4587 = vmatmul.mubr.bf16.gmra.mxu0 %v3072
        %v4588 = vpop.f32.mrf.mxu0
        %v4589 = vadd.f32 %v4428, %v4588
        %v4590 = vpop.f32.mrf.mxu0
        %v4591 = vpop.f32.mrf.mxu0
        %v4592 = vadd.f32 %v4431, %v4591
        %v4593 = vpop.f32.mrf.mxu0
        %4594 = vmatprep.mubr.bf16.mxu0 %v3230
        %4595 = vmatmul.mubr.bf16.gmra.mxu0 %v3073
        %v4596 = vpop.f32.mrf.mxu0
        %v4597 = vadd.f32 %v4436, %v4596
        %v4598 = vpop.f32.mrf.mxu0
        %v4599 = vpop.f32.mrf.mxu0
        %v4600 = vadd.f32 %v4439, %v4599
        %v4601 = vpop.f32.mrf.mxu0
        %4602 = vmatprep.mubr.bf16.mxu0 %v3242
        %4603 = vmatmul.mubr.bf16.gmra.mxu0 %v3074
        %v4604 = vpop.f32.mrf.mxu0
        %v4605 = vadd.f32 %v4444, %v4604
        %v4606 = vpop.f32.mrf.mxu0
        %v4607 = vpop.f32.mrf.mxu0
        %v4608 = vadd.f32 %v4447, %v4607
        %v4609 = vpop.f32.mrf.mxu0
        %4610 = vmatprep.mubr.bf16.mxu0 %v3254
        %4611 = vmatmul.mubr.bf16.gmra.mxu0 %v3075
        %v4612 = vpop.f32.mrf.mxu0
        %v4613 = vadd.f32 %v4452, %v4612
        %v4614 = vpop.f32.mrf.mxu0
        %v4615 = vpop.f32.mrf.mxu0
        %v4616 = vadd.f32 %v4455, %v4615
        %v4617 = vpop.f32.mrf.mxu0
        %4618 = vmatprep.mubr.bf16.mxu0 %v3266
        %4619 = vmatmul.mubr.bf16.gmra.mxu0 %v3076
        %v4620 = vpop.f32.mrf.mxu0
        %v4621 = vadd.f32 %v4460, %v4620
        %v4622 = vpop.f32.mrf.mxu0
        %v4623 = vpop.f32.mrf.mxu0
        %v4624 = vadd.f32 %v4463, %v4623
        %v4625 = vpop.f32.mrf.mxu0
        %4626 = vmatprep.mubr.bf16.mxu0 %v3278
        %4627 = vmatmul.mubr.bf16.gmra.mxu0 %v3077
        %v4628 = vpop.f32.mrf.mxu0
        %v4629 = vadd.f32 %v4468, %v4628
        %v4630 = vpop.f32.mrf.mxu0
        %v4631 = vpop.f32.mrf.mxu0
        %v4632 = vadd.f32 %v4471, %v4631
        %v4633 = vpop.f32.mrf.mxu0
        %4634 = vmatprep.mubr.bf16.mxu0 %v3290
        %4635 = vmatmul.mubr.bf16.gmra.mxu0 %v3078
        %v4636 = vpop.f32.mrf.mxu0
        %v4637 = vadd.f32 %v4476, %v4636
        %v4638 = vpop.f32.mrf.mxu0
        %v4639 = vpop.f32.mrf.mxu0
        %v4640 = vadd.f32 %v4479, %v4639
        %v4641 = vpop.f32.mrf.mxu0
        %4642 = vmatprep.mubr.bf16.mxu0 %v3302
        %4643 = vmatmul.mubr.bf16.gmra.mxu0 %v3079
        %v4644 = vpop.f32.mrf.mxu0
        %v4645 = vadd.f32 %v4484, %v4644
        %v4646 = vpop.f32.mrf.mxu0
        %v4647 = vpop.f32.mrf.mxu0
        %v4648 = vadd.f32 %v4487, %v4647
        %v4649 = vpop.f32.mrf.mxu0
        %4650 = vmatprep.mubr.bf16.mxu0 %v3314
        %4651 = vmatmul.mubr.bf16.gmra.mxu0 %v3080
        %v4652 = vpop.f32.mrf.mxu0
        %v4653 = vadd.f32 %v4492, %v4652
        %v4654 = vpop.f32.mrf.mxu0
        %v4655 = vpop.f32.mrf.mxu0
        %v4656 = vadd.f32 %v4495, %v4655
        %v4657 = vpop.f32.mrf.mxu0
        %4658 = vmatprep.mubr.bf16.mxu0 %v3326
        %4659 = vmatmul.mubr.bf16.gmra.mxu0 %v3081
        %v4660 = vpop.f32.mrf.mxu0
        %v4661 = vadd.f32 %v4500, %v4660
        %v4662 = vpop.f32.mrf.mxu0
        %v4663 = vpop.f32.mrf.mxu0
        %v4664 = vadd.f32 %v4503, %v4663
        %v4665 = vpop.f32.mrf.mxu0
        %4666 = vmatprep.mubr.bf16.mxu0 %v3338
        %4667 = vmatmul.mubr.bf16.gmra.mxu0 %v3082
        %v4668 = vpop.f32.mrf.mxu0
        %v4669 = vadd.f32 %v4508, %v4668
        %v4670 = vpop.f32.mrf.mxu0
        %v4671 = vpop.f32.mrf.mxu0
        %v4672 = vadd.f32 %v4511, %v4671
        %v4673 = vpop.f32.mrf.mxu0
        %4674 = vmatprep.mubr.bf16.mxu0 %v3439
        %4675 = vmatmul.mubr.bf16.gmra.mxu0 %v3423
        %v4676 = vpop.f32.mrf.mxu0
        %v4677 = vadd.f32 %v4516, %v4676
        %v4678 = vpop.f32.mrf.mxu0
        %v4679 = vpop.f32.mrf.mxu0
        %v4680 = vadd.f32 %v4519, %v4679
        %v4681 = vpop.f32.mrf.mxu0
        %4682 = vmatprep.mubr.bf16.mxu0 %v3465
        %4683 = vmatmul.mubr.bf16.gmra.mxu0 %v3449
        %v4684 = vpop.f32.mrf.mxu0
        %v4685 = vadd.f32 %v4524, %v4684
        %v4686 = vpop.f32.mrf.mxu0
        %v4687 = vpop.f32.mrf.mxu0
        %v4688 = vadd.f32 %v4527, %v4687
        %v4689 = vpop.f32.mrf.mxu0
        %4690 = vdwg.mxu0
        %4691 = vmatprep.subr.bf16.mxu0 0
        %4692 = vmatpush1.bf16.msra.mxu0 %v3974
        %4693 = vmatprep.subr.bf16.mxu0 0
        %4694 = vmatpush1.bf16.msra.mxu0 %v3973
        %4695 = vmatprep.subr.bf16.mxu0 0
        %4696 = vmatpush1.bf16.msra.mxu0 %v3972
        %4697 = vmatprep.subr.bf16.mxu0 0
        %4698 = vmatpush1.bf16.msra.mxu0 %v3971
        %4699 = vmatprep.subr.bf16.mxu0 0
        %4700 = vmatpush1.bf16.msra.mxu0 %v3970
        %4701 = vmatprep.subr.bf16.mxu0 0
        %4702 = vmatpush1.bf16.msra.mxu0 %v3969
        %4703 = vmatprep.subr.bf16.mxu0 0
        %4704 = vmatpush1.bf16.msra.mxu0 %v3968
        %4705 = vmatprep.subr.bf16.mxu0 0
        %4706 = vmatpush1.bf16.msra.mxu0 %v3967
        %4707 = vmatprep.subr.bf16.mxu0 0
        %4708 = vmatpush2.bf16.msra.mxu0 0
        %4709 = vmatprep.subr.bf16.mxu0 0
        %4710 = vmatpush2.bf16.msra.mxu0 0
        %4711 = vmatprep.subr.bf16.mxu0 0
        %4712 = vmatpush2.bf16.msra.mxu0 0
        %4713 = vmatprep.subr.bf16.mxu0 0
        %4714 = vmatpush2.bf16.msra.mxu0 0
        %4715 = vmatprep.subr.bf16.mxu0 0
        %4716 = vmatpush2.bf16.msra.mxu0 0
        %4717 = vmatprep.subr.bf16.mxu0 0
        %4718 = vmatpush2.bf16.msra.mxu0 0
        %4719 = vmatprep.subr.bf16.mxu0 0
        %4720 = vmatpush2.bf16.msra.mxu0 0
        %4721 = vmatprep.subr.bf16.mxu0 0
        %4722 = vmatpush2.bf16.msra.mxu0 0
        %4723 = vmatprep.mubr.bf16.mxu0 0
        %4724 = vmatmul.mubr.bf16.gmra.mxu0 %v3363
        %v4725 = vpop.f32.mrf.mxu0
        %v4726 = vadd.f32 %v4565, %v4725
        %v4727 = vpop.f32.mrf.mxu0
        %v4728 = vpop.f32.mrf.mxu0
        %v4729 = vadd.f32 %v4568, %v4728
        %v4730 = vpop.f32.mrf.mxu0
        %4731 = vmatprep.mubr.bf16.mxu0 0
        %4732 = vmatmul.mubr.bf16.gmra.mxu0 %v3366
        %v4733 = vpop.f32.mrf.mxu0
        %v4734 = vadd.f32 %v4573, %v4733
        %v4735 = vpop.f32.mrf.mxu0
        %v4736 = vpop.f32.mrf.mxu0
        %v4737 = vadd.f32 %v4576, %v4736
        %v4738 = vpop.f32.mrf.mxu0
        %4739 = vmatprep.mubr.bf16.mxu0 0
        %4740 = vmatmul.mubr.bf16.gmra.mxu0 %v3369
        %v4741 = vpop.f32.mrf.mxu0
        %v4742 = vadd.f32 %v4581, %v4741
        %v4743 = vpop.f32.mrf.mxu0
        %v4744 = vpop.f32.mrf.mxu0
        %v4745 = vadd.f32 %v4584, %v4744
        %v4746 = vpop.f32.mrf.mxu0
        %4747 = vmatprep.mubr.bf16.mxu0 0
        %4748 = vmatmul.mubr.bf16.gmra.mxu0 %v3372
        %v4749 = vpop.f32.mrf.mxu0
        %v4750 = vadd.f32 %v4589, %v4749
        %v4751 = vpop.f32.mrf.mxu0
        %v4752 = vpop.f32.mrf.mxu0
        %v4753 = vadd.f32 %v4592, %v4752
        %v4754 = vpop.f32.mrf.mxu0
        %4755 = vmatprep.mubr.bf16.mxu0 0
        %4756 = vmatmul.mubr.bf16.gmra.mxu0 %v3375
        %v4757 = vpop.f32.mrf.mxu0
        %v4758 = vadd.f32 %v4597, %v4757
        %v4759 = vpop.f32.mrf.mxu0
        %v4760 = vpop.f32.mrf.mxu0
        %v4761 = vadd.f32 %v4600, %v4760
        %v4762 = vpop.f32.mrf.mxu0
        %4763 = vmatprep.mubr.bf16.mxu0 0
        %4764 = vmatmul.mubr.bf16.gmra.mxu0 %v3378
        %v4765 = vpop.f32.mrf.mxu0
        %v4766 = vadd.f32 %v4605, %v4765
        %v4767 = vpop.f32.mrf.mxu0
        %v4768 = vpop.f32.mrf.mxu0
        %v4769 = vadd.f32 %v4608, %v4768
        %v4770 = vpop.f32.mrf.mxu0
        %4771 = vmatprep.mubr.bf16.mxu0 0
        %4772 = vmatmul.mubr.bf16.gmra.mxu0 %v3381
        %v4773 = vpop.f32.mrf.mxu0
        %v4774 = vadd.f32 %v4613, %v4773
        %v4775 = vpop.f32.mrf.mxu0
        %v4776 = vpop.f32.mrf.mxu0
        %v4777 = vadd.f32 %v4616, %v4776
        %v4778 = vpop.f32.mrf.mxu0
        %4779 = vmatprep.mubr.bf16.mxu0 0
        %4780 = vmatmul.mubr.bf16.gmra.mxu0 %v3384
        %v4781 = vpop.f32.mrf.mxu0
        %v4782 = vadd.f32 %v4621, %v4781
        %v4783 = vpop.f32.mrf.mxu0
        %v4784 = vpop.f32.mrf.mxu0
        %v4785 = vadd.f32 %v4624, %v4784
        %v4786 = vpop.f32.mrf.mxu0
        %4787 = vmatprep.mubr.bf16.mxu0 0
        %4788 = vmatmul.mubr.bf16.gmra.mxu0 %v3387
        %v4789 = vpop.f32.mrf.mxu0
        %v4790 = vadd.f32 %v4629, %v4789
        %v4791 = vpop.f32.mrf.mxu0
        %v4792 = vpop.f32.mrf.mxu0
        %v4793 = vadd.f32 %v4632, %v4792
        %v4794 = vpop.f32.mrf.mxu0
        %4795 = vmatprep.mubr.bf16.mxu0 0
        %4796 = vmatmul.mubr.bf16.gmra.mxu0 %v3390
        %v4797 = vpop.f32.mrf.mxu0
        %v4798 = vadd.f32 %v4637, %v4797
        %v4799 = vpop.f32.mrf.mxu0
        %v4800 = vpop.f32.mrf.mxu0
        %v4801 = vadd.f32 %v4640, %v4800
        %v4802 = vpop.f32.mrf.mxu0
        %4803 = vmatprep.mubr.bf16.mxu0 0
        %4804 = vmatmul.mubr.bf16.gmra.mxu0 %v3393
        %v4805 = vpop.f32.mrf.mxu0
        %v4806 = vadd.f32 %v4645, %v4805
        %v4807 = vpop.f32.mrf.mxu0
        %v4808 = vpop.f32.mrf.mxu0
        %v4809 = vadd.f32 %v4648, %v4808
        %v4810 = vpop.f32.mrf.mxu0
        %4811 = vmatprep.mubr.bf16.mxu0 0
        %4812 = vmatmul.mubr.bf16.gmra.mxu0 %v3396
        %v4813 = vpop.f32.mrf.mxu0
        %v4814 = vadd.f32 %v4653, %v4813
        %v4815 = vpop.f32.mrf.mxu0
        %v4816 = vpop.f32.mrf.mxu0
        %v4817 = vadd.f32 %v4656, %v4816
        %v4818 = vpop.f32.mrf.mxu0
        %4819 = vmatprep.mubr.bf16.mxu0 0
        %4820 = vmatmul.mubr.bf16.gmra.mxu0 %v3399
        %v4821 = vpop.f32.mrf.mxu0
        %v4822 = vadd.f32 %v4661, %v4821
        %v4823 = vpop.f32.mrf.mxu0
        %v4824 = vpop.f32.mrf.mxu0
        %v4825 = vadd.f32 %v4664, %v4824
        %v4826 = vpop.f32.mrf.mxu0
        %4827 = vmatprep.mubr.bf16.mxu0 0
        %4828 = vmatmul.mubr.bf16.gmra.mxu0 %v3402
        %v4829 = vpop.f32.mrf.mxu0
        %v4830 = vadd.f32 %v4669, %v4829
        %v4831 = vpop.f32.mrf.mxu0
        %v4832 = vpop.f32.mrf.mxu0
        %v4833 = vadd.f32 %v4672, %v4832
        %v4834 = vpop.f32.mrf.mxu0
        %4835 = vmatprep.mubr.bf16.mxu0 0
        %4836 = vmatmul.mubr.bf16.gmra.mxu0 %v3443
        %v4837 = vpop.f32.mrf.mxu0
        %v4838 = vadd.f32 %v4677, %v4837
        %v4839 = vpop.f32.mrf.mxu0
        %v4840 = vpop.f32.mrf.mxu0
        %v4841 = vadd.f32 %v4680, %v4840
        %v4842 = vpop.f32.mrf.mxu0
        %4843 = vmatprep.mubr.bf16.mxu0 0
        %4844 = vmatmul.mubr.bf16.gmra.mxu0 %v3469
        %v4845 = vpop.f32.mrf.mxu0
        %v4846 = vadd.f32 %v4685, %v4845
        %v4847 = vpop.f32.mrf.mxu0
        %v4848 = vpop.f32.mrf.mxu0
        %v4849 = vadd.f32 %v4688, %v4848
        %v4850 = vpop.f32.mrf.mxu0
        %4851 = vdwg.mxu0
        %vm4852 = vsmask.f32 3328
        %vm4853 = vsmask.f32 7440
        %vm4854 = vmor %vm4852, %vm4853
        %v4856 = vshrl.u32 %v296, 16
        %v4858 = vrot.slane %v4856, 4
        %v4859 = vshll.u32 %v296, 16
        %v4861 = vrot.slane %v4859, 5
        %v4862 = vor.u32 %v4858, %v4861
        %v4863 = vrot.slane %v4862, 4
        %v4865 = vshll.u32 %v297, 16
        %v4867 = vrot.slane %v4865, 5
        %v4868 = vsel %vm4854, %v4863, %v4867
        %v4869 = vshrl.u32 %v297, 16
        %v4871 = vrot.slane %v4869, 4
        %v4872 = vor.u32 %v4871, %v4867
        %v4873 = vrot.slane %v4872, 4
        %v4875 = vshll.u32 %v298, 16
        %v4877 = vrot.slane %v4875, 5
        %v4878 = vsel %vm4854, %v4873, %v4877
        %v4880 = vshrl.u32 %v299, 16
        %v4882 = vrot.slane %v4880, 4
        %v4883 = vshll.u32 %v299, 16
        %v4885 = vrot.slane %v4883, 5
        %v4886 = vor.u32 %v4882, %v4885
        %v4887 = vrot.slane %v4886, 4
        %v4889 = vshll.u32 %v300, 16
        %v4891 = vrot.slane %v4889, 5
        %v4892 = vsel %vm4854, %v4887, %v4891
        %v4893 = vshrl.u32 %v300, 16
        %v4895 = vrot.slane %v4893, 4
        %v4896 = vor.u32 %v4895, %v4891
        %v4897 = vrot.slane %v4896, 4
        %v4899 = vshll.u32 %v301, 16
        %v4901 = vrot.slane %v4899, 5
        %v4902 = vsel %vm4854, %v4897, %v4901
        %v4904 = vshrl.u32 %v302, 16
        %v4906 = vrot.slane %v4904, 4
        %v4907 = vshll.u32 %v302, 16
        %v4909 = vrot.slane %v4907, 5
        %v4910 = vor.u32 %v4906, %v4909
        %v4911 = vrot.slane %v4910, 4
        %v4913 = vshll.u32 %v303, 16
        %v4915 = vrot.slane %v4913, 5
        %v4916 = vsel %vm4854, %v4911, %v4915
        %v4917 = vshrl.u32 %v303, 16
        %v4919 = vrot.slane %v4917, 4
        %v4920 = vor.u32 %v4919, %v4915
        %v4921 = vrot.slane %v4920, 4
        %v4923 = vshll.u32 %v304, 16
        %v4925 = vrot.slane %v4923, 5
        %v4926 = vsel %vm4854, %v4921, %v4925
        %v4928 = vshrl.u32 %v305, 16
        %v4930 = vrot.slane %v4928, 4
        %v4931 = vshll.u32 %v305, 16
        %v4933 = vrot.slane %v4931, 5
        %v4934 = vor.u32 %v4930, %v4933
        %v4935 = vrot.slane %v4934, 4
        %v4937 = vshll.u32 %v306, 16
        %v4939 = vrot.slane %v4937, 5
        %v4940 = vsel %vm4854, %v4935, %v4939
        %v4941 = vshrl.u32 %v306, 16
        %v4943 = vrot.slane %v4941, 4
        %v4944 = vor.u32 %v4943, %v4939
        %v4945 = vrot.slane %v4944, 4
        %v4947 = vshll.u32 %v307, 16
        %v4949 = vrot.slane %v4947, 5
        %v4950 = vsel %vm4854, %v4945, %v4949
        %v4952 = vshrl.u32 %v308, 16
        %v4954 = vrot.slane %v4952, 4
        %v4955 = vshll.u32 %v308, 16
        %v4957 = vrot.slane %v4955, 5
        %v4958 = vor.u32 %v4954, %v4957
        %v4959 = vrot.slane %v4958, 4
        %v4961 = vshll.u32 %v309, 16
        %v4963 = vrot.slane %v4961, 5
        %v4964 = vsel %vm4854, %v4959, %v4963
        %v4965 = vshrl.u32 %v309, 16
        %v4967 = vrot.slane %v4965, 4
        %v4968 = vor.u32 %v4967, %v4963
        %v4969 = vrot.slane %v4968, 4
        %v4971 = vshll.u32 %v310, 16
        %v4973 = vrot.slane %v4971, 5
        %v4974 = vsel %vm4854, %v4969, %v4973
        %v4976 = vshrl.u32 %v311, 16
        %v4978 = vrot.slane %v4976, 4
        %v4979 = vshll.u32 %v311, 16
        %v4981 = vrot.slane %v4979, 5
        %v4982 = vor.u32 %v4978, %v4981
        %v4983 = vrot.slane %v4982, 4
        %v4985 = vshll.u32 %v312, 16
        %v4987 = vrot.slane %v4985, 5
        %v4988 = vsel %vm4854, %v4983, %v4987
        %v4989 = vshrl.u32 %v312, 16
        %v4991 = vrot.slane %v4989, 4
        %v4992 = vor.u32 %v4991, %v4987
        %v4993 = vrot.slane %v4992, 4
        %v4995 = vshll.u32 %v313, 16
        %v4997 = vrot.slane %v4995, 5
        %v4998 = vsel %vm4854, %v4993, %v4997
        %v5000 = vshrl.u32 %v314, 16
        %v5002 = vrot.slane %v5000, 4
        %v5003 = vshll.u32 %v314, 16
        %v5005 = vrot.slane %v5003, 5
        %v5006 = vor.u32 %v5002, %v5005
        %v5007 = vrot.slane %v5006, 4
        %v5009 = vshll.u32 %v315, 16
        %v5011 = vrot.slane %v5009, 5
        %v5012 = vsel %vm4854, %v5007, %v5011
        %v5013 = vshrl.u32 %v315, 16
        %v5015 = vrot.slane %v5013, 4
        %v5016 = vor.u32 %v5015, %v5011
        %v5017 = vrot.slane %v5016, 4
        %v5019 = vshll.u32 %v316, 16
        %v5021 = vrot.slane %v5019, 5
        %v5022 = vsel %vm4854, %v5017, %v5021
        %v5024 = vshrl.u32 %v317, 16
        %v5026 = vrot.slane %v5024, 4
        %v5027 = vshll.u32 %v317, 16
        %v5029 = vrot.slane %v5027, 5
        %v5030 = vor.u32 %v5026, %v5029
        %v5031 = vrot.slane %v5030, 4
        %v5033 = vshll.u32 %v318, 16
        %v5035 = vrot.slane %v5033, 5
        %v5036 = vsel %vm4854, %v5031, %v5035
        %v5037 = vshrl.u32 %v318, 16
        %v5039 = vrot.slane %v5037, 4
        %v5040 = vor.u32 %v5039, %v5035
        %v5041 = vrot.slane %v5040, 4
        %v5043 = vshll.u32 %v319, 16
        %v5045 = vrot.slane %v5043, 5
        %v5046 = vsel %vm4854, %v5041, %v5045
        %v5048 = vshrl.u32 %v320, 16
        %v5050 = vrot.slane %v5048, 4
        %v5051 = vshll.u32 %v320, 16
        %v5053 = vrot.slane %v5051, 5
        %v5054 = vor.u32 %v5050, %v5053
        %v5055 = vrot.slane %v5054, 4
        %v5057 = vshll.u32 %v321, 16
        %v5059 = vrot.slane %v5057, 5
        %v5060 = vsel %vm4854, %v5055, %v5059
        %v5061 = vshrl.u32 %v321, 16
        %v5063 = vrot.slane %v5061, 4
        %v5064 = vor.u32 %v5063, %v5059
        %v5065 = vrot.slane %v5064, 4
        %v5067 = vshll.u32 %v322, 16
        %v5069 = vrot.slane %v5067, 5
        %v5070 = vsel %vm4854, %v5065, %v5069
        %v5072 = vshrl.u32 %v323, 16
        %v5074 = vrot.slane %v5072, 4
        %v5075 = vshll.u32 %v323, 16
        %v5077 = vrot.slane %v5075, 5
        %v5078 = vor.u32 %v5074, %v5077
        %v5079 = vrot.slane %v5078, 4
        %v5081 = vshll.u32 %v324, 16
        %v5083 = vrot.slane %v5081, 5
        %v5084 = vsel %vm4854, %v5079, %v5083
        %v5085 = vshrl.u32 %v324, 16
        %v5087 = vrot.slane %v5085, 4
        %v5088 = vor.u32 %v5087, %v5083
        %v5089 = vrot.slane %v5088, 4
        %v5091 = vshll.u32 %v325, 16
        %v5093 = vrot.slane %v5091, 5
        %v5094 = vsel %vm4854, %v5089, %v5093
        %v5096 = vshrl.u32 %v326, 16
        %v5098 = vrot.slane %v5096, 4
        %v5099 = vshll.u32 %v326, 16
        %v5101 = vrot.slane %v5099, 5
        %v5102 = vor.u32 %v5098, %v5101
        %v5103 = vrot.slane %v5102, 4
        %v5105 = vshll.u32 %v327, 16
        %v5107 = vrot.slane %v5105, 5
        %v5108 = vsel %vm4854, %v5103, %v5107
        %v5109 = vshrl.u32 %v327, 16
        %v5111 = vrot.slane %v5109, 4
        %v5112 = vor.u32 %v5111, %v5107
        %v5113 = vrot.slane %v5112, 4
        %v5115 = vshll.u32 %v328, 16
        %v5117 = vrot.slane %v5115, 5
        %v5118 = vsel %vm4854, %v5113, %v5117
        %v5120 = vshrl.u32 %v329, 16
        %v5122 = vrot.slane %v5120, 4
        %v5123 = vshll.u32 %v329, 16
        %v5125 = vrot.slane %v5123, 5
        %v5126 = vor.u32 %v5122, %v5125
        %v5127 = vrot.slane %v5126, 4
        %v5129 = vshll.u32 %v330, 16
        %v5131 = vrot.slane %v5129, 5
        %v5132 = vsel %vm4854, %v5127, %v5131
        %v5133 = vshrl.u32 %v330, 16
        %v5135 = vrot.slane %v5133, 4
        %v5136 = vor.u32 %v5135, %v5131
        %v5137 = vrot.slane %v5136, 4
        %v5139 = vshll.u32 %v331, 16
        %v5141 = vrot.slane %v5139, 5
        %v5142 = vsel %vm4854, %v5137, %v5141
        %v5144 = vshrl.u32 %v332, 16
        %v5146 = vrot.slane %v5144, 4
        %v5147 = vshll.u32 %v332, 16
        %v5149 = vrot.slane %v5147, 5
        %v5150 = vor.u32 %v5146, %v5149
        %v5151 = vrot.slane %v5150, 4
        %v5153 = vshll.u32 %v333, 16
        %v5155 = vrot.slane %v5153, 5
        %v5156 = vsel %vm4854, %v5151, %v5155
        %v5157 = vshrl.u32 %v333, 16
        %v5159 = vrot.slane %v5157, 4
        %v5160 = vor.u32 %v5159, %v5155
        %v5161 = vrot.slane %v5160, 4
        %v5163 = vshll.u32 %v334, 16
        %v5165 = vrot.slane %v5163, 5
        %v5166 = vsel %vm4854, %v5161, %v5165
        %v5168 = vshrl.u32 %v335, 16
        %v5170 = vrot.slane %v5168, 4
        %v5171 = vshll.u32 %v335, 16
        %v5173 = vrot.slane %v5171, 5
        %v5174 = vor.u32 %v5170, %v5173
        %v5175 = vrot.slane %v5174, 4
        %v5177 = vshll.u32 %v336, 16
        %v5179 = vrot.slane %v5177, 5
        %v5180 = vsel %vm4854, %v5175, %v5179
        %v5181 = vshrl.u32 %v336, 16
        %v5183 = vrot.slane %v5181, 4
        %v5184 = vor.u32 %v5183, %v5179
        %v5185 = vrot.slane %v5184, 4
        %v5187 = vshll.u32 %v337, 16
        %v5189 = vrot.slane %v5187, 5
        %v5190 = vsel %vm4854, %v5185, %v5189
        %v5192 = vshrl.u32 %v338, 16
        %v5194 = vrot.slane %v5192, 4
        %v5195 = vshll.u32 %v338, 16
        %v5197 = vrot.slane %v5195, 5
        %v5198 = vor.u32 %v5194, %v5197
        %v5199 = vrot.slane %v5198, 4
        %v5201 = vshll.u32 %v339, 16
        %v5203 = vrot.slane %v5201, 5
        %v5204 = vsel %vm4854, %v5199, %v5203
        %v5205 = vshrl.u32 %v339, 16
        %v5207 = vrot.slane %v5205, 4
        %v5208 = vor.u32 %v5207, %v5203
        %v5209 = vrot.slane %v5208, 4
        %v5211 = vshll.u32 %v340, 16
        %v5213 = vrot.slane %v5211, 5
        %v5214 = vsel %vm4854, %v5209, %v5213
        %v5216 = vshrl.u32 %v341, 16
        %v5218 = vrot.slane %v5216, 4
        %v5219 = vshll.u32 %v341, 16
        %v5221 = vrot.slane %v5219, 5
        %v5222 = vor.u32 %v5218, %v5221
        %v5223 = vrot.slane %v5222, 4
        %v5225 = vshll.u32 %v342, 16
        %v5227 = vrot.slane %v5225, 5
        %v5228 = vsel %vm4854, %v5223, %v5227
        %v5229 = vshrl.u32 %v342, 16
        %v5231 = vrot.slane %v5229, 4
        %v5232 = vor.u32 %v5231, %v5227
        %v5233 = vrot.slane %v5232, 4
        %v5235 = vshll.u32 %v343, 16
        %v5237 = vrot.slane %v5235, 5
        %v5238 = vsel %vm4854, %v5233, %v5237
        %v5271 = vunpack.c.l.bf16 %v4868
        %v5272 = vunpack.c.l.bf16 %v4878
        %v5273 = vunpack.c.l.bf16 %v4892
        %v5274 = vunpack.c.l.bf16 %v4902
        %v5275 = vunpack.c.l.bf16 %v4916
        %v5276 = vunpack.c.l.bf16 %v4926
        %v5277 = vunpack.c.l.bf16 %v4940
        %v5278 = vunpack.c.l.bf16 %v4950
        %v5279 = vunpack.c.l.bf16 %v4964
        %v5280 = vunpack.c.l.bf16 %v4974
        %v5281 = vunpack.c.l.bf16 %v4988
        %v5282 = vunpack.c.l.bf16 %v4998
        %v5283 = vunpack.c.l.bf16 %v5012
        %v5284 = vunpack.c.l.bf16 %v5022
        %v5285 = vunpack.c.l.bf16 %v5036
        %v5286 = vunpack.c.l.bf16 %v5046
        %v5287 = vunpack.c.l.bf16 %v5060
        %v5288 = vunpack.c.l.bf16 %v5070
        %v5289 = vunpack.c.l.bf16 %v5084
        %v5290 = vunpack.c.l.bf16 %v5094
        %v5291 = vunpack.c.l.bf16 %v5108
        %v5292 = vunpack.c.l.bf16 %v5118
        %v5293 = vunpack.c.l.bf16 %v5132
        %v5294 = vunpack.c.l.bf16 %v5142
        %v5295 = vunpack.c.l.bf16 %v5156
        %v5296 = vunpack.c.l.bf16 %v5166
        %v5297 = vunpack.c.l.bf16 %v5180
        %v5298 = vunpack.c.l.bf16 %v5190
        %v5299 = vunpack.c.l.bf16 %v5204
        %v5300 = vunpack.c.l.bf16 %v5214
        %v5301 = vunpack.c.l.bf16 %v5228
        %v5302 = vunpack.c.l.bf16 %v5238
        %v5303 = vld [vmem:[%s5] sm:$0x1]
        %v5305 = vlaneseq
        %v5306 = vshrl.u32 %v5305, 7
        %v5307 = vsub.s32 0, %v5306
        %v5308 = vrot.slane %v5303, %v5307
        %v5310 = vmul.f32 %v4726, %v5308
        %v5311 = vmul.f32 %v4729, %v5308
        %v5312 = vmul.f32 %v4734, %v5308
        %v5313 = vmul.f32 %v4737, %v5308
        %v5314 = vmul.f32 %v4742, %v5308
        %v5315 = vmul.f32 %v4745, %v5308
        %v5316 = vmul.f32 %v4750, %v5308
        %v5317 = vmul.f32 %v4753, %v5308
        %v5318 = vmul.f32 %v4758, %v5308
        %v5319 = vmul.f32 %v4761, %v5308
        %v5320 = vmul.f32 %v4766, %v5308
        %v5321 = vmul.f32 %v4769, %v5308
        %v5322 = vmul.f32 %v4774, %v5308
        %v5323 = vmul.f32 %v4777, %v5308
        %v5324 = vmul.f32 %v4782, %v5308
        %v5325 = vmul.f32 %v4785, %v5308
        %v5326 = vmul.f32 %v4790, %v5308
        %v5327 = vmul.f32 %v4793, %v5308
        %v5328 = vmul.f32 %v4798, %v5308
        %v5329 = vmul.f32 %v4801, %v5308
        %v5330 = vmul.f32 %v4806, %v5308
        %v5331 = vmul.f32 %v4809, %v5308
        %v5332 = vmul.f32 %v4814, %v5308
        %v5333 = vmul.f32 %v4817, %v5308
        %v5334 = vmul.f32 %v4822, %v5308
        %v5335 = vmul.f32 %v4825, %v5308
        %v5336 = vmul.f32 %v4830, %v5308
        %v5337 = vmul.f32 %v4833, %v5308
        %v5338 = vmul.f32 %v4838, %v5308
        %v5339 = vmul.f32 %v4841, %v5308
        %v5340 = vmul.f32 %v4846, %v5308
        %v5341 = vmul.f32 %v4849, %v5308
        %v5342 = vld [vmem:[%s6] sm:$0x1]
        %v5344 = vlaneseq
        %v5345 = vshrl.u32 %v5344, 7
        %v5346 = vsub.s32 0, %v5345
        %v5347 = vrot.slane %v5342, %v5346
        %v5349 = vadd.f32 %v5310, %v5347
        %v5350 = vadd.f32 %v5311, %v5347
        %v5351 = vadd.f32 %v5312, %v5347
        %v5352 = vadd.f32 %v5313, %v5347
        %v5353 = vadd.f32 %v5314, %v5347
        %v5354 = vadd.f32 %v5315, %v5347
        %v5355 = vadd.f32 %v5316, %v5347
        %v5356 = vadd.f32 %v5317, %v5347
        %v5357 = vadd.f32 %v5318, %v5347
        %v5358 = vadd.f32 %v5319, %v5347
        %v5359 = vadd.f32 %v5320, %v5347
        %v5360 = vadd.f32 %v5321, %v5347
        %v5361 = vadd.f32 %v5322, %v5347
        %v5362 = vadd.f32 %v5323, %v5347
        %v5363 = vadd.f32 %v5324, %v5347
        %v5364 = vadd.f32 %v5325, %v5347
        %v5365 = vadd.f32 %v5326, %v5347
        %v5366 = vadd.f32 %v5327, %v5347
        %v5367 = vadd.f32 %v5328, %v5347
        %v5368 = vadd.f32 %v5329, %v5347
        %v5369 = vadd.f32 %v5330, %v5347
        %v5370 = vadd.f32 %v5331, %v5347
        %v5371 = vadd.f32 %v5332, %v5347
        %v5372 = vadd.f32 %v5333, %v5347
        %v5373 = vadd.f32 %v5334, %v5347
        %v5374 = vadd.f32 %v5335, %v5347
        %v5375 = vadd.f32 %v5336, %v5347
        %v5376 = vadd.f32 %v5337, %v5347
        %v5377 = vadd.f32 %v5338, %v5347
        %v5378 = vadd.f32 %v5339, %v5347
        %v5379 = vadd.f32 %v5340, %v5347
        %v5380 = vadd.f32 %v5341, %v5347
        %v5381 = vadd.f32 %v5349, %v5271
        %v5382 = vadd.f32 %v5350, %v5272
        %v5383 = vadd.f32 %v5351, %v5273
        %v5384 = vadd.f32 %v5352, %v5274
        %v5385 = vadd.f32 %v5353, %v5275
        %v5386 = vadd.f32 %v5354, %v5276
        %v5387 = vadd.f32 %v5355, %v5277
        %v5388 = vadd.f32 %v5356, %v5278
        %v5389 = vadd.f32 %v5357, %v5279
        %v5390 = vadd.f32 %v5358, %v5280
        %v5391 = vadd.f32 %v5359, %v5281
        %v5392 = vadd.f32 %v5360, %v5282
        %v5393 = vadd.f32 %v5361, %v5283
        %v5394 = vadd.f32 %v5362, %v5284
        %v5395 = vadd.f32 %v5363, %v5285
        %v5396 = vadd.f32 %v5364, %v5286
        %v5397 = vadd.f32 %v5365, %v5287
        %v5398 = vadd.f32 %v5366, %v5288
        %v5399 = vadd.f32 %v5367, %v5289
        %v5400 = vadd.f32 %v5368, %v5290
        %v5401 = vadd.f32 %v5369, %v5291
        %v5402 = vadd.f32 %v5370, %v5292
        %v5403 = vadd.f32 %v5371, %v5293
        %v5404 = vadd.f32 %v5372, %v5294
        %v5405 = vadd.f32 %v5373, %v5295
        %v5406 = vadd.f32 %v5374, %v5296
        %v5407 = vadd.f32 %v5375, %v5297
        %v5408 = vadd.f32 %v5376, %v5298
        %v5409 = vadd.f32 %v5377, %v5299
        %v5410 = vadd.f32 %v5378, %v5300
        %v5411 = vadd.f32 %v5379, %v5301
        %v5412 = vadd.f32 %v5380, %v5302
        %v5413 = vmax.f32 %v5381, 0.0
        %v5414 = vmax.f32 %v5382, 0.0
        %v5415 = vmax.f32 %v5383, 0.0
        %v5416 = vmax.f32 %v5384, 0.0
        %v5417 = vmax.f32 %v5385, 0.0
        %v5418 = vmax.f32 %v5386, 0.0
        %v5419 = vmax.f32 %v5387, 0.0
        %v5420 = vmax.f32 %v5388, 0.0
        %v5421 = vmax.f32 %v5389, 0.0
        %v5422 = vmax.f32 %v5390, 0.0
        %v5423 = vmax.f32 %v5391, 0.0
        %v5424 = vmax.f32 %v5392, 0.0
        %v5425 = vmax.f32 %v5393, 0.0
        %v5426 = vmax.f32 %v5394, 0.0
        %v5427 = vmax.f32 %v5395, 0.0
        %v5428 = vmax.f32 %v5396, 0.0
        %v5429 = vmax.f32 %v5397, 0.0
        %v5430 = vmax.f32 %v5398, 0.0
        %v5431 = vmax.f32 %v5399, 0.0
        %v5432 = vmax.f32 %v5400, 0.0
        %v5433 = vmax.f32 %v5401, 0.0
        %v5434 = vmax.f32 %v5402, 0.0
        %v5435 = vmax.f32 %v5403, 0.0
        %v5436 = vmax.f32 %v5404, 0.0
        %v5437 = vmax.f32 %v5405, 0.0
        %v5438 = vmax.f32 %v5406, 0.0
        %v5439 = vmax.f32 %v5407, 0.0
        %v5440 = vmax.f32 %v5408, 0.0
        %v5441 = vmax.f32 %v5409, 0.0
        %v5442 = vmax.f32 %v5410, 0.0
        %v5443 = vmax.f32 %v5411, 0.0
        %v5444 = vmax.f32 %v5412, 0.0
        %5445 = vst [vmem:[%s286] sm:$0xff] %v5413
        %5446 = vst [vmem:[%s286 + $0x8] sm:$0xff] %v5414
        %5447 = vst [vmem:[%s286 + $0x10] sm:$0xff] %v5415
        %5448 = vst [vmem:[%s286 + $0x18] sm:$0xff] %v5416
        %5449 = vst [vmem:[%s286 + $0x20] sm:$0xff] %v5417
        %5450 = vst [vmem:[%s286 + $0x28] sm:$0xff] %v5418
        %5451 = vst [vmem:[%s286 + $0x30] sm:$0xff] %v5419
        %5452 = vst [vmem:[%s286 + $0x38] sm:$0xff] %v5420
        %5453 = vst [vmem:[%s286 + $0x40] sm:$0xff] %v5421
        %5454 = vst [vmem:[%s286 + $0x48] sm:$0xff] %v5422
        %5455 = vst [vmem:[%s286 + $0x50] sm:$0xff] %v5423
        %5456 = vst [vmem:[%s286 + $0x58] sm:$0xff] %v5424
        %5457 = vst [vmem:[%s286 + $0x60] sm:$0xff] %v5425
        %5458 = vst [vmem:[%s286 + $0x68] sm:$0xff] %v5426
        %5459 = vst [vmem:[%s286 + $0x70] sm:$0xff] %v5427
        %5460 = vst [vmem:[%s286 + $0x78] sm:$0xff] %v5428
        %5461 = vst [vmem:[%s286 + $0x80] sm:$0xff] %v5429
        %5462 = vst [vmem:[%s286 + $0x88] sm:$0xff] %v5430
        %5463 = vst [vmem:[%s286 + $0x90] sm:$0xff] %v5431
        %5464 = vst [vmem:[%s286 + $0x98] sm:$0xff] %v5432
        %5465 = vst [vmem:[%s286 + $0xa0] sm:$0xff] %v5433
        %5466 = vst [vmem:[%s286 + $0xa8] sm:$0xff] %v5434
        %5467 = vst [vmem:[%s286 + $0xb0] sm:$0xff] %v5435
        %5468 = vst [vmem:[%s286 + $0xb8] sm:$0xff] %v5436
        %5469 = vst [vmem:[%s286 + $0xc0] sm:$0xff] %v5437
        %5470 = vst [vmem:[%s286 + $0xc8] sm:$0xff] %v5438
        %5471 = vst [vmem:[%s286 + $0xd0] sm:$0xff] %v5439
        %5472 = vst [vmem:[%s286 + $0xd8] sm:$0xff] %v5440
        %5473 = vst [vmem:[%s286 + $0xe0] sm:$0xff] %v5441
        %5474 = vst [vmem:[%s286 + $0xe8] sm:$0xff] %v5442
        %5475 = vst [vmem:[%s286 + $0xf0] sm:$0xff] %v5443
        %5476 = vst [vmem:[%s286 + $0xf8] sm:$0xff] %v5444
        %s5477 = sand.u32 %s182, 1
        %s5478 = scalar_lea.sflag [#allocation5], %s5477
        %s5479 = sand.u32 %s182, 1
        %s5480 = smul.addr %s5479, 256
        %s5481 = scalar_lea.vmem [#allocation6], %s5480
        // Predicated region
        $region53: #{tpu_custom_call.1} parent=47 // pred_check
          %p5482 = pneg %p192
        $region54: #{tpu_custom_call.1} parent=47 // pred_check_branch
          %5484 = sbr.rel (%p5482) target = $region56
        $region55: #{tpu_custom_call.1} parent=47 // pred_region
          %s5486 = ssub.s32 4096, 4096
          %5487 = vsyncadd %s5478, %s5486
          %s5488 = smul.addr %s22, 32
          %s5489 = smul.addr %s5488, 128
          %s5490 = scalar_lea.hbm %s7, %s5489
          %s5491 = sshll.u32 %s5481, 4
          %s5492 = int_to_ptr.vmem [resolvable:$true] %s5491
          %5497 = dma.vmem_to_hbm [thread:$0]  %s5492, 4096, %s5490, %s5478, 128, 128, 8
        $region56: #{tpu_custom_call.1} parent=47 // pred_fallthru
          _
      $region48: #{tpu_custom_call.1} parent=5 // pred_fallthru
        _
      %p5498 = scmp.le.s32.totalorder 2, %s17
      // Predicated region
      $region57: #{tpu_custom_call.1} parent=5 // pred_check
        %p5499 = pneg %p5498
      $region58: #{tpu_custom_call.1} parent=5 // pred_check_branch
        %5501 = sbr.rel (%p5499) target = $region60
      $region59: #{tpu_custom_call.1} parent=5 // pred_region
        %s5502 = ssub.s32 %s17, 2
        // Predicated region
        $region61: #{tpu_custom_call.1} parent=59 // pred_check
          %p5503 = pneg %p198
        $region62: #{tpu_custom_call.1} parent=59 // pred_check_branch
          %5505 = sbr.rel (%p5503) target = $region64
        $region63: #{tpu_custom_call.1} parent=59 // pred_region
          %s5506 = sand.u32 %s183, 1
          %s5507 = scalar_lea.sflag [#allocation5], %s5506
          %s5508 = sand.u32 %s183, 1
          %s5509 = smul.addr %s5508, 256
          %s5510 = scalar_lea.vmem [#allocation6], %s5509
          %5511 = dma.done %s5507, 4096
        $region64: #{tpu_custom_call.1} parent=59 // pred_fallthru
          _
      $region60: #{tpu_custom_call.1} parent=5 // pred_fallthru
        _
    $region6: #{tpu_custom_call.1} parent=1 // loop_footer
      %s21 = sadd.s32 1, %s17
    $region7: #{tpu_custom_call.1} parent=1 // loop_footer_branch
      %16 = sbr.rel target = $region3
    $region8: #{tpu_custom_call.1} parent=1 // loop_exit
      _
    %5512 = vsyncpa [#allocation4], 1
    %s5513 = scalar_lea.sflag [#allocation4], 1
    %5514 = vsyncpa %s5513, 1
    %5515 = vsyncpa [#allocation5], 1
    %s5516 = scalar_lea.sflag [#allocation5], 1
    %5517 = vsyncpa %s5516, 1

</llo_original>
